<compile_context>
chip_gen: v7x
topology: tpu7x:2x2x1
jax: 0.10.0
libtpu: 0.0.40
codegen_flags: <defaults>
</compile_context>

<pallas_src>
import functools

import jax
import jax.numpy as jnp
import numpy as np
from jax.experimental import pallas as pl
from jax.experimental.pallas import tpu as pltpu


def _round_up(x, m):
    return (x + m - 1) // m * m


def _vmem_limit():
    try:
        cap = pltpu.get_tpu_info().vmem_capacity_bytes
    except Exception:
        cap = 128 * 1024 * 1024
    return min(64 * 1024 * 1024, int(cap * 0.45))


_VMEM_LIMIT = _vmem_limit()


# ----------------------------------------------------------------------------
# Kernel 1: tiled matmul + bias + activation (initial block, 1x1 convs)
# ----------------------------------------------------------------------------
def _mm_bias_act_kernel(x_ref, w_ref, b_ref, o_ref, *, act):
    acc = jnp.dot(x_ref[...], w_ref[...], preferred_element_type=jnp.float32)
    acc = acc + b_ref[...]                              # (1, tn) broadcast, f32
    if act == "leaky":
        acc = jnp.where(acc > 0, acc, 0.2 * acc)
    elif act == "tanh":
        acc = jnp.tanh(acc)
    o_ref[...] = acc.astype(o_ref.dtype)


def matmul_bias_act(x2d, w, b, act="none", out_dtype=jnp.bfloat16):
    """(M,K) @ (K,Co) + bias with a fused activation.

    bf16 MXU inputs / f32 accumulation.  Co is padded to a lane-dense multiple
    of 128; tm is chosen to divide M whenever possible so the (bf16) activation
    is fed to the kernel with no wrapper-side pad/cast copy.
    """
    M, K = x2d.shape
    Co = w.shape[1]
    co_p = _round_up(Co, 128)
    tm = next((t for t in (512, 256, 128, 64, 32, 16, 8) if M % t == 0), 0)
    if tm == 0:                                         # tiny / ragged M only
        m_p = _round_up(M, 8)
        tm = m_p
        x_in = jnp.pad(x2d.astype(jnp.bfloat16), ((0, m_p - M), (0, 0)))
    else:
        m_p = M
        x_in = x2d.astype(jnp.bfloat16)                 # no-op if already bf16
    tn = 256 if co_p % 256 == 0 else 128

    w_p = jnp.pad(w.astype(jnp.bfloat16), ((0, 0), (0, co_p - Co)))
    b_p = jnp.pad(b.reshape(1, Co).astype(jnp.float32), ((0, 0), (0, co_p - Co)))

    cost = pl.CostEstimate(
        flops=2 * m_p * K * co_p,
        transcendentals=(m_p * co_p) if act == "tanh" else 0,
        bytes_accessed=2 * (m_p * K + K * co_p) + 4 * co_p + 2 * m_p * co_p)

    out = pl.pallas_call(
        functools.partial(_mm_bias_act_kernel, act=act),
        grid=(m_p // tm, co_p // tn),
        in_specs=[pl.BlockSpec((tm, K), lambda i, j: (i, 0)),
                  pl.BlockSpec((K, tn), lambda i, j: (0, j)),
                  pl.BlockSpec((1, tn), lambda i, j: (0, j))],
        out_specs=pl.BlockSpec((tm, tn), lambda i, j: (i, j)),
        out_shape=jax.ShapeDtypeStruct((m_p, co_p), out_dtype),
        compiler_params=pltpu.CompilerParams(
            dimension_semantics=("parallel", "parallel"),
            vmem_limit_bytes=_VMEM_LIMIT),
        cost_estimate=cost,
    )(x_in, w_p, b_p)
    return out[:M, :Co]


# ----------------------------------------------------------------------------
# Kernel 2: fused 3x3 conv (+ folded row-upsample) + bias + LeakyReLU
# ----------------------------------------------------------------------------
def _pick_strip_rows(Ho):
    # Big enough to amortize per-step overhead; small enough that the im2col
    # tile and the f32 accumulator stay VMEM-light (v7x has 64 MiB VMEM).
    for cand in (32, 16, 8):
        if Ho % cand == 0 and Ho > cand:
            return cand
    return Ho


def _conv3x3_kernel(x_ref, w_ref, b_ref, o_ref, *scratch, ho, upsample):
    """One (1, ho, Wo, Co) output row-strip of a 3x3/pad-1 conv + LeakyReLU.

    x_ref holds the WHOLE per-sample input image (block index constant over the
    strip axis, so it stays resident in VMEM):
      upsample=True : (1, h+2, Wo+2, Ci)  padded, column-upsampled, half rows.
      upsample=False: (1, Ho,  Wo,   Ci)  raw; border built in VMEM scratch.
    The 9 taps are lane-concatenated (im2col in VMEM) -> single K=9*Ci matmul.
    """
    r = pl.program_id(1)
    wo, co = o_ref.shape[2], o_ref.shape[3]
    ci = x_ref.shape[3]

    if upsample:
        wp = x_ref.shape[2]                              # Wo + 2
        hw = ho // 2 + 2
        q0 = pl.multiple_of(r * (ho // 2), ho // 2)
        xwin = x_ref[0, pl.ds(q0, hw)]                   # (hw, Wp, Ci)
        # nearest row-upsample in VMEM: [0, 1,1, 2,2, ..., hw-2,hw-2, hw-1]
        xe = jnp.broadcast_to(xwin[:, None], (hw, 2, wp, ci))
        xe = xe.reshape(2 * hw, wp, ci)[1:ho + 3]        # (ho+2, Wp, Ci)
    else:
        xp_ref, = scratch                                # (Ho+2, Wo+2, Ci)
        hin, win = x_ref.shape[1], x_ref.shape[2]

        @pl.when(r == 0)
        def _():
            xp_ref[...] = jnp.zeros(xp_ref.shape, xp_ref.dtype)
            xp_ref[1:hin + 1, 1:win + 1, :] = x_ref[0]

        q0 = pl.multiple_of(r * ho, ho)
        xe = xp_ref[pl.ds(q0, ho + 2)]                   # (ho+2, Wp, Ci)

    taps = [xe[di:di + ho, dj:dj + wo, :]
            for di in range(3) for dj in range(3)]
    patches = jnp.concatenate(taps, axis=-1).reshape(ho * wo, 9 * ci)
    acc = jnp.dot(patches, w_ref[...], preferred_element_type=jnp.float32)
    acc = acc + b_ref[...]
    acc = jnp.where(acc > 0, acc, 0.2 * acc)             # LeakyReLU(0.2), f32
    o_ref[0] = acc.reshape(ho, wo, co).astype(o_ref.dtype)


def conv3x3_lrelu(x_nhwc, w_pt, b, upsample=False):
    """Conv2d(3x3, stride 1, pad 1) + LeakyReLU(0.2) on an NHWC activation.

    upsample=True folds the preceding nn.Upsample(2, 'nearest'): the kernel
    reads a half-row-resolution input and expands rows in VMEM; only the column
    expansion + 1-pixel pad is done by XLA.  w_pt is OIHW.
    """
    N, h, w, Ci = x_nhwc.shape
    Co = w_pt.shape[0]
    if upsample:
        Ho, Wo = 2 * h, 2 * w
        # pad(upsample2x(x), 1): columns expanded here, rows expanded in-kernel.
        xp = jnp.pad(x_nhwc, ((0, 0), (1, 1), (1, 1), (0, 0)))
        x_in = jnp.repeat(xp, 2, axis=2)[:, :, 1:-1, :].astype(jnp.bfloat16)
        # TODO(synk): fold the column expansion into the kernel as well.
    else:
        Ho, Wo = h, w
        x_in = x_nhwc.astype(jnp.bfloat16)               # raw; pad lives in VMEM

    ho = _pick_strip_rows(Ho)
    R = Ho // ho

    wk = jnp.transpose(w_pt, (2, 3, 1, 0)).reshape(9 * Ci, Co).astype(jnp.bfloat16)
    b2 = b.reshape(1, Co).astype(jnp.float32)
    scratch = [] if upsample else [pltpu.VMEM((Ho + 2, Wo + 2, Ci), jnp.bfloat16)]

    cost = pl.CostEstimate(
        flops=2 * N * Ho * Wo * 9 * Ci * Co,
        transcendentals=0,
        bytes_accessed=x_in.size * 2 + wk.size * 2 + 4 * Co + N * Ho * Wo * Co * 2)

    return pl.pallas_call(
        functools.partial(_conv3x3_kernel, ho=ho, upsample=upsample),
        grid=(N, R),
        in_specs=[pl.BlockSpec((1,) + x_in.shape[1:], lambda n, r: (n, 0, 0, 0)),
                  pl.BlockSpec((9 * Ci, Co), lambda n, r: (0, 0)),
                  pl.BlockSpec((1, Co), lambda n, r: (0, 0))],
        out_specs=pl.BlockSpec((1, ho, Wo, Co), lambda n, r: (n, r, 0, 0)),
        out_shape=jax.ShapeDtypeStruct((N, Ho, Wo, Co), jnp.bfloat16),
        scratch_shapes=scratch,
        compiler_params=pltpu.CompilerParams(
            dimension_semantics=("parallel", "arbitrary"),
            vmem_limit_bytes=_VMEM_LIMIT),
        cost_estimate=cost,
    )(x_in, wk, b2)


# ----------------------------------------------------------------------------
# Kernel 3: fused final stage  tanh(alpha * (x @ w_rgb + b) + (1-alpha) * up)
# ----------------------------------------------------------------------------
def _rgb_fade_kernel(alpha_ref, x_ref, w_ref, b_ref, u_ref, o_ref):
    # x_ref: (1, th, W, Ci) bf16   u_ref: (1, th//2, W, 4) bf16 (cols already 2x)
    # o_ref: (1, th, W, 4) f32
    th, wdt, ci = x_ref.shape[1], x_ref.shape[2], x_ref.shape[3]
    a = alpha_ref[0, 0]                                  # scalar from SMEM
    g = jnp.dot(x_ref[0].reshape(th * wdt, ci), w_ref[...],
                preferred_element_type=jnp.float32) + b_ref[...]
    u = u_ref[0]                                         # (th//2, W, 4)
    u = jnp.broadcast_to(u[:, None], (th // 2, 2, wdt, 4)).reshape(th, wdt, 4)
    u = u.reshape(th * wdt, 4).astype(jnp.float32)
    o = jnp.tanh(a * g + (1.0 - a) * u)
    # TODO(synk): lane-dense output layout ((N,4,H,W) via transposed matmul).
    o_ref[0] = o.reshape(th, wdt, 4).astype(o_ref.dtype)


def rgb_fade(alpha, x_nhwc, w_pt, b, prev_rgb_nhwc):
    """Fused rgb 1x1 conv + fade_in + tanh.

    prev_rgb is passed at half ROW resolution with its true channels padded to
    4 (not 128) and row-expanded in VMEM; the output is (N, H, W, 4) f32.
    """
    N, H, W, Ci = x_nhwc.shape
    Co = w_pt.shape[0]                                   # img_channels (3)
    th = 8 if H % 8 == 0 else H

    prev4 = jnp.pad(prev_rgb_nhwc.astype(jnp.bfloat16),
                    ((0, 0), (0, 0), (0, 0), (0, 4 - Co)))
    prev_cu = jnp.repeat(prev4, 2, axis=2)               # (N, H/2, W, 4)

    w4 = jnp.pad(jnp.transpose(w_pt[:, :, 0, 0], (1, 0)).astype(jnp.bfloat16),
                 ((0, 0), (0, 4 - Co)))                  # (Ci, 4)
    b4 = jnp.pad(b.astype(jnp.float32), (0, 4 - Co)).reshape(1, 4)
    a = jnp.asarray(alpha, jnp.float32).reshape(1, 1)

    out = pl.pallas_call(
        _rgb_fade_kernel,
        grid=(N, H // th),
        in_specs=[pl.BlockSpec(memory_space=pltpu.MemorySpace.SMEM),     # alpha
                  pl.BlockSpec((1, th, W, Ci), lambda n, r: (n, r, 0, 0)),
                  pl.BlockSpec((Ci, 4), lambda n, r: (0, 0)),
                  pl.BlockSpec((1, 4), lambda n, r: (0, 0)),
                  pl.BlockSpec((1, th // 2, W, 4), lambda n, r: (n, r, 0, 0))],
        out_specs=pl.BlockSpec((1, th, W, 4), lambda n, r: (n, r, 0, 0)),
        out_shape=jax.ShapeDtypeStruct((N, H, W, 4), jnp.float32),
        compiler_params=pltpu.CompilerParams(
            dimension_semantics=("parallel", "parallel"),
            vmem_limit_bytes=_VMEM_LIMIT),
    )(a, x_nhwc.astype(jnp.bfloat16), w4, b4, prev_cu)
    return out[..., :Co]


# ----------------------------------------------------------------------------
# Layer wrappers (layout plumbing only; compute runs in the kernels above)
# ----------------------------------------------------------------------------
def conv1x1(x_nhwc, w_pt, b, act="none", out_dtype=jnp.bfloat16):
    """Conv2d(kernel=1, stride=1, pad=0).  w_pt is OIHW (Co,Ci,1,1)."""
    N, H, W, Ci = x_nhwc.shape
    Co = w_pt.shape[0]
    w_flat = jnp.transpose(w_pt[:, :, 0, 0], (1, 0))                 # (Ci, Co)
    y = matmul_bias_act(x_nhwc.reshape(N * H * W, Ci), w_flat, b,
                        act=act, out_dtype=out_dtype)
    return y.reshape(N, H, W, Co)


def initial_block(z, w_pt, b):
    """ConvTranspose2d(z_dim, C, 4, 1, 0) on a 1x1 input + LeakyReLU(0.2).

    On a 1x1 input: out[n,c,i,j] = sum_z z[n,z]*w[z,c,i,j] + b[c] -> one matmul.
    """
    N, Z = z.shape
    C = w_pt.shape[1]
    w_flat = w_pt.reshape(Z, C * 16)
    b_flat = jnp.repeat(b, 16)
    y = matmul_bias_act(z.astype(jnp.bfloat16), w_flat, b_flat,
                        act="leaky", out_dtype=jnp.bfloat16)
    return jnp.transpose(y.reshape(N, C, 4, 4), (0, 2, 3, 1))        # NHWC


# ----------------------------------------------------------------------------
# Generator (parameters + forward)
# ----------------------------------------------------------------------------
def init_params(key, z_dim, init_channels, img_channels, max_resolution_step=2):
    ks = jax.random.split(key, 64)
    it = iter(range(64))

    def nrm(shape, scale=0.1):
        return scale * jax.random.normal(ks[next(it)], shape, jnp.float32)

    params = {
        "initial": (nrm((z_dim, init_channels, 4, 4)), nrm((init_channels,))),
        "rgb": [(nrm((img_channels, init_channels, 1, 1)), nrm((img_channels,)))],
        "prog": [],
    }
    in_c = init_channels
    for _ in range(max_resolution_step):
        out_c = in_c // 2
        params["prog"].append((nrm((out_c, in_c, 3, 3)), nrm((out_c,)),
                               nrm((out_c, out_c, 3, 3)), nrm((out_c,))))
        params["rgb"].append((nrm((img_channels, out_c, 1, 1)), nrm((img_channels,))))
        in_c = out_c
    return params


def generator_forward(params, x_nchw, alpha, step):
    """Mirrors Generator.forward.  x_nchw: (N, z_dim, 1, 1).  Returns NCHW."""
    if step > len(params["prog"]):
        raise ValueError(f"step={step} exceeds the configured resolution steps")
    N = x_nchw.shape[0]
    z = x_nchw.reshape(N, -1)
    out = initial_block(z, *params["initial"])            # (N, 4, 4, C) bf16

    if step == 0:
        rgb = conv1x1(out, *params["rgb"][0], act="tanh", out_dtype=jnp.float32)
        return jnp.transpose(rgb, (0, 3, 1, 2))

    def prog_block(o, pb):
        w1, b1, w2, b2 = pb
        o = conv3x3_lrelu(o, w1, b1, upsample=True)       # upsample folded in
        o = conv3x3_lrelu(o, w2, b2, upsample=False)
        return o

    for i in range(step):
        if i == step - 1:
            prev_rgb = conv1x1(out, *params["rgb"][i])            # (N,h,w,3) bf16
            out = prog_block(out, params["prog"][i])              # (N,2h,2w,Co)
            w_rgb, b_rgb = params["rgb"][i + 1]
            y = rgb_fade(alpha, out, w_rgb, b_rgb, prev_rgb)      # (N,2h,2w,3)
            return jnp.transpose(y, (0, 3, 1, 2))
        out = prog_block(out, params["prog"][i])
    return None  # mirrors the PyTorch module's fall-through


# ----------------------------------------------------------------------------
# Pure-JAX reference (for correctness check only)
# ----------------------------------------------------------------------------
def ref_forward(params, x_nchw, alpha, step):
    N = x_nchw.shape[0]
    z = x_nchw.reshape(N, -1)
    wi, bi = params["initial"]
    out = jnp.einsum("nz,zchw->nchw", z, wi) + bi[None, :, None, None]
    out = jnp.where(out > 0, out, 0.2 * out)

    def conv(x, w, b, pad):
        y = jax.lax.conv_general_dilated(
            x, w, (1, 1), [(pad, pad), (pad, pad)],
            dimension_numbers=("NCHW", "OIHW", "NCHW"))
        return y + b[None, :, None, None]

    def up(x):
        return jnp.repeat(jnp.repeat(x, 2, axis=2), 2, axis=3)

    if step == 0:
        return jnp.tanh(conv(out, *params["rgb"][0], 0))
    for i in range(step):
        if i == step - 1:
            prev = conv(out, *params["rgb"][i], 0)
            w1, b1, w2, b2 = params["prog"][i]
            o = up(out)
            o = conv(o, w1, b1, 1); o = jnp.where(o > 0, o, 0.2 * o)
            o = conv(o, w2, b2, 1); o = jnp.where(o > 0, o, 0.2 * o)
            curr = conv(o, *params["rgb"][i + 1], 0)
            return jnp.tanh(alpha * curr + (1.0 - alpha) * up(prev))
        w1, b1, w2, b2 = params["prog"][i]
        out = up(out)
        out = conv(out, w1, b1, 1); out = jnp.where(out > 0, out, 0.2 * out)
        out = conv(out, w2, b2, 1); out = jnp.where(out > 0, out, 0.2 * out)
    return None


# ----------------------------------------------------------------------------
if __name__ == "__main__":
    z_dim, init_c, img_c, max_step = 32, 16, 3, 2
    batch, alpha, step = 2, 0.5, 2

    key = jax.random.PRNGKey(0)
    kp, kx = jax.random.split(key)
    params = init_params(kp, z_dim, init_c, img_c, max_step)
    x = jax.random.normal(kx, (batch, z_dim, 1, 1), jnp.float32)

    fwd = jax.jit(generator_forward, static_argnames=("step",))
    y = jax.block_until_ready(fwd(params, x, alpha, step))

    y_ref = ref_forward(params, x, alpha, step)
    assert y.shape == (batch, img_c, 16, 16), y.shape
    # bf16 MXU inputs / bf16 inter-layer activations => loosened tolerance.
    assert np.allclose(np.asarray(y), np.asarray(y_ref), atol=2e-2, rtol=2e-2)

    print("KERNEL_OK")
</pallas_src>

<mosaic_0001>
module attributes {stable_mosaic.version = 11 : i64} {
  func.func @_mm_bias_act_kernel(%arg0: i32, %arg1: i32, %arg2: memref<8x32xbf16, #tpu.memory_space<vmem>>, %arg3: memref<32x256xbf16, #tpu.memory_space<vmem>>, %arg4: memref<1x256xf32, #tpu.memory_space<vmem>>, %arg5: memref<8x256xbf16, #tpu.memory_space<vmem>>) attributes {dimension_semantics = [#tpu.dimension_semantics<parallel>, #tpu.dimension_semantics<parallel>], iteration_bounds = array<i64: 1, 1>, scalar_prefetch = 0 : i64, scratch_operands = 0 : i64, tpu.core_type = #tpu.core_type<tc>, window_params = [{transform_indices = @transform_0, window_bounds = array<i64: 8, 32>}, {transform_indices = @transform_1, window_bounds = array<i64: 32, 256>}, {transform_indices = @transform_2, window_bounds = array<i64: 1, 256>}, {transform_indices = @transform_3, window_bounds = array<i64: 8, 256>}]} {
    %c0 = arith.constant 0 : index
    %c0_0 = arith.constant 0 : index
    %0 = vector.load %arg2[%c0, %c0_0] : memref<8x32xbf16, #tpu.memory_space<vmem>>, vector<8x32xbf16>
    %c0_1 = arith.constant 0 : index
    %c0_2 = arith.constant 0 : index
    %1 = vector.load %arg3[%c0_1, %c0_2] : memref<32x256xbf16, #tpu.memory_space<vmem>>, vector<32x256xbf16>
    %cst = arith.constant dense<0.000000e+00> : vector<8x256xf32>
    %2 = tpu.matmul %0, %1, %cst {dimension_numbers = #tpu.dot_dimension_numbers<[1], [0], [0], [1], [0, 0, 1, 1], [], []>} : vector<8x32xbf16>, vector<32x256xbf16>, vector<8x256xf32> -> vector<8x256xf32>
    %c0_3 = arith.constant 0 : index
    %c0_4 = arith.constant 0 : index
    %3 = vector.load %arg4[%c0_3, %c0_4] : memref<1x256xf32, #tpu.memory_space<vmem>>, vector<1x256xf32>
    %4 = vector.broadcast %3 : vector<1x256xf32> to vector<8x256xf32>
    %5 = arith.addf %2, %4 : vector<8x256xf32>
    %cst_5 = arith.constant 0.000000e+00 : f32
    %6 = vector.broadcast %cst_5 : f32 to vector<8x256xf32>
    %7 = arith.cmpf ogt, %5, %6 : vector<8x256xf32>
    %cst_6 = arith.constant 2.000000e-01 : f32
    %8 = vector.broadcast %cst_6 : f32 to vector<8x256xf32>
    %9 = arith.mulf %8, %5 : vector<8x256xf32>
    %10 = arith.select %7, %5, %9 : vector<8x256xi1>, vector<8x256xf32>
    %11 = arith.truncf %10 : vector<8x256xf32> to vector<8x256xbf16>
    %c0_7 = arith.constant 0 : index
    %c0_8 = arith.constant 0 : index
    %12 = vector.load %arg5[%c0_7, %c0_8] : memref<8x256xbf16, #tpu.memory_space<vmem>>, vector<8x256xbf16>
    tpu.vector_store %arg5[%c0_7, %c0_8], %11 {strides = array<i32>} : memref<8x256xbf16, #tpu.memory_space<vmem>>, vector<8x256xbf16>,
    return
  }
  func.func @transform_0(%arg0: i32, %arg1: i32) -> (i32, i32) {
    %c0_i32 = arith.constant 0 : i32
    %c0_i32_0 = arith.constant 0 : i32
    return %arg0, %c0_i32 : i32, i32
  }
  func.func @transform_1(%arg0: i32, %arg1: i32) -> (i32, i32) {
    %c0_i32 = arith.constant 0 : i32
    %c0_i32_0 = arith.constant 0 : i32
    return %c0_i32, %arg1 : i32, i32
  }
  func.func @transform_2(%arg0: i32, %arg1: i32) -> (i32, i32) {
    %c0_i32 = arith.constant 0 : i32
    %c0_i32_0 = arith.constant 0 : i32
    return %c0_i32, %arg1 : i32, i32
  }
  func.func @transform_3(%arg0: i32, %arg1: i32) -> (i32, i32) {
    %c0_i32 = arith.constant 0 : i32
    return %arg0, %arg1 : i32, i32
  }
}

module attributes {stable_mosaic.version = 11 : i64} {
  func.func @_conv3x3_kernel(%arg0: i32, %arg1: i32, %arg2: memref<1x6x10x16xbf16, #tpu.memory_space<vmem>>, %arg3: memref<144x8xbf16, #tpu.memory_space<vmem>>, %arg4: memref<1x8xf32, #tpu.memory_space<vmem>>, %arg5: memref<1x8x8x8xbf16, #tpu.memory_space<vmem>>) attributes {dimension_semantics = [#tpu.dimension_semantics<parallel>, #tpu.dimension_semantics<arbitrary>], iteration_bounds = array<i64: 2, 1>, scalar_prefetch = 0 : i64, scratch_operands = 0 : i64, tpu.core_type = #tpu.core_type<tc>, window_params = [{transform_indices = @transform_0, window_bounds = array<i64: 1, 6, 10, 16>}, {pipeline_mode = #tpu.pipeline_mode<synchronous>, transform_indices = @transform_1, window_bounds = array<i64: 144, 8>}, {pipeline_mode = #tpu.pipeline_mode<synchronous>, transform_indices = @transform_2, window_bounds = array<i64: 1, 8>}, {transform_indices = @transform_3, window_bounds = array<i64: 1, 8, 8, 8>}]} {
    %c4_i32 = arith.constant 4 : i32
    %0 = arith.muli %arg1, %c4_i32 : i32
    %1 = tpu.assume_multiple %0, 4 : i32
    %c0 = arith.constant 0 : index
    %2 = arith.index_cast %1 : i32 to index
    %c0_0 = arith.constant 0 : index
    %c0_1 = arith.constant 0 : index
    %3 = vector.load %arg2[%c0, %2, %c0_0, %c0_1] : memref<1x6x10x16xbf16, #tpu.memory_space<vmem>>, vector<1x6x10x16xbf16>
    %4 = vector.shape_cast %3 : vector<1x6x10x16xbf16> to vector<6x10x16xbf16>
    %5 = vector.shape_cast %4 : vector<6x10x16xbf16> to vector<6x1x10x16xbf16>
    %6 = vector.shape_cast %5 : vector<6x1x10x16xbf16> to vector<6x1x10x16xbf16>
    %7 = vector.broadcast %6 : vector<6x1x10x16xbf16> to vector<6x2x10x16xbf16>
    %8 = vector.shape_cast %7 : vector<6x2x10x16xbf16> to vector<12x10x16xbf16>
    %9 = vector.extract_strided_slice %8 {offsets = [1, 0, 0], sizes = [10, 10, 16], strides = [1, 1, 1]} : vector<12x10x16xbf16> to vector<10x10x16xbf16>
    %10 = vector.extract_strided_slice %9 {offsets = [0, 0, 0], sizes = [8, 8, 16], strides = [1, 1, 1]} : vector<10x10x16xbf16> to vector<8x8x16xbf16>
    %11 = vector.extract_strided_slice %9 {offsets = [0, 1, 0], sizes = [8, 8, 16], strides = [1, 1, 1]} : vector<10x10x16xbf16> to vector<8x8x16xbf16>
    %12 = vector.extract_strided_slice %9 {offsets = [0, 2, 0], sizes = [8, 8, 16], strides = [1, 1, 1]} : vector<10x10x16xbf16> to vector<8x8x16xbf16>
    %13 = vector.extract_strided_slice %9 {offsets = [1, 0, 0], sizes = [8, 8, 16], strides = [1, 1, 1]} : vector<10x10x16xbf16> to vector<8x8x16xbf16>
    %14 = vector.extract_strided_slice %9 {offsets = [1, 1, 0], sizes = [8, 8, 16], strides = [1, 1, 1]} : vector<10x10x16xbf16> to vector<8x8x16xbf16>
    %15 = vector.extract_strided_slice %9 {offsets = [1, 2, 0], sizes = [8, 8, 16], strides = [1, 1, 1]} : vector<10x10x16xbf16> to vector<8x8x16xbf16>
    %16 = vector.extract_strided_slice %9 {offsets = [2, 0, 0], sizes = [8, 8, 16], strides = [1, 1, 1]} : vector<10x10x16xbf16> to vector<8x8x16xbf16>
    %17 = vector.extract_strided_slice %9 {offsets = [2, 1, 0], sizes = [8, 8, 16], strides = [1, 1, 1]} : vector<10x10x16xbf16> to vector<8x8x16xbf16>
    %18 = vector.extract_strided_slice %9 {offsets = [2, 2, 0], sizes = [8, 8, 16], strides = [1, 1, 1]} : vector<10x10x16xbf16> to vector<8x8x16xbf16>
    %19 = tpu.concatenate %10, %11, %12, %13, %14, %15, %16, %17, %18 in 2 : vector<8x8x16xbf16>, vector<8x8x16xbf16>, vector<8x8x16xbf16>, vector<8x8x16xbf16>, vector<8x8x16xbf16>, vector<8x8x16xbf16>, vector<8x8x16xbf16>, vector<8x8x16xbf16>, vector<8x8x16xbf16> -> vector<8x8x144xbf16>
    %20 = vector.shape_cast %19 : vector<8x8x144xbf16> to vector<64x144xbf16>
    %c0_2 = arith.constant 0 : index
    %c0_3 = arith.constant 0 : index
    %21 = vector.load %arg3[%c0_2, %c0_3] : memref<144x8xbf16, #tpu.memory_space<vmem>>, vector<144x8xbf16>
    %cst = arith.constant dense<0.000000e+00> : vector<64x8xf32>
    %22 = tpu.matmul %20, %21, %cst {dimension_numbers = #tpu.dot_dimension_numbers<[1], [0], [0], [1], [0, 0, 1, 1], [], []>} : vector<64x144xbf16>, vector<144x8xbf16>, vector<64x8xf32> -> vector<64x8xf32>
    %c0_4 = arith.constant 0 : index
    %c0_5 = arith.constant 0 : index
    %23 = vector.load %arg4[%c0_4, %c0_5] : memref<1x8xf32, #tpu.memory_space<vmem>>, vector<1x8xf32>
    %24 = vector.broadcast %23 : vector<1x8xf32> to vector<64x8xf32>
    %25 = arith.addf %22, %24 : vector<64x8xf32>
    %cst_6 = arith.constant 0.000000e+00 : f32
    %26 = vector.broadcast %cst_6 : f32 to vector<64x8xf32>
    %27 = arith.cmpf ogt, %25, %26 : vector<64x8xf32>
    %cst_7 = arith.constant 2.000000e-01 : f32
    %28 = vector.broadcast %cst_7 : f32 to vector<64x8xf32>
    %29 = arith.mulf %28, %25 : vector<64x8xf32>
    %30 = arith.select %27, %25, %29 : vector<64x8xi1>, vector<64x8xf32>
    %31 = vector.shape_cast %30 : vector<64x8xf32> to vector<8x8x8xf32>
    %32 = arith.truncf %31 : vector<8x8x8xf32> to vector<8x8x8xbf16>
    %c0_8 = arith.constant 0 : index
    %c0_9 = arith.constant 0 : index
    %c0_10 = arith.constant 0 : index
    %c0_11 = arith.constant 0 : index
    %33 = vector.load %arg5[%c0_8, %c0_9, %c0_10, %c0_11] : memref<1x8x8x8xbf16, #tpu.memory_space<vmem>>, vector<1x8x8x8xbf16>
    %34 = vector.shape_cast %33 : vector<1x8x8x8xbf16> to vector<8x8x8xbf16>
    %35 = vector.shape_cast %32 : vector<8x8x8xbf16> to vector<1x8x8x8xbf16>
    tpu.vector_store %arg5[%c0_8, %c0_9, %c0_10, %c0_11], %35 {strides = array<i32>} : memref<1x8x8x8xbf16, #tpu.memory_space<vmem>>, vector<1x8x8x8xbf16>,
    return
  }
  func.func @transform_0(%arg0: i32, %arg1: i32) -> (i32, i32, i32, i32) {
    %c0_i32 = arith.constant 0 : i32
    %c0_i32_0 = arith.constant 0 : i32
    %c0_i32_1 = arith.constant 0 : i32
    %c0_i32_2 = arith.constant 0 : i32
    return %arg0, %c0_i32, %c0_i32_0, %c0_i32_1 : i32, i32, i32, i32
  }
  func.func @transform_1(%arg0: i32, %arg1: i32) -> (i32, i32) {
    %c0_i32 = arith.constant 0 : i32
    %c0_i32_0 = arith.constant 0 : i32
    %c0_i32_1 = arith.constant 0 : i32
    return %c0_i32, %c0_i32_0 : i32, i32
  }
  func.func @transform_2(%arg0: i32, %arg1: i32) -> (i32, i32) {
    %c0_i32 = arith.constant 0 : i32
    %c0_i32_0 = arith.constant 0 : i32
    %c0_i32_1 = arith.constant 0 : i32
    return %c0_i32, %c0_i32_0 : i32, i32
  }
  func.func @transform_3(%arg0: i32, %arg1: i32) -> (i32, i32, i32, i32) {
    %c0_i32 = arith.constant 0 : i32
    %c0_i32_0 = arith.constant 0 : i32
    %c0_i32_1 = arith.constant 0 : i32
    return %arg0, %arg1, %c0_i32, %c0_i32_0 : i32, i32, i32, i32
  }
}

module attributes {stable_mosaic.version = 11 : i64} {
  func.func @_conv3x3_kernel(%arg0: i32, %arg1: i32, %arg2: memref<1x8x8x8xbf16, #tpu.memory_space<vmem>>, %arg3: memref<72x8xbf16, #tpu.memory_space<vmem>>, %arg4: memref<1x8xf32, #tpu.memory_space<vmem>>, %arg5: memref<1x8x8x8xbf16, #tpu.memory_space<vmem>>, %arg6: memref<10x10x8xbf16, #tpu.memory_space<vmem>>) attributes {dimension_semantics = [#tpu.dimension_semantics<parallel>, #tpu.dimension_semantics<arbitrary>], iteration_bounds = array<i64: 2, 1>, scalar_prefetch = 0 : i64, scratch_operands = 1 : i64, tpu.core_type = #tpu.core_type<tc>, window_params = [{transform_indices = @transform_0, window_bounds = array<i64: 1, 8, 8, 8>}, {pipeline_mode = #tpu.pipeline_mode<synchronous>, transform_indices = @transform_1, window_bounds = array<i64: 72, 8>}, {pipeline_mode = #tpu.pipeline_mode<synchronous>, transform_indices = @transform_2, window_bounds = array<i64: 1, 8>}, {transform_indices = @transform_3, window_bounds = array<i64: 1, 8, 8, 8>}]} {
    %c0_i32 = arith.constant 0 : i32
    %0 = arith.cmpi eq, %arg1, %c0_i32 : i32
    %1 = arith.extui %0 : i1 to i32
    %c0_i32_0 = arith.constant 0 : i32
    %2 = arith.cmpi ne, %1, %c0_i32_0 : i32
    scf.if %2 {
      %cst_12 = arith.constant 0.000000e+00 : bf16
      %33 = vector.broadcast %cst_12 : bf16 to vector<10x10x8xbf16>
      %c0_13 = arith.constant 0 : index
      %c0_14 = arith.constant 0 : index
      %c0_15 = arith.constant 0 : index
      %34 = vector.load %arg6[%c0_13, %c0_14, %c0_15] : memref<10x10x8xbf16, #tpu.memory_space<vmem>>, vector<10x10x8xbf16>
      tpu.vector_store %arg6[%c0_13, %c0_14, %c0_15], %33 {strides = array<i32>} : memref<10x10x8xbf16, #tpu.memory_space<vmem>>, vector<10x10x8xbf16>,
      %c0_16 = arith.constant 0 : index
      %c0_17 = arith.constant 0 : index
      %c0_18 = arith.constant 0 : index
      %c0_19 = arith.constant 0 : index
      %35 = vector.load %arg2[%c0_16, %c0_17, %c0_18, %c0_19] : memref<1x8x8x8xbf16, #tpu.memory_space<vmem>>, vector<1x8x8x8xbf16>
      %36 = vector.shape_cast %35 : vector<1x8x8x8xbf16> to vector<8x8x8xbf16>
      %c1 = arith.constant 1 : index
      %c1_20 = arith.constant 1 : index
      %c0_21 = arith.constant 0 : index
      %37 = vector.load %arg6[%c1, %c1_20, %c0_21] : memref<10x10x8xbf16, #tpu.memory_space<vmem>>, vector<8x8x8xbf16>
      tpu.vector_store %arg6[%c1, %c1_20, %c0_21], %36 {strides = array<i32>} : memref<10x10x8xbf16, #tpu.memory_space<vmem>>, vector<8x8x8xbf16>,
    } else {
    }
    %c8_i32 = arith.constant 8 : i32
    %3 = arith.muli %arg1, %c8_i32 : i32
    %4 = tpu.assume_multiple %3, 8 : i32
    %5 = arith.index_cast %4 : i32 to index
    %c0 = arith.constant 0 : index
    %c0_1 = arith.constant 0 : index
    %6 = vector.load %arg6[%5, %c0, %c0_1] : memref<10x10x8xbf16, #tpu.memory_space<vmem>>, vector<10x10x8xbf16>
    %7 = vector.extract_strided_slice %6 {offsets = [0, 0, 0], sizes = [8, 8, 8], strides = [1, 1, 1]} : vector<10x10x8xbf16> to vector<8x8x8xbf16>
    %8 = vector.extract_strided_slice %6 {offsets = [0, 1, 0], sizes = [8, 8, 8], strides = [1, 1, 1]} : vector<10x10x8xbf16> to vector<8x8x8xbf16>
    %9 = vector.extract_strided_slice %6 {offsets = [0, 2, 0], sizes = [8, 8, 8], strides = [1, 1, 1]} : vector<10x10x8xbf16> to vector<8x8x8xbf16>
    %10 = vector.extract_strided_slice %6 {offsets = [1, 0, 0], sizes = [8, 8, 8], strides = [1, 1, 1]} : vector<10x10x8xbf16> to vector<8x8x8xbf16>
    %11 = vector.extract_strided_slice %6 {offsets = [1, 1, 0], sizes = [8, 8, 8], strides = [1, 1, 1]} : vector<10x10x8xbf16> to vector<8x8x8xbf16>
    %12 = vector.extract_strided_slice %6 {offsets = [1, 2, 0], sizes = [8, 8, 8], strides = [1, 1, 1]} : vector<10x10x8xbf16> to vector<8x8x8xbf16>
    %13 = vector.extract_strided_slice %6 {offsets = [2, 0, 0], sizes = [8, 8, 8], strides = [1, 1, 1]} : vector<10x10x8xbf16> to vector<8x8x8xbf16>
    %14 = vector.extract_strided_slice %6 {offsets = [2, 1, 0], sizes = [8, 8, 8], strides = [1, 1, 1]} : vector<10x10x8xbf16> to vector<8x8x8xbf16>
    %15 = vector.extract_strided_slice %6 {offsets = [2, 2, 0], sizes = [8, 8, 8], strides = [1, 1, 1]} : vector<10x10x8xbf16> to vector<8x8x8xbf16>
    %16 = tpu.concatenate %7, %8, %9, %10, %11, %12, %13, %14, %15 in 2 : vector<8x8x8xbf16>, vector<8x8x8xbf16>, vector<8x8x8xbf16>, vector<8x8x8xbf16>, vector<8x8x8xbf16>, vector<8x8x8xbf16>, vector<8x8x8xbf16>, vector<8x8x8xbf16>, vector<8x8x8xbf16> -> vector<8x8x72xbf16>
    %17 = vector.shape_cast %16 : vector<8x8x72xbf16> to vector<64x72xbf16>
    %c0_2 = arith.constant 0 : index
    %c0_3 = arith.constant 0 : index
    %18 = vector.load %arg3[%c0_2, %c0_3] : memref<72x8xbf16, #tpu.memory_space<vmem>>, vector<72x8xbf16>
    %cst = arith.constant dense<0.000000e+00> : vector<64x8xf32>
    %19 = tpu.matmul %17, %18, %cst {dimension_numbers = #tpu.dot_dimension_numbers<[1], [0], [0], [1], [0, 0, 1, 1], [], []>} : vector<64x72xbf16>, vector<72x8xbf16>, vector<64x8xf32> -> vector<64x8xf32>
    %c0_4 = arith.constant 0 : index
    %c0_5 = arith.constant 0 : index
    %20 = vector.load %arg4[%c0_4, %c0_5] : memref<1x8xf32, #tpu.memory_space<vmem>>, vector<1x8xf32>
    %21 = vector.broadcast %20 : vector<1x8xf32> to vector<64x8xf32>
    %22 = arith.addf %19, %21 : vector<64x8xf32>
    %cst_6 = arith.constant 0.000000e+00 : f32
    %23 = vector.broadcast %cst_6 : f32 to vector<64x8xf32>
    %24 = arith.cmpf ogt, %22, %23 : vector<64x8xf32>
    %cst_7 = arith.constant 2.000000e-01 : f32
    %25 = vector.broadcast %cst_7 : f32 to vector<64x8xf32>
    %26 = arith.mulf %25, %22 : vector<64x8xf32>
    %27 = arith.select %24, %22, %26 : vector<64x8xi1>, vector<64x8xf32>
    %28 = vector.shape_cast %27 : vector<64x8xf32> to vector<8x8x8xf32>
    %29 = arith.truncf %28 : vector<8x8x8xf32> to vector<8x8x8xbf16>
    %c0_8 = arith.constant 0 : index
    %c0_9 = arith.constant 0 : index
    %c0_10 = arith.constant 0 : index
    %c0_11 = arith.constant 0 : index
    %30 = vector.load %arg5[%c0_8, %c0_9, %c0_10, %c0_11] : memref<1x8x8x8xbf16, #tpu.memory_space<vmem>>, vector<1x8x8x8xbf16>
    %31 = vector.shape_cast %30 : vector<1x8x8x8xbf16> to vector<8x8x8xbf16>
    %32 = vector.shape_cast %29 : vector<8x8x8xbf16> to vector<1x8x8x8xbf16>
    tpu.vector_store %arg5[%c0_8, %c0_9, %c0_10, %c0_11], %32 {strides = array<i32>} : memref<1x8x8x8xbf16, #tpu.memory_space<vmem>>, vector<1x8x8x8xbf16>,
    return
  }
  func.func @transform_0(%arg0: i32, %arg1: i32) -> (i32, i32, i32, i32) {
    %c0_i32 = arith.constant 0 : i32
    %c0_i32_0 = arith.constant 0 : i32
    %c0_i32_1 = arith.constant 0 : i32
    %c0_i32_2 = arith.constant 0 : i32
    return %arg0, %c0_i32, %c0_i32_0, %c0_i32_1 : i32, i32, i32, i32
  }
  func.func @transform_1(%arg0: i32, %arg1: i32) -> (i32, i32) {
    %c0_i32 = arith.constant 0 : i32
    %c0_i32_0 = arith.constant 0 : i32
    %c0_i32_1 = arith.constant 0 : i32
    return %c0_i32, %c0_i32_0 : i32, i32
  }
  func.func @transform_2(%arg0: i32, %arg1: i32) -> (i32, i32) {
    %c0_i32 = arith.constant 0 : i32
    %c0_i32_0 = arith.constant 0 : i32
    %c0_i32_1 = arith.constant 0 : i32
    return %c0_i32, %c0_i32_0 : i32, i32
  }
  func.func @transform_3(%arg0: i32, %arg1: i32) -> (i32, i32, i32, i32) {
    %c0_i32 = arith.constant 0 : i32
    %c0_i32_0 = arith.constant 0 : i32
    %c0_i32_1 = arith.constant 0 : i32
    return %arg0, %arg1, %c0_i32, %c0_i32_0 : i32, i32, i32, i32
  }
}

module attributes {stable_mosaic.version = 11 : i64} {
  func.func @_mm_bias_act_kernel(%arg0: i32, %arg1: i32, %arg2: memref<128x8xbf16, #tpu.memory_space<vmem>>, %arg3: memref<8x128xbf16, #tpu.memory_space<vmem>>, %arg4: memref<1x128xf32, #tpu.memory_space<vmem>>, %arg5: memref<128x128xbf16, #tpu.memory_space<vmem>>) attributes {dimension_semantics = [#tpu.dimension_semantics<parallel>, #tpu.dimension_semantics<parallel>], iteration_bounds = array<i64: 1, 1>, scalar_prefetch = 0 : i64, scratch_operands = 0 : i64, tpu.core_type = #tpu.core_type<tc>, window_params = [{transform_indices = @transform_0, window_bounds = array<i64: 128, 8>}, {transform_indices = @transform_1, window_bounds = array<i64: 8, 128>}, {transform_indices = @transform_2, window_bounds = array<i64: 1, 128>}, {transform_indices = @transform_3, window_bounds = array<i64: 128, 128>}]} {
    %c0 = arith.constant 0 : index
    %c0_0 = arith.constant 0 : index
    %0 = vector.load %arg2[%c0, %c0_0] : memref<128x8xbf16, #tpu.memory_space<vmem>>, vector<128x8xbf16>
    %c0_1 = arith.constant 0 : index
    %c0_2 = arith.constant 0 : index
    %1 = vector.load %arg3[%c0_1, %c0_2] : memref<8x128xbf16, #tpu.memory_space<vmem>>, vector<8x128xbf16>
    %cst = arith.constant dense<0.000000e+00> : vector<128x128xf32>
    %2 = tpu.matmul %0, %1, %cst {dimension_numbers = #tpu.dot_dimension_numbers<[1], [0], [0], [1], [0, 0, 1, 1], [], []>} : vector<128x8xbf16>, vector<8x128xbf16>, vector<128x128xf32> -> vector<128x128xf32>
    %c0_3 = arith.constant 0 : index
    %c0_4 = arith.constant 0 : index
    %3 = vector.load %arg4[%c0_3, %c0_4] : memref<1x128xf32, #tpu.memory_space<vmem>>, vector<1x128xf32>
    %4 = vector.broadcast %3 : vector<1x128xf32> to vector<128x128xf32>
    %5 = arith.addf %2, %4 : vector<128x128xf32>
    %6 = arith.truncf %5 : vector<128x128xf32> to vector<128x128xbf16>
    %c0_5 = arith.constant 0 : index
    %c0_6 = arith.constant 0 : index
    %7 = vector.load %arg5[%c0_5, %c0_6] : memref<128x128xbf16, #tpu.memory_space<vmem>>, vector<128x128xbf16>
    tpu.vector_store %arg5[%c0_5, %c0_6], %6 {strides = array<i32>} : memref<128x128xbf16, #tpu.memory_space<vmem>>, vector<128x128xbf16>,
    return
  }
  func.func @transform_0(%arg0: i32, %arg1: i32) -> (i32, i32) {
    %c0_i32 = arith.constant 0 : i32
    %c0_i32_0 = arith.constant 0 : i32
    return %arg0, %c0_i32 : i32, i32
  }
  func.func @transform_1(%arg0: i32, %arg1: i32) -> (i32, i32) {
    %c0_i32 = arith.constant 0 : i32
    %c0_i32_0 = arith.constant 0 : i32
    return %c0_i32, %arg1 : i32, i32
  }
  func.func @transform_2(%arg0: i32, %arg1: i32) -> (i32, i32) {
    %c0_i32 = arith.constant 0 : i32
    %c0_i32_0 = arith.constant 0 : i32
    return %c0_i32, %arg1 : i32, i32
  }
  func.func @transform_3(%arg0: i32, %arg1: i32) -> (i32, i32) {
    %c0_i32 = arith.constant 0 : i32
    return %arg0, %arg1 : i32, i32
  }
}

module attributes {stable_mosaic.version = 11 : i64} {
  func.func @_conv3x3_kernel(%arg0: i32, %arg1: i32, %arg2: memref<1x10x18x8xbf16, #tpu.memory_space<vmem>>, %arg3: memref<72x4xbf16, #tpu.memory_space<vmem>>, %arg4: memref<1x4xf32, #tpu.memory_space<vmem>>, %arg5: memref<1x8x16x4xbf16, #tpu.memory_space<vmem>>) attributes {dimension_semantics = [#tpu.dimension_semantics<parallel>, #tpu.dimension_semantics<arbitrary>], iteration_bounds = array<i64: 2, 2>, scalar_prefetch = 0 : i64, scratch_operands = 0 : i64, tpu.core_type = #tpu.core_type<tc>, window_params = [{transform_indices = @transform_0, window_bounds = array<i64: 1, 10, 18, 8>}, {pipeline_mode = #tpu.pipeline_mode<synchronous>, transform_indices = @transform_1, window_bounds = array<i64: 72, 4>}, {pipeline_mode = #tpu.pipeline_mode<synchronous>, transform_indices = @transform_2, window_bounds = array<i64: 1, 4>}, {transform_indices = @transform_3, window_bounds = array<i64: 1, 8, 16, 4>}]} {
    %c4_i32 = arith.constant 4 : i32
    %0 = arith.muli %arg1, %c4_i32 : i32
    %1 = tpu.assume_multiple %0, 4 : i32
    %c0 = arith.constant 0 : index
    %2 = arith.index_cast %1 : i32 to index
    %c0_0 = arith.constant 0 : index
    %c0_1 = arith.constant 0 : index
    %3 = vector.load %arg2[%c0, %2, %c0_0, %c0_1] : memref<1x10x18x8xbf16, #tpu.memory_space<vmem>>, vector<1x6x18x8xbf16>
    %4 = vector.shape_cast %3 : vector<1x6x18x8xbf16> to vector<6x18x8xbf16>
    %5 = vector.shape_cast %4 : vector<6x18x8xbf16> to vector<6x1x18x8xbf16>
    %6 = vector.shape_cast %5 : vector<6x1x18x8xbf16> to vector<6x1x18x8xbf16>
    %7 = vector.broadcast %6 : vector<6x1x18x8xbf16> to vector<6x2x18x8xbf16>
    %8 = vector.shape_cast %7 : vector<6x2x18x8xbf16> to vector<12x18x8xbf16>
    %9 = vector.extract_strided_slice %8 {offsets = [1, 0, 0], sizes = [10, 18, 8], strides = [1, 1, 1]} : vector<12x18x8xbf16> to vector<10x18x8xbf16>
    %10 = vector.extract_strided_slice %9 {offsets = [0, 0, 0], sizes = [8, 16, 8], strides = [1, 1, 1]} : vector<10x18x8xbf16> to vector<8x16x8xbf16>
    %11 = vector.extract_strided_slice %9 {offsets = [0, 1, 0], sizes = [8, 16, 8], strides = [1, 1, 1]} : vector<10x18x8xbf16> to vector<8x16x8xbf16>
    %12 = vector.extract_strided_slice %9 {offsets = [0, 2, 0], sizes = [8, 16, 8], strides = [1, 1, 1]} : vector<10x18x8xbf16> to vector<8x16x8xbf16>
    %13 = vector.extract_strided_slice %9 {offsets = [1, 0, 0], sizes = [8, 16, 8], strides = [1, 1, 1]} : vector<10x18x8xbf16> to vector<8x16x8xbf16>
    %14 = vector.extract_strided_slice %9 {offsets = [1, 1, 0], sizes = [8, 16, 8], strides = [1, 1, 1]} : vector<10x18x8xbf16> to vector<8x16x8xbf16>
    %15 = vector.extract_strided_slice %9 {offsets = [1, 2, 0], sizes = [8, 16, 8], strides = [1, 1, 1]} : vector<10x18x8xbf16> to vector<8x16x8xbf16>
    %16 = vector.extract_strided_slice %9 {offsets = [2, 0, 0], sizes = [8, 16, 8], strides = [1, 1, 1]} : vector<10x18x8xbf16> to vector<8x16x8xbf16>
    %17 = vector.extract_strided_slice %9 {offsets = [2, 1, 0], sizes = [8, 16, 8], strides = [1, 1, 1]} : vector<10x18x8xbf16> to vector<8x16x8xbf16>
    %18 = vector.extract_strided_slice %9 {offsets = [2, 2, 0], sizes = [8, 16, 8], strides = [1, 1, 1]} : vector<10x18x8xbf16> to vector<8x16x8xbf16>
    %19 = tpu.concatenate %10, %11, %12, %13, %14, %15, %16, %17, %18 in 2 : vector<8x16x8xbf16>, vector<8x16x8xbf16>, vector<8x16x8xbf16>, vector<8x16x8xbf16>, vector<8x16x8xbf16>, vector<8x16x8xbf16>, vector<8x16x8xbf16>, vector<8x16x8xbf16>, vector<8x16x8xbf16> -> vector<8x16x72xbf16>
    %20 = vector.shape_cast %19 : vector<8x16x72xbf16> to vector<128x72xbf16>
    %c0_2 = arith.constant 0 : index
    %c0_3 = arith.constant 0 : index
    %21 = vector.load %arg3[%c0_2, %c0_3] : memref<72x4xbf16, #tpu.memory_space<vmem>>, vector<72x4xbf16>
    %cst = arith.constant dense<0.000000e+00> : vector<128x4xf32>
    %22 = tpu.matmul %20, %21, %cst {dimension_numbers = #tpu.dot_dimension_numbers<[1], [0], [0], [1], [0, 0, 1, 1], [], []>} : vector<128x72xbf16>, vector<72x4xbf16>, vector<128x4xf32> -> vector<128x4xf32>
    %c0_4 = arith.constant 0 : index
    %c0_5 = arith.constant 0 : index
    %23 = vector.load %arg4[%c0_4, %c0_5] : memref<1x4xf32, #tpu.memory_space<vmem>>, vector<1x4xf32>
    %24 = vector.broadcast %23 : vector<1x4xf32> to vector<128x4xf32>
    %25 = arith.addf %22, %24 : vector<128x4xf32>
    %cst_6 = arith.constant 0.000000e+00 : f32
    %26 = vector.broadcast %cst_6 : f32 to vector<128x4xf32>
    %27 = arith.cmpf ogt, %25, %26 : vector<128x4xf32>
    %cst_7 = arith.constant 2.000000e-01 : f32
    %28 = vector.broadcast %cst_7 : f32 to vector<128x4xf32>
    %29 = arith.mulf %28, %25 : vector<128x4xf32>
    %30 = arith.select %27, %25, %29 : vector<128x4xi1>, vector<128x4xf32>
    %31 = vector.shape_cast %30 : vector<128x4xf32> to vector<8x16x4xf32>
    %32 = arith.truncf %31 : vector<8x16x4xf32> to vector<8x16x4xbf16>
    %c0_8 = arith.constant 0 : index
    %c0_9 = arith.constant 0 : index
    %c0_10 = arith.constant 0 : index
    %c0_11 = arith.constant 0 : index
    %33 = vector.load %arg5[%c0_8, %c0_9, %c0_10, %c0_11] : memref<1x8x16x4xbf16, #tpu.memory_space<vmem>>, vector<1x8x16x4xbf16>
    %34 = vector.shape_cast %33 : vector<1x8x16x4xbf16> to vector<8x16x4xbf16>
    %35 = vector.shape_cast %32 : vector<8x16x4xbf16> to vector<1x8x16x4xbf16>
    tpu.vector_store %arg5[%c0_8, %c0_9, %c0_10, %c0_11], %35 {strides = array<i32>} : memref<1x8x16x4xbf16, #tpu.memory_space<vmem>>, vector<1x8x16x4xbf16>,
    return
  }
  func.func @transform_0(%arg0: i32, %arg1: i32) -> (i32, i32, i32, i32) {
    %c0_i32 = arith.constant 0 : i32
    %c0_i32_0 = arith.constant 0 : i32
    %c0_i32_1 = arith.constant 0 : i32
    %c0_i32_2 = arith.constant 0 : i32
    return %arg0, %c0_i32, %c0_i32_0, %c0_i32_1 : i32, i32, i32, i32
  }
  func.func @transform_1(%arg0: i32, %arg1: i32) -> (i32, i32) {
    %c0_i32 = arith.constant 0 : i32
    %c0_i32_0 = arith.constant 0 : i32
    %c0_i32_1 = arith.constant 0 : i32
    return %c0_i32, %c0_i32_0 : i32, i32
  }
  func.func @transform_2(%arg0: i32, %arg1: i32) -> (i32, i32) {
    %c0_i32 = arith.constant 0 : i32
    %c0_i32_0 = arith.constant 0 : i32
    %c0_i32_1 = arith.constant 0 : i32
    return %c0_i32, %c0_i32_0 : i32, i32
  }
  func.func @transform_3(%arg0: i32, %arg1: i32) -> (i32, i32, i32, i32) {
    %c0_i32 = arith.constant 0 : i32
    %c0_i32_0 = arith.constant 0 : i32
    %c0_i32_1 = arith.constant 0 : i32
    return %arg0, %arg1, %c0_i32, %c0_i32_0 : i32, i32, i32, i32
  }
}

module attributes {stable_mosaic.version = 11 : i64} {
  func.func @_conv3x3_kernel(%arg0: i32, %arg1: i32, %arg2: memref<1x16x16x4xbf16, #tpu.memory_space<vmem>>, %arg3: memref<36x4xbf16, #tpu.memory_space<vmem>>, %arg4: memref<1x4xf32, #tpu.memory_space<vmem>>, %arg5: memref<1x8x16x4xbf16, #tpu.memory_space<vmem>>, %arg6: memref<18x18x4xbf16, #tpu.memory_space<vmem>>) attributes {dimension_semantics = [#tpu.dimension_semantics<parallel>, #tpu.dimension_semantics<arbitrary>], iteration_bounds = array<i64: 2, 2>, scalar_prefetch = 0 : i64, scratch_operands = 1 : i64, tpu.core_type = #tpu.core_type<tc>, window_params = [{transform_indices = @transform_0, window_bounds = array<i64: 1, 16, 16, 4>}, {pipeline_mode = #tpu.pipeline_mode<synchronous>, transform_indices = @transform_1, window_bounds = array<i64: 36, 4>}, {pipeline_mode = #tpu.pipeline_mode<synchronous>, transform_indices = @transform_2, window_bounds = array<i64: 1, 4>}, {transform_indices = @transform_3, window_bounds = array<i64: 1, 8, 16, 4>}]} {
    %c0_i32 = arith.constant 0 : i32
    %0 = arith.cmpi eq, %arg1, %c0_i32 : i32
    %1 = arith.extui %0 : i1 to i32
    %c0_i32_0 = arith.constant 0 : i32
    %2 = arith.cmpi ne, %1, %c0_i32_0 : i32
    scf.if %2 {
      %cst_12 = arith.constant 0.000000e+00 : bf16
      %33 = vector.broadcast %cst_12 : bf16 to vector<18x18x4xbf16>
      %c0_13 = arith.constant 0 : index
      %c0_14 = arith.constant 0 : index
      %c0_15 = arith.constant 0 : index
      %34 = vector.load %arg6[%c0_13, %c0_14, %c0_15] : memref<18x18x4xbf16, #tpu.memory_space<vmem>>, vector<18x18x4xbf16>
      tpu.vector_store %arg6[%c0_13, %c0_14, %c0_15], %33 {strides = array<i32>} : memref<18x18x4xbf16, #tpu.memory_space<vmem>>, vector<18x18x4xbf16>,
      %c0_16 = arith.constant 0 : index
      %c0_17 = arith.constant 0 : index
      %c0_18 = arith.constant 0 : index
      %c0_19 = arith.constant 0 : index
      %35 = vector.load %arg2[%c0_16, %c0_17, %c0_18, %c0_19] : memref<1x16x16x4xbf16, #tpu.memory_space<vmem>>, vector<1x16x16x4xbf16>
      %36 = vector.shape_cast %35 : vector<1x16x16x4xbf16> to vector<16x16x4xbf16>
      %c1 = arith.constant 1 : index
      %c1_20 = arith.constant 1 : index
      %c0_21 = arith.constant 0 : index
      %37 = vector.load %arg6[%c1, %c1_20, %c0_21] : memref<18x18x4xbf16, #tpu.memory_space<vmem>>, vector<16x16x4xbf16>
      tpu.vector_store %arg6[%c1, %c1_20, %c0_21], %36 {strides = array<i32>} : memref<18x18x4xbf16, #tpu.memory_space<vmem>>, vector<16x16x4xbf16>,
    } else {
    }
    %c8_i32 = arith.constant 8 : i32
    %3 = arith.muli %arg1, %c8_i32 : i32
    %4 = tpu.assume_multiple %3, 8 : i32
    %5 = arith.index_cast %4 : i32 to index
    %c0 = arith.constant 0 : index
    %c0_1 = arith.constant 0 : index
    %6 = vector.load %arg6[%5, %c0, %c0_1] : memref<18x18x4xbf16, #tpu.memory_space<vmem>>, vector<10x18x4xbf16>
    %7 = vector.extract_strided_slice %6 {offsets = [0, 0, 0], sizes = [8, 16, 4], strides = [1, 1, 1]} : vector<10x18x4xbf16> to vector<8x16x4xbf16>
    %8 = vector.extract_strided_slice %6 {offsets = [0, 1, 0], sizes = [8, 16, 4], strides = [1, 1, 1]} : vector<10x18x4xbf16> to vector<8x16x4xbf16>
    %9 = vector.extract_strided_slice %6 {offsets = [0, 2, 0], sizes = [8, 16, 4], strides = [1, 1, 1]} : vector<10x18x4xbf16> to vector<8x16x4xbf16>
    %10 = vector.extract_strided_slice %6 {offsets = [1, 0, 0], sizes = [8, 16, 4], strides = [1, 1, 1]} : vector<10x18x4xbf16> to vector<8x16x4xbf16>
    %11 = vector.extract_strided_slice %6 {offsets = [1, 1, 0], sizes = [8, 16, 4], strides = [1, 1, 1]} : vector<10x18x4xbf16> to vector<8x16x4xbf16>
    %12 = vector.extract_strided_slice %6 {offsets = [1, 2, 0], sizes = [8, 16, 4], strides = [1, 1, 1]} : vector<10x18x4xbf16> to vector<8x16x4xbf16>
    %13 = vector.extract_strided_slice %6 {offsets = [2, 0, 0], sizes = [8, 16, 4], strides = [1, 1, 1]} : vector<10x18x4xbf16> to vector<8x16x4xbf16>
    %14 = vector.extract_strided_slice %6 {offsets = [2, 1, 0], sizes = [8, 16, 4], strides = [1, 1, 1]} : vector<10x18x4xbf16> to vector<8x16x4xbf16>
    %15 = vector.extract_strided_slice %6 {offsets = [2, 2, 0], sizes = [8, 16, 4], strides = [1, 1, 1]} : vector<10x18x4xbf16> to vector<8x16x4xbf16>
    %16 = tpu.concatenate %7, %8, %9, %10, %11, %12, %13, %14, %15 in 2 : vector<8x16x4xbf16>, vector<8x16x4xbf16>, vector<8x16x4xbf16>, vector<8x16x4xbf16>, vector<8x16x4xbf16>, vector<8x16x4xbf16>, vector<8x16x4xbf16>, vector<8x16x4xbf16>, vector<8x16x4xbf16> -> vector<8x16x36xbf16>
    %17 = vector.shape_cast %16 : vector<8x16x36xbf16> to vector<128x36xbf16>
    %c0_2 = arith.constant 0 : index
    %c0_3 = arith.constant 0 : index
    %18 = vector.load %arg3[%c0_2, %c0_3] : memref<36x4xbf16, #tpu.memory_space<vmem>>, vector<36x4xbf16>
    %cst = arith.constant dense<0.000000e+00> : vector<128x4xf32>
    %19 = tpu.matmul %17, %18, %cst {dimension_numbers = #tpu.dot_dimension_numbers<[1], [0], [0], [1], [0, 0, 1, 1], [], []>} : vector<128x36xbf16>, vector<36x4xbf16>, vector<128x4xf32> -> vector<128x4xf32>
    %c0_4 = arith.constant 0 : index
    %c0_5 = arith.constant 0 : index
    %20 = vector.load %arg4[%c0_4, %c0_5] : memref<1x4xf32, #tpu.memory_space<vmem>>, vector<1x4xf32>
    %21 = vector.broadcast %20 : vector<1x4xf32> to vector<128x4xf32>
    %22 = arith.addf %19, %21 : vector<128x4xf32>
    %cst_6 = arith.constant 0.000000e+00 : f32
    %23 = vector.broadcast %cst_6 : f32 to vector<128x4xf32>
    %24 = arith.cmpf ogt, %22, %23 : vector<128x4xf32>
    %cst_7 = arith.constant 2.000000e-01 : f32
    %25 = vector.broadcast %cst_7 : f32 to vector<128x4xf32>
    %26 = arith.mulf %25, %22 : vector<128x4xf32>
    %27 = arith.select %24, %22, %26 : vector<128x4xi1>, vector<128x4xf32>
    %28 = vector.shape_cast %27 : vector<128x4xf32> to vector<8x16x4xf32>
    %29 = arith.truncf %28 : vector<8x16x4xf32> to vector<8x16x4xbf16>
    %c0_8 = arith.constant 0 : index
    %c0_9 = arith.constant 0 : index
    %c0_10 = arith.constant 0 : index
    %c0_11 = arith.constant 0 : index
    %30 = vector.load %arg5[%c0_8, %c0_9, %c0_10, %c0_11] : memref<1x8x16x4xbf16, #tpu.memory_space<vmem>>, vector<1x8x16x4xbf16>
    %31 = vector.shape_cast %30 : vector<1x8x16x4xbf16> to vector<8x16x4xbf16>
    %32 = vector.shape_cast %29 : vector<8x16x4xbf16> to vector<1x8x16x4xbf16>
    tpu.vector_store %arg5[%c0_8, %c0_9, %c0_10, %c0_11], %32 {strides = array<i32>} : memref<1x8x16x4xbf16, #tpu.memory_space<vmem>>, vector<1x8x16x4xbf16>,
    return
  }
  func.func @transform_0(%arg0: i32, %arg1: i32) -> (i32, i32, i32, i32) {
    %c0_i32 = arith.constant 0 : i32
    %c0_i32_0 = arith.constant 0 : i32
    %c0_i32_1 = arith.constant 0 : i32
    %c0_i32_2 = arith.constant 0 : i32
    return %arg0, %c0_i32, %c0_i32_0, %c0_i32_1 : i32, i32, i32, i32
  }
  func.func @transform_1(%arg0: i32, %arg1: i32) -> (i32, i32) {
    %c0_i32 = arith.constant 0 : i32
    %c0_i32_0 = arith.constant 0 : i32
    %c0_i32_1 = arith.constant 0 : i32
    return %c0_i32, %c0_i32_0 : i32, i32
  }
  func.func @transform_2(%arg0: i32, %arg1: i32) -> (i32, i32) {
    %c0_i32 = arith.constant 0 : i32
    %c0_i32_0 = arith.constant 0 : i32
    %c0_i32_1 = arith.constant 0 : i32
    return %c0_i32, %c0_i32_0 : i32, i32
  }
  func.func @transform_3(%arg0: i32, %arg1: i32) -> (i32, i32, i32, i32) {
    %c0_i32 = arith.constant 0 : i32
    %c0_i32_0 = arith.constant 0 : i32
    %c0_i32_1 = arith.constant 0 : i32
    return %arg0, %arg1, %c0_i32, %c0_i32_0 : i32, i32, i32, i32
  }
}

module attributes {stable_mosaic.version = 11 : i64} {
  func.func @_rgb_fade_kernel(%arg0: i32, %arg1: i32, %arg2: memref<1x1xf32, #tpu.memory_space<smem>>, %arg3: memref<1x8x16x4xbf16, #tpu.memory_space<vmem>>, %arg4: memref<4x4xbf16, #tpu.memory_space<vmem>>, %arg5: memref<1x4xf32, #tpu.memory_space<vmem>>, %arg6: memref<1x4x16x4xbf16, #tpu.memory_space<vmem>>, %arg7: memref<1x8x16x4xf32, #tpu.memory_space<vmem>>) attributes {dimension_semantics = [#tpu.dimension_semantics<parallel>, #tpu.dimension_semantics<parallel>], iteration_bounds = array<i64: 2, 2>, scalar_prefetch = 0 : i64, scratch_operands = 0 : i64, tpu.core_type = #tpu.core_type<tc>, window_params = [{transform_indices = @transform_0, window_bounds = array<i64: 1, 1>}, {transform_indices = @transform_1, window_bounds = array<i64: 1, 8, 16, 4>}, {pipeline_mode = #tpu.pipeline_mode<synchronous>, transform_indices = @transform_2, window_bounds = array<i64: 4, 4>}, {pipeline_mode = #tpu.pipeline_mode<synchronous>, transform_indices = @transform_3, window_bounds = array<i64: 1, 4>}, {transform_indices = @transform_4, window_bounds = array<i64: 1, 4, 16, 4>}, {transform_indices = @transform_5, window_bounds = array<i64: 1, 8, 16, 4>}]} {
    %c0 = arith.constant 0 : index
    %c0_0 = arith.constant 0 : index
    %0 = memref.load %arg2[%c0, %c0_0] : memref<1x1xf32, #tpu.memory_space<smem>>
    %c0_1 = arith.constant 0 : index
    %c0_2 = arith.constant 0 : index
    %c0_3 = arith.constant 0 : index
    %c0_4 = arith.constant 0 : index
    %1 = vector.load %arg3[%c0_1, %c0_2, %c0_3, %c0_4] : memref<1x8x16x4xbf16, #tpu.memory_space<vmem>>, vector<1x8x16x4xbf16>
    %2 = vector.shape_cast %1 : vector<1x8x16x4xbf16> to vector<8x16x4xbf16>
    %3 = vector.shape_cast %2 : vector<8x16x4xbf16> to vector<128x4xbf16>
    %c0_5 = arith.constant 0 : index
    %c0_6 = arith.constant 0 : index
    %4 = vector.load %arg4[%c0_5, %c0_6] : memref<4x4xbf16, #tpu.memory_space<vmem>>, vector<4x4xbf16>
    %cst = arith.constant dense<0.000000e+00> : vector<128x4xf32>
    %5 = tpu.matmul %3, %4, %cst {dimension_numbers = #tpu.dot_dimension_numbers<[1], [0], [0], [1], [0, 0, 1, 1], [], []>} : vector<128x4xbf16>, vector<4x4xbf16>, vector<128x4xf32> -> vector<128x4xf32>
    %c0_7 = arith.constant 0 : index
    %c0_8 = arith.constant 0 : index
    %6 = vector.load %arg5[%c0_7, %c0_8] : memref<1x4xf32, #tpu.memory_space<vmem>>, vector<1x4xf32>
    %7 = vector.broadcast %6 : vector<1x4xf32> to vector<128x4xf32>
    %8 = arith.addf %5, %7 : vector<128x4xf32>
    %c0_9 = arith.constant 0 : index
    %c0_10 = arith.constant 0 : index
    %c0_11 = arith.constant 0 : index
    %c0_12 = arith.constant 0 : index
    %9 = vector.load %arg6[%c0_9, %c0_10, %c0_11, %c0_12] : memref<1x4x16x4xbf16, #tpu.memory_space<vmem>>, vector<1x4x16x4xbf16>
    %10 = vector.shape_cast %9 : vector<1x4x16x4xbf16> to vector<4x16x4xbf16>
    %11 = vector.shape_cast %10 : vector<4x16x4xbf16> to vector<4x1x16x4xbf16>
    %12 = vector.shape_cast %11 : vector<4x1x16x4xbf16> to vector<4x1x16x4xbf16>
    %13 = vector.broadcast %12 : vector<4x1x16x4xbf16> to vector<4x2x16x4xbf16>
    %14 = vector.shape_cast %13 : vector<4x2x16x4xbf16> to vector<8x16x4xbf16>
    %15 = vector.shape_cast %14 : vector<8x16x4xbf16> to vector<128x4xbf16>
    %16 = arith.extf %15 : vector<128x4xbf16> to vector<128x4xf32>
    %17 = vector.broadcast %0 : f32 to vector<128x4xf32>
    %18 = arith.mulf %17, %8 : vector<128x4xf32>
    %cst_13 = arith.constant 1.000000e+00 : f32
    %19 = arith.subf %cst_13, %0 : f32
    %20 = vector.broadcast %19 : f32 to vector<128x4xf32>
    %21 = arith.mulf %20, %16 : vector<128x4xf32>
    %22 = arith.addf %18, %21 : vector<128x4xf32>
    %23 = math.tanh %22 : vector<128x4xf32>
    %24 = vector.shape_cast %23 : vector<128x4xf32> to vector<8x16x4xf32>
    %c0_14 = arith.constant 0 : index
    %c0_15 = arith.constant 0 : index
    %c0_16 = arith.constant 0 : index
    %c0_17 = arith.constant 0 : index
    %25 = vector.load %arg7[%c0_14, %c0_15, %c0_16, %c0_17] : memref<1x8x16x4xf32, #tpu.memory_space<vmem>>, vector<1x8x16x4xf32>
    %26 = vector.shape_cast %25 : vector<1x8x16x4xf32> to vector<8x16x4xf32>
    %27 = vector.shape_cast %24 : vector<8x16x4xf32> to vector<1x8x16x4xf32>
    tpu.vector_store %arg7[%c0_14, %c0_15, %c0_16, %c0_17], %27 {strides = array<i32>} : memref<1x8x16x4xf32, #tpu.memory_space<vmem>>, vector<1x8x16x4xf32>,
    return
  }
  func.func @transform_0(%arg0: i32, %arg1: i32) -> (i32, i32) {
    %c0_i32 = arith.constant 0 : i32
    %c0_i32_0 = arith.constant 0 : i32
    %c0_i32_1 = arith.constant 0 : i32
    return %c0_i32, %c0_i32_0 : i32, i32
  }
  func.func @transform_1(%arg0: i32, %arg1: i32) -> (i32, i32, i32, i32) {
    %c0_i32 = arith.constant 0 : i32
    %c0_i32_0 = arith.constant 0 : i32
    %c0_i32_1 = arith.constant 0 : i32
    return %arg0, %arg1, %c0_i32, %c0_i32_0 : i32, i32, i32, i32
  }
  func.func @transform_2(%arg0: i32, %arg1: i32) -> (i32, i32) {
    %c0_i32 = arith.constant 0 : i32
    %c0_i32_0 = arith.constant 0 : i32
    %c0_i32_1 = arith.constant 0 : i32
    return %c0_i32, %c0_i32_0 : i32, i32
  }
  func.func @transform_3(%arg0: i32, %arg1: i32) -> (i32, i32) {
    %c0_i32 = arith.constant 0 : i32
    %c0_i32_0 = arith.constant 0 : i32
    %c0_i32_1 = arith.constant 0 : i32
    return %c0_i32, %c0_i32_0 : i32, i32
  }
  func.func @transform_4(%arg0: i32, %arg1: i32) -> (i32, i32, i32, i32) {
    %c0_i32 = arith.constant 0 : i32
    %c0_i32_0 = arith.constant 0 : i32
    %c0_i32_1 = arith.constant 0 : i32
    return %arg0, %arg1, %c0_i32, %c0_i32_0 : i32, i32, i32, i32
  }
  func.func @transform_5(%arg0: i32, %arg1: i32) -> (i32, i32, i32, i32) {
    %c0_i32 = arith.constant 0 : i32
    %c0_i32_0 = arith.constant 0 : i32
    %c0_i32_1 = arith.constant 0 : i32
    return %arg0, %arg1, %c0_i32, %c0_i32_0 : i32, i32, i32, i32
  }
}

</mosaic_0001>

<llo_original>
// kernel: generator_forward.7
$region0: #{generator_forward.7}
  #allocation0 [shape = 'u32[]', space=smem, size = 0x4, offset = 0x4, fixed_abs, tag = 'smem constant byte address 0x4 - core index']
  #allocation1 [shape = 'u32[144,128]{1,0:T(1,128)}', space=vmem, size = 0x12000, scoped, tag = 'internal scratch']
  %s0 = inlined_call_operand.vmem [shape: bf16[8,32], index: 0, kind: input, shape index: {}]
  %s1 = inlined_call_operand.vmem [shape: bf16[32,256], index: 1, kind: input, shape index: {}]
  %s2 = inlined_call_operand.vmem [shape: f32[1,256], index: 2, kind: input, shape index: {}]
  %s3 = inlined_call_operand.vmem [shape: bf16[8,256], index: 3, kind: output, shape index: {}]
  %s4 = sld [smem:[#allocation0]]
  $region22: #{generator_forward.7} parent=0
    _
  %s6 = ssub.s32 1, %s4
  %s7 = scalar_select 0, %s6, %s4
  // Predicated region
  $region2: #{generator_forward.7} parent=0 // pred_check
    _
  $region3: #{generator_forward.7} parent=0 // pred_check_branch
    %9 = sbr.rel (0) target = $region5
  $region4: #{generator_forward.7} parent=0 // pred_region
    _
  $region5: #{generator_forward.7} parent=0 // pred_fallthru
    _
  // Predicated region
  $region6: #{generator_forward.7} parent=0 // pred_check
    _
  $region7: #{generator_forward.7} parent=0 // pred_check_branch
    %11 = sbr.rel (0) target = $region9
  $region8: #{generator_forward.7} parent=0 // pred_region
    _
  $region9: #{generator_forward.7} parent=0 // pred_fallthru
    _
  // Predicated region
  $region10: #{generator_forward.7} parent=0 // pred_check
    _
  $region11: #{generator_forward.7} parent=0 // pred_check_branch
    %13 = sbr.rel (0) target = $region13
  $region12: #{generator_forward.7} parent=0 // pred_region
    _
  $region13: #{generator_forward.7} parent=0 // pred_fallthru
    _
  %v15 = vld [vmem:[%s0] sm:$0xf]
  %v16 = vld [vmem:[%s1] sm:$0xff]
  %v17 = vld [vmem:[%s1 + $0x8] sm:$0xff]
  %v18 = vld [vmem:[%s1 + $0x10] sm:$0xff]
  %v19 = vld [vmem:[%s1 + $0x18] sm:$0xff]
  %v20 = vld [vmem:[%s2] sm:$0x3]
  %v22 = vlaneseq
  %v23 = vshrl.u32 %v22, 7
  %v24 = vsub.s32 0, %v23
  %v25 = vrot.slane %v20, %v24
  %v26 = vlaneseq
  %v27 = vshrl.u32 %v26, 7
  %v28 = vsub.s32 1, %v27
  %v29 = vrot.slane %v20, %v28
  %v36 = vunpack.c.l.b16 %v16
  %v37 = vunpack.c.h.b16 %v16
  %v38 = vunpack.c.l.b16 %v17
  %v39 = vunpack.c.h.b16 %v17
  %v40 = vunpack.c.l.b16 %v18
  %v41 = vunpack.c.h.b16 %v18
  %v42 = vunpack.c.l.b16 %v19
  %v43 = vunpack.c.h.b16 %v19
  %v44 = vpack.c.b16 %v38, %v36
  %v45 = vpack.c.b16 %v39, %v37
  %v46 = vpack.c.b16 %v42, %v40
  %v47 = vpack.c.b16 %v43, %v41
  %vm52 = vcmask 261120
  %v54 = vsel %vm52, %v15, 0
  %56 = vmatprep.subr.bf16.mxu0 %v45
  %57 = vmatpush1.bf16.msra.mxu0 %v44
  %58 = vmatprep.subr.bf16.mxu0 %v47
  %59 = vmatpush1.bf16.msra.mxu0 %v46
  %60 = vmatprep.subr.bf16.mxu0 0
  %61 = vmatpush1.bf16.msra.mxu0 0
  %62 = vmatprep.subr.bf16.mxu0 0
  %63 = vmatpush1.bf16.msra.mxu0 0
  %64 = vmatprep.subr.bf16.mxu0 0
  %65 = vmatpush1.bf16.msra.mxu0 0
  %66 = vmatprep.subr.bf16.mxu0 0
  %67 = vmatpush1.bf16.msra.mxu0 0
  %68 = vmatprep.subr.bf16.mxu0 0
  %69 = vmatpush1.bf16.msra.mxu0 0
  %70 = vmatprep.subr.bf16.mxu0 0
  %71 = vmatpush1.bf16.msra.mxu0 0
  %72 = vmatprep.subr.bf16.mxu0 0
  %73 = vmatpush1.bf16.msra.mxu0 0
  %74 = vmatprep.subr.bf16.mxu0 0
  %75 = vmatpush1.bf16.msra.mxu0 0
  %76 = vmatprep.subr.bf16.mxu0 0
  %77 = vmatpush1.bf16.msra.mxu0 0
  %78 = vmatprep.subr.bf16.mxu0 0
  %79 = vmatpush1.bf16.msra.mxu0 0
  %80 = vmatprep.subr.bf16.mxu0 0
  %81 = vmatpush1.bf16.msra.mxu0 0
  %82 = vmatprep.subr.bf16.mxu0 0
  %83 = vmatpush1.bf16.msra.mxu0 0
  %84 = vmatprep.subr.bf16.mxu0 0
  %85 = vmatpush1.bf16.msra.mxu0 0
  %86 = vmatprep.subr.bf16.mxu0 0
  %87 = vmatpush1.bf16.msra.mxu0 0
  %88 = vmatprep.mubr.bf16.mxu0 0
  %89 = vmatmul.mubr.bf16.gmra.mrb[0].mxu0 %v54
  %v90 = vpop.f32.mrb[0].mxu0
  %v91 = vadd.f32 %v25, %v90
  %v92 = vpop.f32.mrb[0].mxu0
  %v93 = vadd.f32 %v29, %v92
  %v94 = vpop.f32.mrb[0].mxu0
  %v95 = vpop.f32.mrb[0].mxu0
  %96 = vdwg.mxu0
  %vm97 = vcmp.gt.f32.partialorder %v91, 0.0
  %vm98 = vcmp.gt.f32.partialorder %v93, 0.0
  %v99 = vmul.f32 %v91, 0.2
  %v100 = vmul.f32 %v93, 0.2
  %v101 = vsel %vm97, %v91, %v99
  %v102 = vsel %vm98, %v93, %v100
  %v103 = vpack.c.bf16 %v101, %v101
  %v104 = vpack.c.bf16 %v102, %v102
  %v107 = vunpack.c.l.b16 %v103
  %v108 = vunpack.c.l.b16 %v104
  %v109 = vpack.c.b16 %v108, %v107
  %111 = vst [vmem:[%s3] sm:$0xff] %v109
  // Predicated region
  $region14: #{generator_forward.7} parent=0 // pred_check
    _
  $region15: #{generator_forward.7} parent=0 // pred_check_branch
    %113 = sbr.rel (0) target = $region17
  $region16: #{generator_forward.7} parent=0 // pred_region
    _
  $region17: #{generator_forward.7} parent=0 // pred_fallthru
    _
  // Predicated region
  $region18: #{generator_forward.7} parent=0 // pred_check
    _
  $region19: #{generator_forward.7} parent=0 // pred_check_branch
    %115 = sbr.rel (0) target = $region21
  $region20: #{generator_forward.7} parent=0 // pred_region
    _
  $region21: #{generator_forward.7} parent=0 // pred_fallthru
    _

// kernel: generator_forward.10
$region0: #{generator_forward.10}
  #allocation0 [shape = 'u32[]', space=smem, size = 0x4, offset = 0x4, fixed_abs, tag = 'smem constant byte address 0x4 - core index']
  #allocation1 [shape = 'u32[144,128]{1,0:T(1,128)}', space=vmem, size = 0x12000, scoped, tag = 'internal scratch']
  %s0 = inlined_call_operand.vmem [shape: bf16[128,8], index: 0, kind: input, shape index: {}]
  %s1 = inlined_call_operand.vmem [shape: bf16[8,128], index: 1, kind: input, shape index: {}]
  %s2 = inlined_call_operand.vmem [shape: f32[1,128], index: 2, kind: input, shape index: {}]
  %s3 = inlined_call_operand.vmem [shape: bf16[128,128], index: 3, kind: output, shape index: {}]
  %s4 = sld [smem:[#allocation0]]
  $region22: #{generator_forward.10} parent=0
    _
  %s6 = ssub.s32 1, %s4
  %s7 = scalar_select 0, %s6, %s4
  // Predicated region
  $region2: #{generator_forward.10} parent=0 // pred_check
    _
  $region3: #{generator_forward.10} parent=0 // pred_check_branch
    %9 = sbr.rel (0) target = $region5
  $region4: #{generator_forward.10} parent=0 // pred_region
    _
  $region5: #{generator_forward.10} parent=0 // pred_fallthru
    _
  // Predicated region
  $region6: #{generator_forward.10} parent=0 // pred_check
    _
  $region7: #{generator_forward.10} parent=0 // pred_check_branch
    %11 = sbr.rel (0) target = $region9
  $region8: #{generator_forward.10} parent=0 // pred_region
    _
  $region9: #{generator_forward.10} parent=0 // pred_fallthru
    _
  // Predicated region
  $region10: #{generator_forward.10} parent=0 // pred_check
    _
  $region11: #{generator_forward.10} parent=0 // pred_check_branch
    %13 = sbr.rel (0) target = $region13
  $region12: #{generator_forward.10} parent=0 // pred_region
    _
  $region13: #{generator_forward.10} parent=0 // pred_fallthru
    _
  %v15 = vld [vmem:[%s0] sm:$0xf]
  %v16 = vld [vmem:[%s0 + $0x4] sm:$0xf]
  %v17 = vld [vmem:[%s0 + $0x8] sm:$0xf]
  %v18 = vld [vmem:[%s0 + $0xc] sm:$0xf]
  %v19 = vld [vmem:[%s0 + $0x10] sm:$0xf]
  %v20 = vld [vmem:[%s0 + $0x14] sm:$0xf]
  %v21 = vld [vmem:[%s0 + $0x18] sm:$0xf]
  %v22 = vld [vmem:[%s0 + $0x1c] sm:$0xf]
  %v23 = vld [vmem:[%s0 + $0x20] sm:$0xf]
  %v24 = vld [vmem:[%s0 + $0x24] sm:$0xf]
  %v25 = vld [vmem:[%s0 + $0x28] sm:$0xf]
  %v26 = vld [vmem:[%s0 + $0x2c] sm:$0xf]
  %v27 = vld [vmem:[%s0 + $0x30] sm:$0xf]
  %v28 = vld [vmem:[%s0 + $0x34] sm:$0xf]
  %v29 = vld [vmem:[%s0 + $0x38] sm:$0xf]
  %v30 = vld [vmem:[%s0 + $0x3c] sm:$0xf]
  %v31 = vld [vmem:[%s1] sm:$0xf]
  %v32 = vld [vmem:[%s2] sm:$0x1]
  %v34 = vlaneseq
  %v35 = vshrl.u32 %v34, 7
  %v36 = vsub.s32 0, %v35
  %v37 = vrot.slane %v32, %v36
  %v55 = vunpack.c.l.b16 %v15
  %v56 = vunpack.c.l.b16 %v16
  %v57 = vunpack.c.l.b16 %v17
  %v58 = vunpack.c.l.b16 %v18
  %v59 = vunpack.c.l.b16 %v19
  %v60 = vunpack.c.l.b16 %v20
  %v61 = vunpack.c.l.b16 %v21
  %v62 = vunpack.c.l.b16 %v22
  %v63 = vunpack.c.l.b16 %v23
  %v64 = vunpack.c.l.b16 %v24
  %v65 = vunpack.c.l.b16 %v25
  %v66 = vunpack.c.l.b16 %v26
  %v67 = vunpack.c.l.b16 %v27
  %v68 = vunpack.c.l.b16 %v28
  %v69 = vunpack.c.l.b16 %v29
  %v70 = vunpack.c.l.b16 %v30
  %v71 = vpack.c.b16 %v56, %v55
  %v72 = vpack.c.b16 %v58, %v57
  %v73 = vpack.c.b16 %v60, %v59
  %v74 = vpack.c.b16 %v62, %v61
  %v75 = vpack.c.b16 %v64, %v63
  %v76 = vpack.c.b16 %v66, %v65
  %v77 = vpack.c.b16 %v68, %v67
  %v78 = vpack.c.b16 %v70, %v69
  %vm79 = vcmask 64512
  %v81 = vsel %vm79, %v71, 0
  %v84 = vsel %vm79, %v72, 0
  %v87 = vsel %vm79, %v73, 0
  %v90 = vsel %vm79, %v74, 0
  %v93 = vsel %vm79, %v75, 0
  %v96 = vsel %vm79, %v76, 0
  %v99 = vsel %vm79, %v77, 0
  %v102 = vsel %vm79, %v78, 0
  %vm104 = vcmask 1043456
  %v106 = vsel %vm104, %v31, 0
  %108 = vmatprep.subr.bf16.mxu0 0
  %109 = vmatpush1.bf16.msra.mxu0 %v106
  %110 = vmatprep.subr.bf16.mxu0 0
  %111 = vmatpush1.bf16.msra.mxu0 0
  %112 = vmatprep.subr.bf16.mxu0 0
  %113 = vmatpush1.bf16.msra.mxu0 0
  %114 = vmatprep.subr.bf16.mxu0 0
  %115 = vmatpush1.bf16.msra.mxu0 0
  %116 = vmatprep.subr.bf16.mxu0 0
  %117 = vmatpush1.bf16.msra.mxu0 0
  %118 = vmatprep.subr.bf16.mxu0 0
  %119 = vmatpush1.bf16.msra.mxu0 0
  %120 = vmatprep.subr.bf16.mxu0 0
  %121 = vmatpush1.bf16.msra.mxu0 0
  %122 = vmatprep.subr.bf16.mxu0 0
  %123 = vmatpush1.bf16.msra.mxu0 0
  %124 = vmatprep.subr.bf16.mxu0 0
  %125 = vmatpush1.bf16.msra.mxu0 0
  %126 = vmatprep.subr.bf16.mxu0 0
  %127 = vmatpush1.bf16.msra.mxu0 0
  %128 = vmatprep.subr.bf16.mxu0 0
  %129 = vmatpush1.bf16.msra.mxu0 0
  %130 = vmatprep.subr.bf16.mxu0 0
  %131 = vmatpush1.bf16.msra.mxu0 0
  %132 = vmatprep.subr.bf16.mxu0 0
  %133 = vmatpush1.bf16.msra.mxu0 0
  %134 = vmatprep.subr.bf16.mxu0 0
  %135 = vmatpush1.bf16.msra.mxu0 0
  %136 = vmatprep.subr.bf16.mxu0 0
  %137 = vmatpush1.bf16.msra.mxu0 0
  %138 = vmatprep.subr.bf16.mxu0 0
  %139 = vmatpush1.bf16.msra.mxu0 0
  %140 = vmatprep.mubr.bf16.mxu0 0
  %141 = vmatmul.mubr.bf16.gmra.mrb[0].mxu0 %v81
  %v142 = vpop.f32.mrb[0].mxu0
  %v143 = vadd.f32 %v37, %v142
  %v144 = vpop.f32.mrb[0].mxu0
  %v145 = vpop.f32.mrb[0].mxu0
  %v146 = vadd.f32 %v37, %v145
  %v147 = vpop.f32.mrb[0].mxu0
  %148 = vmatprep.mubr.bf16.mxu0 0
  %149 = vmatmul.mubr.bf16.gmra.mrb[0].mxu0 %v84
  %v150 = vpop.f32.mrb[0].mxu0
  %v151 = vadd.f32 %v37, %v150
  %v152 = vpop.f32.mrb[0].mxu0
  %v153 = vpop.f32.mrb[0].mxu0
  %v154 = vadd.f32 %v37, %v153
  %v155 = vpop.f32.mrb[0].mxu0
  %156 = vmatprep.mubr.bf16.mxu0 0
  %157 = vmatmul.mubr.bf16.gmra.mrb[0].mxu0 %v87
  %v158 = vpop.f32.mrb[0].mxu0
  %v159 = vadd.f32 %v37, %v158
  %v160 = vpop.f32.mrb[0].mxu0
  %v161 = vpop.f32.mrb[0].mxu0
  %v162 = vadd.f32 %v37, %v161
  %v163 = vpop.f32.mrb[0].mxu0
  %164 = vmatprep.mubr.bf16.mxu0 0
  %165 = vmatmul.mubr.bf16.gmra.mrb[0].mxu0 %v90
  %v166 = vpop.f32.mrb[0].mxu0
  %v167 = vadd.f32 %v37, %v166
  %v168 = vpop.f32.mrb[0].mxu0
  %v169 = vpop.f32.mrb[0].mxu0
  %v170 = vadd.f32 %v37, %v169
  %v171 = vpop.f32.mrb[0].mxu0
  %172 = vmatprep.mubr.bf16.mxu0 0
  %173 = vmatmul.mubr.bf16.gmra.mrb[0].mxu0 %v93
  %v174 = vpop.f32.mrb[0].mxu0
  %v175 = vadd.f32 %v37, %v174
  %v176 = vpop.f32.mrb[0].mxu0
  %v177 = vpop.f32.mrb[0].mxu0
  %v178 = vadd.f32 %v37, %v177
  %v179 = vpop.f32.mrb[0].mxu0
  %180 = vmatprep.mubr.bf16.mxu0 0
  %181 = vmatmul.mubr.bf16.gmra.mrb[0].mxu0 %v96
  %v182 = vpop.f32.mrb[0].mxu0
  %v183 = vadd.f32 %v37, %v182
  %v184 = vpop.f32.mrb[0].mxu0
  %v185 = vpop.f32.mrb[0].mxu0
  %v186 = vadd.f32 %v37, %v185
  %v187 = vpop.f32.mrb[0].mxu0
  %188 = vmatprep.mubr.bf16.mxu0 0
  %189 = vmatmul.mubr.bf16.gmra.mrb[0].mxu0 %v99
  %v190 = vpop.f32.mrb[0].mxu0
  %v191 = vadd.f32 %v37, %v190
  %v192 = vpop.f32.mrb[0].mxu0
  %v193 = vpop.f32.mrb[0].mxu0
  %v194 = vadd.f32 %v37, %v193
  %v195 = vpop.f32.mrb[0].mxu0
  %196 = vmatprep.mubr.bf16.mxu0 0
  %197 = vmatmul.mubr.bf16.gmra.mrb[0].mxu0 %v102
  %v198 = vpop.f32.mrb[0].mxu0
  %v199 = vadd.f32 %v37, %v198
  %v200 = vpop.f32.mrb[0].mxu0
  %v201 = vpop.f32.mrb[0].mxu0
  %v202 = vadd.f32 %v37, %v201
  %v203 = vpop.f32.mrb[0].mxu0
  %204 = vdwg.mxu0
  %v205 = vpack.c.bf16 %v146, %v143
  %v206 = vpack.c.bf16 %v154, %v151
  %v207 = vpack.c.bf16 %v162, %v159
  %v208 = vpack.c.bf16 %v170, %v167
  %v209 = vpack.c.bf16 %v178, %v175
  %v210 = vpack.c.bf16 %v186, %v183
  %v211 = vpack.c.bf16 %v194, %v191
  %v212 = vpack.c.bf16 %v202, %v199
  %v221 = vunpack.c.l.b16 %v205
  %v222 = vunpack.c.h.b16 %v205
  %v223 = vunpack.c.l.b16 %v206
  %v224 = vunpack.c.h.b16 %v206
  %v225 = vunpack.c.l.b16 %v207
  %v226 = vunpack.c.h.b16 %v207
  %v227 = vunpack.c.l.b16 %v208
  %v228 = vunpack.c.h.b16 %v208
  %v229 = vunpack.c.l.b16 %v209
  %v230 = vunpack.c.h.b16 %v209
  %v231 = vunpack.c.l.b16 %v210
  %v232 = vunpack.c.h.b16 %v210
  %v233 = vunpack.c.l.b16 %v211
  %v234 = vunpack.c.h.b16 %v211
  %v235 = vunpack.c.l.b16 %v212
  %v236 = vunpack.c.h.b16 %v212
  %v237 = vpack.c.b16 %v221, %v221
  %v238 = vpack.c.b16 %v222, %v222
  %v239 = vpack.c.b16 %v223, %v223
  %v240 = vpack.c.b16 %v224, %v224
  %v241 = vpack.c.b16 %v225, %v225
  %v242 = vpack.c.b16 %v226, %v226
  %v243 = vpack.c.b16 %v227, %v227
  %v244 = vpack.c.b16 %v228, %v228
  %v245 = vpack.c.b16 %v229, %v229
  %v246 = vpack.c.b16 %v230, %v230
  %v247 = vpack.c.b16 %v231, %v231
  %v248 = vpack.c.b16 %v232, %v232
  %v249 = vpack.c.b16 %v233, %v233
  %v250 = vpack.c.b16 %v234, %v234
  %v251 = vpack.c.b16 %v235, %v235
  %v252 = vpack.c.b16 %v236, %v236
  %269 = vst [vmem:[%s3] sm:$0xf] %v237
  %270 = vst [vmem:[%s3 + $0x4] sm:$0xf] %v238
  %271 = vst [vmem:[%s3 + $0x8] sm:$0xf] %v239
  %272 = vst [vmem:[%s3 + $0xc] sm:$0xf] %v240
  %273 = vst [vmem:[%s3 + $0x10] sm:$0xf] %v241
  %274 = vst [vmem:[%s3 + $0x14] sm:$0xf] %v242
  %275 = vst [vmem:[%s3 + $0x18] sm:$0xf] %v243
  %276 = vst [vmem:[%s3 + $0x1c] sm:$0xf] %v244
  %277 = vst [vmem:[%s3 + $0x20] sm:$0xf] %v245
  %278 = vst [vmem:[%s3 + $0x24] sm:$0xf] %v246
  %279 = vst [vmem:[%s3 + $0x28] sm:$0xf] %v247
  %280 = vst [vmem:[%s3 + $0x2c] sm:$0xf] %v248
  %281 = vst [vmem:[%s3 + $0x30] sm:$0xf] %v249
  %282 = vst [vmem:[%s3 + $0x34] sm:$0xf] %v250
  %283 = vst [vmem:[%s3 + $0x38] sm:$0xf] %v251
  %284 = vst [vmem:[%s3 + $0x3c] sm:$0xf] %v252
  // Predicated region
  $region14: #{generator_forward.10} parent=0 // pred_check
    _
  $region15: #{generator_forward.10} parent=0 // pred_check_branch
    %286 = sbr.rel (0) target = $region17
  $region16: #{generator_forward.10} parent=0 // pred_region
    _
  $region17: #{generator_forward.10} parent=0 // pred_fallthru
    _
  // Predicated region
  $region18: #{generator_forward.10} parent=0 // pred_check
    _
  $region19: #{generator_forward.10} parent=0 // pred_check_branch
    %288 = sbr.rel (0) target = $region21
  $region20: #{generator_forward.10} parent=0 // pred_region
    _
  $region21: #{generator_forward.10} parent=0 // pred_fallthru
    _

// kernel: generator_forward.8
$region0: #{generator_forward.8}
  #allocation0 [shape = 'u32[]', space=smem, size = 0x4, offset = 0x4, fixed_abs, tag = 'smem constant byte address 0x4 - core index']
  #allocation1 [shape = 'u32[144,128]{1,0:T(1,128)}', space=vmem, size = 0x12000, scoped, tag = 'internal scratch']
  %s0 = inlined_call_operand.vmem [shape: bf16[2,6,10,16], index: 0, kind: input, shape index: {}]
  %s1 = inlined_call_operand.vmem [shape: bf16[144,8], index: 1, kind: input, shape index: {}]
  %s2 = inlined_call_operand.vmem [shape: f32[1,8], index: 2, kind: input, shape index: {}]
  %s3 = inlined_call_operand.vmem [shape: bf16[2,8,8,8], index: 3, kind: output, shape index: {}]
  %s4 = sld [smem:[#allocation0]]
  $region45: #{generator_forward.8} parent=0
    _
  %s6 = ssub.s32 1, %s4
  %s7 = scalar_select 0, %s6, %s4
  loop: start=0, step=1, limit=4
  $region2: #{generator_forward.8} parent=0 // loop_pre_header
    _
  $region3: #{generator_forward.8} parent=0 // loop_header
    %s9 = sphi 0, %s13
    %p10 = scmp.ge.s32.totalorder %s9, 4
    %s16 = sphi 0, %s28
    %s17 = sphi 0, %s24
    %s18 = sphi 0, %s16
    %s19 = sphi 0, %s17
    %s20 = sphi 0, %s18
    %s21 = sphi 0, %s19
    %s31 = sphi 0, %s33
    %s34 = sphi 0, %s31
    %s35 = sphi 0, %s34
    %s51 = sphi 0, %s35
    %s55 = sphi 0, %s55
    %s57 = sphi 0, %s55
    %s58 = sphi 0, %s57
    %s72 = sphi 0, %s58
    %s76 = sphi 0, %s76
    %s78 = sphi 0, %s76
    %s79 = sphi 0, %s78
    %s93 = sphi 0, %s79
    %s101 = sphi 0, %s103
    %s104 = sphi 0, %s101
    %s105 = sphi 0, %s104
    %s121 = sphi 0, %s105
  $region4: #{generator_forward.8} parent=0 // loop_header_branch
    %12 = sbr.rel (%p10) target = $region8
  $region5: #{generator_forward.8} parent=0 // loop_body
    %s14 = ssub.s32 %s9, 1
    %s15 = ssub.s32 %s9, 2
    %s22 = sadd.s32 1, %s17
    %p23 = scmp.ge.s32.totalorder %s22, 1
    %s24 = scalar_select %p23, 0, %s22
    %s25 = sadd.s32 1, %s16
    %s26 = scalar_select %p23, %s25, %s16
    %p27 = scmp.ge.s32.totalorder %s26, 2
    %s28 = scalar_select %p27, 0, %s26
    %s29 = ssub.s32 %s16, %s28
    %p30 = scmp.eq.s32.totalorder %s29, 0
    %s32 = sadd.s32 %s31, 1
    %s33 = scalar_select %p30, %s31, %s32
    %p36 = pneg %p30
    %p37 = scmp.eq.s32.totalorder %s9, 1
    %p38 = por %p36, %p37
    %p39 = scmp.ne.s32.totalorder %s31, %s34
    %p40 = scmp.eq.s32.totalorder %s9, 0
    %p41 = por %p39, %p40
    %p42 = scmp.ne.s32.totalorder %s31, %s34
    %p43 = scmp.eq.s32.totalorder %s14, 1
    %p44 = por %p42, %p43
    %p45 = scmp.ne.s32.totalorder %s34, %s35
    %p46 = scmp.eq.s32.totalorder %s14, 0
    %p47 = por %p45, %p46
    %p48 = scmp.ne.s32.totalorder %s34, %s35
    %p49 = scmp.eq.s32.totalorder %s15, 1
    %p50 = por %p48, %p49
    %p52 = scmp.ne.s32.totalorder %s35, %s51
    %p53 = scmp.eq.s32.totalorder %s15, 0
    %p54 = por %p52, %p53
    %s56 = sadd.s32 %s55, 1
    %p59 = scmp.eq.s32.totalorder %s9, 1
    %p60 = scmp.ne.s32.totalorder %s55, %s57
    %p61 = scmp.eq.s32.totalorder %s9, 0
    %p62 = por %p60, %p61
    %p63 = scmp.ne.s32.totalorder %s55, %s57
    %p64 = scmp.eq.s32.totalorder %s14, 1
    %p65 = por %p63, %p64
    %p66 = scmp.ne.s32.totalorder %s57, %s58
    %p67 = scmp.eq.s32.totalorder %s14, 0
    %p68 = por %p66, %p67
    %p69 = scmp.ne.s32.totalorder %s57, %s58
    %p70 = scmp.eq.s32.totalorder %s15, 1
    %p71 = por %p69, %p70
    %p73 = scmp.ne.s32.totalorder %s58, %s72
    %p74 = scmp.eq.s32.totalorder %s15, 0
    %p75 = por %p73, %p74
    %s77 = sadd.s32 %s76, 1
    %p80 = scmp.eq.s32.totalorder %s9, 1
    %p81 = scmp.ne.s32.totalorder %s76, %s78
    %p82 = scmp.eq.s32.totalorder %s9, 0
    %p83 = por %p81, %p82
    %p84 = scmp.ne.s32.totalorder %s76, %s78
    %p85 = scmp.eq.s32.totalorder %s14, 1
    %p86 = por %p84, %p85
    %p87 = scmp.ne.s32.totalorder %s78, %s79
    %p88 = scmp.eq.s32.totalorder %s14, 0
    %p89 = por %p87, %p88
    %p90 = scmp.ne.s32.totalorder %s78, %s79
    %p91 = scmp.eq.s32.totalorder %s15, 1
    %p92 = por %p90, %p91
    %p94 = scmp.ne.s32.totalorder %s79, %s93
    %p95 = scmp.eq.s32.totalorder %s15, 0
    %p96 = por %p94, %p95
    %s97 = ssub.s32 %s16, %s28
    %s98 = ssub.s32 %s17, %s24
    %s99 = sor.u32 %s97, %s98
    %p100 = scmp.eq.s32.totalorder %s99, 0
    %s102 = sadd.s32 %s101, 1
    %s103 = scalar_select %p100, %s101, %s102
    %p106 = pneg %p100
    %p107 = scmp.eq.s32.totalorder %s9, 1
    %p108 = por %p106, %p107
    %p109 = scmp.ne.s32.totalorder %s101, %s104
    %p110 = scmp.eq.s32.totalorder %s9, 0
    %p111 = por %p109, %p110
    %p112 = scmp.ne.s32.totalorder %s101, %s104
    %p113 = scmp.eq.s32.totalorder %s14, 1
    %p114 = por %p112, %p113
    %p115 = scmp.ne.s32.totalorder %s104, %s105
    %p116 = scmp.eq.s32.totalorder %s14, 0
    %p117 = por %p115, %p116
    %p118 = scmp.ne.s32.totalorder %s104, %s105
    %p119 = scmp.eq.s32.totalorder %s15, 1
    %p120 = por %p118, %p119
    %p122 = scmp.ne.s32.totalorder %s105, %s121
    %p123 = scmp.eq.s32.totalorder %s15, 0
    %p124 = por %p122, %p123
    %p125 = scmp.le.s32.totalorder 1, %s9
    %p126 = scmp.lt.s32.totalorder %s9, 3
    %p127 = pnand %p125, %p126
    %p128 = pneg %p127
    // Predicated region
    $region9: #{generator_forward.8} parent=5 // pred_check
      _
    $region10: #{generator_forward.8} parent=5 // pred_check_branch
      %130 = sbr.rel (%p127) target = $region12
    $region11: #{generator_forward.8} parent=5 // pred_region
      %s131 = ssub.s32 %s9, 1
      // Predicated region
      $region13: #{generator_forward.8} parent=11 // pred_check
        %p132 = pneg %p68
      $region14: #{generator_forward.8} parent=11 // pred_check_branch
        %134 = sbr.rel (%p132) target = $region16
      $region15: #{generator_forward.8} parent=11 // pred_region
        _
      $region16: #{generator_forward.8} parent=11 // pred_fallthru
        _
      // Predicated region
      $region17: #{generator_forward.8} parent=11 // pred_check
        %p135 = pneg %p89
      $region18: #{generator_forward.8} parent=11 // pred_check_branch
        %137 = sbr.rel (%p135) target = $region20
      $region19: #{generator_forward.8} parent=11 // pred_region
        _
      $region20: #{generator_forward.8} parent=11 // pred_fallthru
        _
    $region12: #{generator_forward.8} parent=5 // pred_fallthru
      _
    %p138 = scmp.lt.s32.totalorder %s9, 2
    // Predicated region
    $region21: #{generator_forward.8} parent=5 // pred_check
      %p139 = pneg %p138
    $region22: #{generator_forward.8} parent=5 // pred_check_branch
      %141 = sbr.rel (%p139) target = $region24
    $region23: #{generator_forward.8} parent=5 // pred_region
      // Predicated region
      $region25: #{generator_forward.8} parent=23 // pred_check
        %p142 = pneg %p41
      $region26: #{generator_forward.8} parent=23 // pred_check_branch
        %144 = sbr.rel (%p142) target = $region28
      $region27: #{generator_forward.8} parent=23 // pred_region
        %p145 = scmp.lt.s32.totalorder %s16, 1
        %s146 = scalar_select %p145, %s16, 1
        %s147 = smul.addr %s146, 12
        %s148 = smul.addr %s147, 4
        %s149 = scalar_lea.vmem %s0, %s148
      $region28: #{generator_forward.8} parent=23 // pred_fallthru
        _
    $region24: #{generator_forward.8} parent=5 // pred_fallthru
      _
    %p150 = scmp.le.s32.totalorder 1, %s9
    %p151 = scmp.lt.s32.totalorder %s9, 3
    %p152 = pnand %p150, %p151
    %p153 = pneg %p152
    // Predicated region
    $region29: #{generator_forward.8} parent=5 // pred_check
      _
    $region30: #{generator_forward.8} parent=5 // pred_check_branch
      %155 = sbr.rel (%p152) target = $region32
    $region31: #{generator_forward.8} parent=5 // pred_region
      %s156 = ssub.s32 %s9, 1
      %p157 = scmp.lt.s32.totalorder %s18, 1
      %s158 = scalar_select %p157, %s18, 1
      %s159 = smul.addr %s158, 12
      %s160 = smul.addr %s159, 4
      %s161 = scalar_lea.vmem %s0, %s160
      %p162 = pneg %p47
      %p163 = pneg %p44
      %p164 = pneg %p68
      %p165 = pneg %p65
      %p166 = pneg %p89
      %p167 = pneg %p86
      %p168 = pneg %p117
      %p169 = pneg %p114
      %s170 = smul.u32 8, %s19
      %p171 = scmp.lt.s32.totalorder %s18, 1
      %s172 = scalar_select %p171, %s18, 1
      %p173 = scmp.lt.s32.totalorder %s170, 7
      %s174 = scalar_select %p173, %s170, 7
      %s175 = smul.addr %s172, 8
      %s176 = sadd.s32 %s174, %s175
      %s177 = smul.addr %s176, 4
      %s178 = scalar_lea.vmem %s3, %s177
      %p179 = scmp.lt.s32.totalorder %s18, 1
      %s180 = scalar_select %p179, %s18, 1
      %s181 = smul.addr %s180, 12
      %s182 = smul.addr %s181, 4
      %s183 = scalar_lea.vmem %s0, %s182
      %s184 = smul.u32 8, %s19
      %p185 = scmp.lt.s32.totalorder %s18, 1
      %s186 = scalar_select %p185, %s18, 1
      %p187 = scmp.lt.s32.totalorder %s184, 7
      %s188 = scalar_select %p187, %s184, 7
      %s189 = smul.addr %s186, 8
      %s190 = sadd.s32 %s188, %s189
      %s191 = smul.addr %s190, 4
      %s192 = scalar_lea.vmem %s3, %s191
      %s193 = smul.u32 8, %s19
      %s195 = smul.u32 %s19, 4
      %s196 = smul.u32 %s195, 2
      %s197 = smul.addr %s196, 4
      %s198 = scalar_lea.vmem %s183, %s197
      %v199 = vld [vmem:[%s198] sm:$0xf]
      %v200 = vld [vmem:[%s198 + $0x4] sm:$0x1]
      %v201 = vld [vmem:[%s198 + $0x8] sm:$0xf]
      %v202 = vld [vmem:[%s198 + $0xc] sm:$0x1]
      %v203 = vld [vmem:[%s198 + $0x10] sm:$0xf]
      %v204 = vld [vmem:[%s198 + $0x14] sm:$0x1]
      %v205 = vld [vmem:[%s198 + $0x18] sm:$0xf]
      %v206 = vld [vmem:[%s198 + $0x1c] sm:$0x1]
      %v207 = vld [vmem:[%s198 + $0x20] sm:$0xf]
      %v208 = vld [vmem:[%s198 + $0x24] sm:$0x1]
      %v209 = vld [vmem:[%s198 + $0x28] sm:$0xf]
      %v210 = vld [vmem:[%s198 + $0x2c] sm:$0x1]
      %v221 = vunpack.c.l.b16 %v199
      %v222 = vunpack.c.l.b16 %v200
      %v223 = vunpack.c.l.b16 %v201
      %v224 = vunpack.c.l.b16 %v202
      %v225 = vunpack.c.l.b16 %v203
      %v226 = vunpack.c.l.b16 %v204
      %v227 = vunpack.c.l.b16 %v205
      %v228 = vunpack.c.l.b16 %v206
      %v229 = vunpack.c.l.b16 %v207
      %v230 = vunpack.c.l.b16 %v208
      %v231 = vpack.c.b16 %v222, %v221
      %v232 = vpack.c.b16 %v224, %v223
      %v233 = vpack.c.b16 %v226, %v225
      %v234 = vpack.c.b16 %v228, %v227
      %v235 = vpack.c.b16 %v230, %v229
      %v237 = vshrl.u32 %v231, 16
      %v239 = vshll.u32 %v231, 16
      %v241 = vrot.slane %v239, 1
      %v242 = vor.u32 %v237, %v241
      %v244 = vshrl.u32 %v232, 16
      %v246 = vshll.u32 %v232, 16
      %v248 = vrot.slane %v246, 1
      %v249 = vor.u32 %v244, %v248
      %v251 = vshrl.u32 %v233, 16
      %v253 = vshll.u32 %v233, 16
      %v255 = vrot.slane %v253, 1
      %v256 = vor.u32 %v251, %v255
      %v258 = vshrl.u32 %v234, 16
      %v260 = vshll.u32 %v234, 16
      %v262 = vrot.slane %v260, 1
      %v263 = vor.u32 %v258, %v262
      %v265 = vshrl.u32 %v235, 16
      %v267 = vshll.u32 %v235, 16
      %v269 = vrot.slane %v267, 1
      %v270 = vor.u32 %v265, %v269
      %271 = vrot.lane.b32.xlu0 %v242, 16
      %v272 = vpop.permute.xlu0 %271
      %273 = vrot.lane.b32.xlu0 %v249, 16
      %v274 = vpop.permute.xlu0 %273
      %275 = vrot.lane.b32.xlu0 %v256, 16
      %v276 = vpop.permute.xlu0 %275
      %277 = vrot.lane.b32.xlu0 %v263, 16
      %v278 = vpop.permute.xlu0 %277
      %279 = vrot.lane.b32.xlu0 %v270, 16
      %v280 = vpop.permute.xlu0 %279
      %v281 = vrot.slane %v231, 1
      %v282 = vrot.slane %v232, 1
      %v283 = vrot.slane %v233, 1
      %v284 = vrot.slane %v234, 1
      %v285 = vrot.slane %v235, 1
      %286 = vrot.lane.b32.xlu0 %v281, 32
      %v287 = vpop.permute.xlu0 %286
      %288 = vrot.lane.b32.xlu0 %v282, 32
      %v289 = vpop.permute.xlu0 %288
      %290 = vrot.lane.b32.xlu0 %v283, 32
      %v291 = vpop.permute.xlu0 %290
      %292 = vrot.lane.b32.xlu0 %v284, 32
      %v293 = vpop.permute.xlu0 %292
      %294 = vrot.lane.b32.xlu0 %v285, 32
      %v295 = vpop.permute.xlu0 %294
      %v296 = vpack.c.b16 %v223, %v223
      %v297 = vpack.c.b16 %v225, %v225
      %v298 = vpack.c.b16 %v227, %v227
      %v299 = vpack.c.b16 %v229, %v229
      %300 = vrot.lane.b32.xlu0 %v296, 48
      %v301 = vpop.permute.xlu0 %300
      %302 = vrot.lane.b32.xlu0 %v297, 48
      %v303 = vpop.permute.xlu0 %302
      %304 = vrot.lane.b32.xlu0 %v298, 48
      %v305 = vpop.permute.xlu0 %304
      %306 = vrot.lane.b32.xlu0 %v299, 48
      %v307 = vpop.permute.xlu0 %306
      %308 = vrot.lane.b32.xlu0 %v249, 64
      %v309 = vpop.permute.xlu0 %308
      %310 = vrot.lane.b32.xlu0 %v256, 64
      %v311 = vpop.permute.xlu0 %310
      %312 = vrot.lane.b32.xlu0 %v263, 64
      %v313 = vpop.permute.xlu0 %312
      %314 = vrot.lane.b32.xlu0 %v270, 64
      %v315 = vpop.permute.xlu0 %314
      %316 = vrot.lane.b32.xlu0 %v282, 80
      %v317 = vpop.permute.xlu0 %316
      %318 = vrot.lane.b32.xlu0 %v283, 80
      %v319 = vpop.permute.xlu0 %318
      %320 = vrot.lane.b32.xlu0 %v284, 80
      %v321 = vpop.permute.xlu0 %320
      %322 = vrot.lane.b32.xlu0 %v285, 80
      %v323 = vpop.permute.xlu0 %322
      %v325 = vunpack.c.l.b16 %v209
      %v326 = vpack.c.b16 %v325, %v325
      %327 = vrot.lane.b32.xlu0 %v296, 96
      %v328 = vpop.permute.xlu0 %327
      %329 = vrot.lane.b32.xlu0 %v297, 96
      %v330 = vpop.permute.xlu0 %329
      %331 = vrot.lane.b32.xlu0 %v298, 96
      %v332 = vpop.permute.xlu0 %331
      %333 = vrot.lane.b32.xlu0 %v299, 96
      %v334 = vpop.permute.xlu0 %333
      %335 = vrot.lane.b32.xlu0 %v326, 96
      %v336 = vpop.permute.xlu0 %335
      %v338 = vunpack.c.l.b16 %v210
      %v339 = vpack.c.b16 %v338, %v325
      %v341 = vshrl.u32 %v339, 16
      %v343 = vshll.u32 %v339, 16
      %v345 = vrot.slane %v343, 1
      %v346 = vor.u32 %v341, %v345
      %347 = vrot.lane.b32.xlu0 %v249, 112
      %v348 = vpop.permute.xlu0 %347
      %349 = vrot.lane.b32.xlu0 %v256, 112
      %v350 = vpop.permute.xlu0 %349
      %351 = vrot.lane.b32.xlu0 %v263, 112
      %v352 = vpop.permute.xlu0 %351
      %353 = vrot.lane.b32.xlu0 %v270, 112
      %v354 = vpop.permute.xlu0 %353
      %355 = vrot.lane.b32.xlu0 %v346, 112
      %v356 = vpop.permute.xlu0 %355
      %v357 = vrot.slane %v339, 1
      %vm358 = vcmask 130048
      %v361 = vsel %vm358, %v199, %v272
      %v364 = vsel %vm358, %v201, %v274
      %v367 = vsel %vm358, %v203, %v276
      %v370 = vsel %vm358, %v205, %v278
      %v373 = vsel %vm358, %v207, %v280
      %vm374 = vcmask 261120
      %v376 = vsel %vm374, %v361, %v287
      %v378 = vsel %vm374, %v364, %v289
      %v380 = vsel %vm374, %v367, %v291
      %v382 = vsel %vm374, %v370, %v293
      %v384 = vsel %vm374, %v373, %v295
      %vm385 = vcmask 392192
      %v387 = vsel %vm385, %v376, %v301
      %v388 = vsel %vm385, %v378, %v301
      %v390 = vsel %vm385, %v378, %v303
      %v391 = vsel %vm385, %v380, %v303
      %v393 = vsel %vm385, %v380, %v305
      %v394 = vsel %vm385, %v382, %v305
      %v396 = vsel %vm385, %v382, %v307
      %v397 = vsel %vm385, %v384, %v307
      %vm398 = vcmask 523264
      %v400 = vsel %vm398, %v387, %v309
      %v401 = vsel %vm398, %v388, %v309
      %v403 = vsel %vm398, %v390, %v311
      %v404 = vsel %vm398, %v391, %v311
      %v406 = vsel %vm398, %v393, %v313
      %v407 = vsel %vm398, %v394, %v313
      %v409 = vsel %vm398, %v396, %v315
      %v410 = vsel %vm398, %v397, %v315
      %vm411 = vcmask 654336
      %v413 = vsel %vm411, %v400, %v317
      %v414 = vsel %vm411, %v401, %v317
      %v416 = vsel %vm411, %v403, %v319
      %v417 = vsel %vm411, %v404, %v319
      %v419 = vsel %vm411, %v406, %v321
      %v420 = vsel %vm411, %v407, %v321
      %v422 = vsel %vm411, %v409, %v323
      %v423 = vsel %vm411, %v410, %v323
      %vm424 = vcmask 785408
      %v426 = vsel %vm424, %v413, %v328
      %v428 = vsel %vm424, %v414, %v330
      %v429 = vsel %vm424, %v416, %v330
      %v431 = vsel %vm424, %v417, %v332
      %v432 = vsel %vm424, %v419, %v332
      %v434 = vsel %vm424, %v420, %v334
      %v435 = vsel %vm424, %v422, %v334
      %v437 = vsel %vm424, %v423, %v336
      %vm438 = vcmask 916480
      %v440 = vsel %vm438, %v426, %v348
      %v442 = vsel %vm438, %v428, %v350
      %v443 = vsel %vm438, %v429, %v350
      %v445 = vsel %vm438, %v431, %v352
      %v446 = vsel %vm438, %v432, %v352
      %v448 = vsel %vm438, %v434, %v354
      %v449 = vsel %vm438, %v435, %v354
      %v451 = vsel %vm438, %v437, %v356
      %v460 = vunpack.c.l.b16 %v440
      %v461 = vunpack.c.l.b16 %v282
      %v462 = vunpack.c.l.b16 %v442
      %v463 = vunpack.c.l.b16 %v283
      %v464 = vunpack.c.l.b16 %v443
      %v465 = vunpack.c.l.b16 %v445
      %v466 = vunpack.c.l.b16 %v284
      %v467 = vunpack.c.l.b16 %v446
      %v468 = vunpack.c.l.b16 %v448
      %v469 = vunpack.c.l.b16 %v285
      %v470 = vunpack.c.l.b16 %v449
      %v471 = vunpack.c.l.b16 %v451
      %v472 = vunpack.c.l.b16 %v357
      %v473 = vld [vmem:[%s1] sm:$0xf]
      %v474 = vld [vmem:[%s1 + $0x4] sm:$0xf]
      %v475 = vld [vmem:[%s1 + $0x8] sm:$0xf]
      %v476 = vld [vmem:[%s1 + $0xc] sm:$0xf]
      %v477 = vld [vmem:[%s1 + $0x10] sm:$0xf]
      %v478 = vld [vmem:[%s1 + $0x14] sm:$0xf]
      %v479 = vld [vmem:[%s1 + $0x18] sm:$0xf]
      %v480 = vld [vmem:[%s1 + $0x1c] sm:$0xf]
      %v481 = vld [vmem:[%s1 + $0x20] sm:$0xf]
      %v482 = vld [vmem:[%s1 + $0x24] sm:$0xf]
      %v483 = vld [vmem:[%s1 + $0x28] sm:$0xf]
      %v484 = vld [vmem:[%s1 + $0x2c] sm:$0xf]
      %v485 = vld [vmem:[%s1 + $0x30] sm:$0xf]
      %v486 = vld [vmem:[%s1 + $0x34] sm:$0xf]
      %v487 = vld [vmem:[%s1 + $0x38] sm:$0xf]
      %v488 = vld [vmem:[%s1 + $0x3c] sm:$0xf]
      %v489 = vld [vmem:[%s1 + $0x40] sm:$0xf]
      %v490 = vld [vmem:[%s1 + $0x44] sm:$0xf]
      %v491 = vld [vmem:[%s2] sm:$0x1]
      %v493 = vlaneseq
      %v494 = vshrl.u32 %v493, 7
      %v495 = vsub.s32 0, %v494
      %v496 = vrot.slane %v491, %v495
      %v498 = vpack.c.b16 %v462, %v460
      %v499 = vpack.c.b16 %v463, %v461
      %v500 = vpack.c.b16 %v465, %v464
      %v501 = vpack.c.b16 %v466, %v463
      %v502 = vpack.c.b16 %v468, %v467
      %v503 = vpack.c.b16 %v469, %v466
      %v504 = vpack.c.b16 %v471, %v470
      %v505 = vpack.c.b16 %v472, %v469
      %v528 = vunpack.c.l.b16 %v473
      %v529 = vunpack.c.l.b16 %v474
      %v530 = vunpack.c.l.b16 %v475
      %v531 = vunpack.c.l.b16 %v476
      %v532 = vunpack.c.l.b16 %v477
      %v533 = vunpack.c.l.b16 %v478
      %v534 = vunpack.c.l.b16 %v479
      %v535 = vunpack.c.l.b16 %v480
      %v536 = vunpack.c.l.b16 %v481
      %v537 = vunpack.c.l.b16 %v482
      %v538 = vunpack.c.l.b16 %v483
      %v539 = vunpack.c.l.b16 %v484
      %v540 = vunpack.c.l.b16 %v485
      %v541 = vunpack.c.l.b16 %v486
      %v542 = vunpack.c.l.b16 %v487
      %v543 = vunpack.c.l.b16 %v488
      %v544 = vunpack.c.l.b16 %v489
      %v545 = vunpack.c.l.b16 %v490
      %v546 = vpack.c.b16 %v529, %v528
      %v547 = vpack.c.b16 %v531, %v530
      %v548 = vpack.c.b16 %v533, %v532
      %v549 = vpack.c.b16 %v535, %v534
      %v550 = vpack.c.b16 %v537, %v536
      %v551 = vpack.c.b16 %v539, %v538
      %v552 = vpack.c.b16 %v541, %v540
      %v553 = vpack.c.b16 %v543, %v542
      %v554 = vpack.c.b16 %v545, %v544
      %v565 = vsel %vm358, %v499, 0
      %v568 = vsel %vm358, %v501, 0
      %v571 = vsel %vm358, %v503, 0
      %v574 = vsel %vm358, %v505, 0
      %576 = vmatprep.subr.bf16.mxu0 0
      %577 = vmatpush1.bf16.msra.mxu0 %v546
      %578 = vmatprep.subr.bf16.mxu0 0
      %579 = vmatpush1.bf16.msra.mxu0 %v547
      %580 = vmatprep.subr.bf16.mxu0 0
      %581 = vmatpush1.bf16.msra.mxu0 %v548
      %582 = vmatprep.subr.bf16.mxu0 0
      %583 = vmatpush1.bf16.msra.mxu0 %v549
      %584 = vmatprep.subr.bf16.mxu0 0
      %585 = vmatpush1.bf16.msra.mxu0 %v550
      %586 = vmatprep.subr.bf16.mxu0 0
      %587 = vmatpush1.bf16.msra.mxu0 %v551
      %588 = vmatprep.subr.bf16.mxu0 0
      %589 = vmatpush1.bf16.msra.mxu0 %v552
      %590 = vmatprep.subr.bf16.mxu0 0
      %591 = vmatpush1.bf16.msra.mxu0 %v553
      %592 = vmatprep.subr.bf16.mxu0 0
      %593 = vmatpush1.bf16.msra.mxu0 %v554
      %594 = vmatprep.subr.bf16.mxu0 0
      %595 = vmatpush1.bf16.msra.mxu0 0
      %596 = vmatprep.subr.bf16.mxu0 0
      %597 = vmatpush1.bf16.msra.mxu0 0
      %598 = vmatprep.subr.bf16.mxu0 0
      %599 = vmatpush1.bf16.msra.mxu0 0
      %600 = vmatprep.subr.bf16.mxu0 0
      %601 = vmatpush1.bf16.msra.mxu0 0
      %602 = vmatprep.subr.bf16.mxu0 0
      %603 = vmatpush1.bf16.msra.mxu0 0
      %604 = vmatprep.subr.bf16.mxu0 0
      %605 = vmatpush1.bf16.msra.mxu0 0
      %606 = vmatprep.subr.bf16.mxu0 0
      %607 = vmatpush1.bf16.msra.mxu0 0
      %608 = vmatprep.mubr.bf16.mxu0 %v565
      %609 = vmatmul.mubr.bf16.gmra.mrb[0].mxu0 %v498
      %v610 = vpop.f32.mrb[0].mxu0
      %v611 = vadd.f32 %v496, %v610
      %v612 = vpop.f32.mrb[0].mxu0
      %v613 = vpop.f32.mrb[0].mxu0
      %v614 = vadd.f32 %v496, %v613
      %v615 = vpop.f32.mrb[0].mxu0
      %616 = vmatprep.mubr.bf16.mxu0 %v568
      %617 = vmatmul.mubr.bf16.gmra.mrb[0].mxu0 %v500
      %v618 = vpop.f32.mrb[0].mxu0
      %v619 = vadd.f32 %v496, %v618
      %v620 = vpop.f32.mrb[0].mxu0
      %v621 = vpop.f32.mrb[0].mxu0
      %v622 = vadd.f32 %v496, %v621
      %v623 = vpop.f32.mrb[0].mxu0
      %624 = vmatprep.mubr.bf16.mxu0 %v571
      %625 = vmatmul.mubr.bf16.gmra.mrb[0].mxu0 %v502
      %v626 = vpop.f32.mrb[0].mxu0
      %v627 = vadd.f32 %v496, %v626
      %v628 = vpop.f32.mrb[0].mxu0
      %v629 = vpop.f32.mrb[0].mxu0
      %v630 = vadd.f32 %v496, %v629
      %v631 = vpop.f32.mrb[0].mxu0
      %632 = vmatprep.mubr.bf16.mxu0 %v574
      %633 = vmatmul.mubr.bf16.gmra.mrb[0].mxu0 %v504
      %v634 = vpop.f32.mrb[0].mxu0
      %v635 = vadd.f32 %v496, %v634
      %v636 = vpop.f32.mrb[0].mxu0
      %v637 = vpop.f32.mrb[0].mxu0
      %v638 = vadd.f32 %v496, %v637
      %v639 = vpop.f32.mrb[0].mxu0
      %640 = vdwg.mxu0
      %vm641 = vcmp.gt.f32.partialorder %v611, 0.0
      %vm642 = vcmp.gt.f32.partialorder %v614, 0.0
      %vm643 = vcmp.gt.f32.partialorder %v619, 0.0
      %vm644 = vcmp.gt.f32.partialorder %v622, 0.0
      %vm645 = vcmp.gt.f32.partialorder %v627, 0.0
      %vm646 = vcmp.gt.f32.partialorder %v630, 0.0
      %vm647 = vcmp.gt.f32.partialorder %v635, 0.0
      %vm648 = vcmp.gt.f32.partialorder %v638, 0.0
      %v649 = vmul.f32 %v611, 0.2
      %v650 = vmul.f32 %v614, 0.2
      %v651 = vmul.f32 %v619, 0.2
      %v652 = vmul.f32 %v622, 0.2
      %v653 = vmul.f32 %v627, 0.2
      %v654 = vmul.f32 %v630, 0.2
      %v655 = vmul.f32 %v635, 0.2
      %v656 = vmul.f32 %v638, 0.2
      %v657 = vsel %vm641, %v611, %v649
      %v658 = vsel %vm642, %v614, %v650
      %v659 = vsel %vm643, %v619, %v651
      %v660 = vsel %vm644, %v622, %v652
      %v661 = vsel %vm645, %v627, %v653
      %v662 = vsel %vm646, %v630, %v654
      %v663 = vsel %vm647, %v635, %v655
      %v664 = vsel %vm648, %v638, %v656
      %v665 = vpack.c.bf16 %v657, %v657
      %v666 = vpack.c.bf16 %v658, %v658
      %v667 = vpack.c.bf16 %v659, %v659
      %v668 = vpack.c.bf16 %v660, %v660
      %v669 = vpack.c.bf16 %v661, %v661
      %v670 = vpack.c.bf16 %v662, %v662
      %v671 = vpack.c.bf16 %v663, %v663
      %v672 = vpack.c.bf16 %v664, %v664
      %vm673 = vcmask 60416
      %674 = vst.msk [vmem:[%s192] sm:$0xf] %vm673, %v665
      %675 = vst.msk [vmem:[%s192 + $0x4] sm:$0xf] %vm673, %v666
      %676 = vst.msk [vmem:[%s192 + $0x8] sm:$0xf] %vm673, %v667
      %677 = vst.msk [vmem:[%s192 + $0xc] sm:$0xf] %vm673, %v668
      %678 = vst.msk [vmem:[%s192 + $0x10] sm:$0xf] %vm673, %v669
      %679 = vst.msk [vmem:[%s192 + $0x14] sm:$0xf] %vm673, %v670
      %680 = vst.msk [vmem:[%s192 + $0x18] sm:$0xf] %vm673, %v671
      %681 = vst.msk [vmem:[%s192 + $0x1c] sm:$0xf] %vm673, %v672
      %s682 = smul.u32 8, %s19
      %p683 = scmp.lt.s32.totalorder %s18, 1
      %s684 = scalar_select %p683, %s18, 1
      %p685 = scmp.lt.s32.totalorder %s682, 7
      %s686 = scalar_select %p685, %s682, 7
      %s687 = smul.addr %s684, 8
      %s688 = sadd.s32 %s686, %s687
      %s689 = smul.addr %s688, 4
      %s690 = scalar_lea.vmem %s3, %s689
      // Predicated region
      $region33: #{generator_forward.8} parent=31 // pred_check
        %p691 = pneg %p114
      $region34: #{generator_forward.8} parent=31 // pred_check_branch
        %693 = sbr.rel (%p691) target = $region36
      $region35: #{generator_forward.8} parent=31 // pred_region
        %s694 = smul.u32 8, %s19
      $region36: #{generator_forward.8} parent=31 // pred_fallthru
        _
    $region32: #{generator_forward.8} parent=5 // pred_fallthru
      _
    %p695 = scmp.le.s32.totalorder 2, %s9
    // Predicated region
    $region37: #{generator_forward.8} parent=5 // pred_check
      %p696 = pneg %p695
    $region38: #{generator_forward.8} parent=5 // pred_check_branch
      %698 = sbr.rel (%p696) target = $region40
    $region39: #{generator_forward.8} parent=5 // pred_region
      %s699 = ssub.s32 %s9, 2
      // Predicated region
      $region41: #{generator_forward.8} parent=39 // pred_check
        %p700 = pneg %p120
      $region42: #{generator_forward.8} parent=39 // pred_check_branch
        %702 = sbr.rel (%p700) target = $region44
      $region43: #{generator_forward.8} parent=39 // pred_region
        %s703 = smul.u32 8, %s21
        %p704 = scmp.lt.s32.totalorder %s20, 1
        %s705 = scalar_select %p704, %s20, 1
        %p706 = scmp.lt.s32.totalorder %s703, 7
        %s707 = scalar_select %p706, %s703, 7
        %s708 = smul.addr %s705, 8
        %s709 = sadd.s32 %s707, %s708
        %s710 = smul.addr %s709, 4
        %s711 = scalar_lea.vmem %s3, %s710
      $region44: #{generator_forward.8} parent=39 // pred_fallthru
        _
    $region40: #{generator_forward.8} parent=5 // pred_fallthru
      _
  $region6: #{generator_forward.8} parent=0 // loop_footer
    %s13 = sadd.s32 1, %s9
  $region7: #{generator_forward.8} parent=0 // loop_footer_branch
    %8 = sbr.rel target = $region3
  $region8: #{generator_forward.8} parent=0 // loop_exit
    _

// kernel: generator_forward.9
$region0: #{generator_forward.9}
  #allocation0 [shape = 'u32[]', space=smem, size = 0x4, offset = 0x4, fixed_abs, tag = 'smem constant byte address 0x4 - core index']
  #allocation1 [shape = 'u32[144,128]{1,0:T(1,128)}', space=vmem, size = 0x12000, scoped, tag = 'internal scratch']
  #allocation2 [shape = 'bf16[10,10,8]{2,1,0:T(8,128)(2,1)}', space=vmem, size = 0xa000, scoped, tag = 'scratch operand']
  %s0 = inlined_call_operand.vmem [shape: bf16[2,8,8,8], index: 0, kind: input, shape index: {}]
  %s1 = inlined_call_operand.vmem [shape: bf16[72,8], index: 1, kind: input, shape index: {}]
  %s2 = inlined_call_operand.vmem [shape: f32[1,8], index: 2, kind: input, shape index: {}]
  %s3 = inlined_call_operand.vmem [shape: bf16[2,8,8,8], index: 3, kind: output, shape index: {}]
  %s4 = sld [smem:[#allocation0]]
  $region49: #{generator_forward.9} parent=0
    _
  %s6 = ssub.s32 1, %s4
  %s7 = scalar_select 0, %s6, %s4
  loop: start=0, step=1, limit=4
  $region2: #{generator_forward.9} parent=0 // loop_pre_header
    _
  $region3: #{generator_forward.9} parent=0 // loop_header
    %s9 = sphi 0, %s13
    %p10 = scmp.ge.s32.totalorder %s9, 4
    %s16 = sphi 0, %s28
    %s17 = sphi 0, %s24
    %s18 = sphi 0, %s16
    %s19 = sphi 0, %s17
    %s20 = sphi 0, %s18
    %s21 = sphi 0, %s19
    %s31 = sphi 0, %s33
    %s34 = sphi 0, %s31
    %s35 = sphi 0, %s34
    %s51 = sphi 0, %s35
    %s55 = sphi 0, %s55
    %s57 = sphi 0, %s55
    %s58 = sphi 0, %s57
    %s72 = sphi 0, %s58
    %s76 = sphi 0, %s76
    %s78 = sphi 0, %s76
    %s79 = sphi 0, %s78
    %s93 = sphi 0, %s79
    %s101 = sphi 0, %s103
    %s104 = sphi 0, %s101
    %s105 = sphi 0, %s104
    %s121 = sphi 0, %s105
  $region4: #{generator_forward.9} parent=0 // loop_header_branch
    %12 = sbr.rel (%p10) target = $region8
  $region5: #{generator_forward.9} parent=0 // loop_body
    %s14 = ssub.s32 %s9, 1
    %s15 = ssub.s32 %s9, 2
    %s22 = sadd.s32 1, %s17
    %p23 = scmp.ge.s32.totalorder %s22, 1
    %s24 = scalar_select %p23, 0, %s22
    %s25 = sadd.s32 1, %s16
    %s26 = scalar_select %p23, %s25, %s16
    %p27 = scmp.ge.s32.totalorder %s26, 2
    %s28 = scalar_select %p27, 0, %s26
    %s29 = ssub.s32 %s16, %s28
    %p30 = scmp.eq.s32.totalorder %s29, 0
    %s32 = sadd.s32 %s31, 1
    %s33 = scalar_select %p30, %s31, %s32
    %p36 = pneg %p30
    %p37 = scmp.eq.s32.totalorder %s9, 1
    %p38 = por %p36, %p37
    %p39 = scmp.ne.s32.totalorder %s31, %s34
    %p40 = scmp.eq.s32.totalorder %s9, 0
    %p41 = por %p39, %p40
    %p42 = scmp.ne.s32.totalorder %s31, %s34
    %p43 = scmp.eq.s32.totalorder %s14, 1
    %p44 = por %p42, %p43
    %p45 = scmp.ne.s32.totalorder %s34, %s35
    %p46 = scmp.eq.s32.totalorder %s14, 0
    %p47 = por %p45, %p46
    %p48 = scmp.ne.s32.totalorder %s34, %s35
    %p49 = scmp.eq.s32.totalorder %s15, 1
    %p50 = por %p48, %p49
    %p52 = scmp.ne.s32.totalorder %s35, %s51
    %p53 = scmp.eq.s32.totalorder %s15, 0
    %p54 = por %p52, %p53
    %s56 = sadd.s32 %s55, 1
    %p59 = scmp.eq.s32.totalorder %s9, 1
    %p60 = scmp.ne.s32.totalorder %s55, %s57
    %p61 = scmp.eq.s32.totalorder %s9, 0
    %p62 = por %p60, %p61
    %p63 = scmp.ne.s32.totalorder %s55, %s57
    %p64 = scmp.eq.s32.totalorder %s14, 1
    %p65 = por %p63, %p64
    %p66 = scmp.ne.s32.totalorder %s57, %s58
    %p67 = scmp.eq.s32.totalorder %s14, 0
    %p68 = por %p66, %p67
    %p69 = scmp.ne.s32.totalorder %s57, %s58
    %p70 = scmp.eq.s32.totalorder %s15, 1
    %p71 = por %p69, %p70
    %p73 = scmp.ne.s32.totalorder %s58, %s72
    %p74 = scmp.eq.s32.totalorder %s15, 0
    %p75 = por %p73, %p74
    %s77 = sadd.s32 %s76, 1
    %p80 = scmp.eq.s32.totalorder %s9, 1
    %p81 = scmp.ne.s32.totalorder %s76, %s78
    %p82 = scmp.eq.s32.totalorder %s9, 0
    %p83 = por %p81, %p82
    %p84 = scmp.ne.s32.totalorder %s76, %s78
    %p85 = scmp.eq.s32.totalorder %s14, 1
    %p86 = por %p84, %p85
    %p87 = scmp.ne.s32.totalorder %s78, %s79
    %p88 = scmp.eq.s32.totalorder %s14, 0
    %p89 = por %p87, %p88
    %p90 = scmp.ne.s32.totalorder %s78, %s79
    %p91 = scmp.eq.s32.totalorder %s15, 1
    %p92 = por %p90, %p91
    %p94 = scmp.ne.s32.totalorder %s79, %s93
    %p95 = scmp.eq.s32.totalorder %s15, 0
    %p96 = por %p94, %p95
    %s97 = ssub.s32 %s16, %s28
    %s98 = ssub.s32 %s17, %s24
    %s99 = sor.u32 %s97, %s98
    %p100 = scmp.eq.s32.totalorder %s99, 0
    %s102 = sadd.s32 %s101, 1
    %s103 = scalar_select %p100, %s101, %s102
    %p106 = pneg %p100
    %p107 = scmp.eq.s32.totalorder %s9, 1
    %p108 = por %p106, %p107
    %p109 = scmp.ne.s32.totalorder %s101, %s104
    %p110 = scmp.eq.s32.totalorder %s9, 0
    %p111 = por %p109, %p110
    %p112 = scmp.ne.s32.totalorder %s101, %s104
    %p113 = scmp.eq.s32.totalorder %s14, 1
    %p114 = por %p112, %p113
    %p115 = scmp.ne.s32.totalorder %s104, %s105
    %p116 = scmp.eq.s32.totalorder %s14, 0
    %p117 = por %p115, %p116
    %p118 = scmp.ne.s32.totalorder %s104, %s105
    %p119 = scmp.eq.s32.totalorder %s15, 1
    %p120 = por %p118, %p119
    %p122 = scmp.ne.s32.totalorder %s105, %s121
    %p123 = scmp.eq.s32.totalorder %s15, 0
    %p124 = por %p122, %p123
    %p125 = scmp.le.s32.totalorder 1, %s9
    %p126 = scmp.lt.s32.totalorder %s9, 3
    %p127 = pnand %p125, %p126
    %p128 = pneg %p127
    // Predicated region
    $region9: #{generator_forward.9} parent=5 // pred_check
      _
    $region10: #{generator_forward.9} parent=5 // pred_check_branch
      %130 = sbr.rel (%p127) target = $region12
    $region11: #{generator_forward.9} parent=5 // pred_region
      %s131 = ssub.s32 %s9, 1
      // Predicated region
      $region13: #{generator_forward.9} parent=11 // pred_check
        %p132 = pneg %p68
      $region14: #{generator_forward.9} parent=11 // pred_check_branch
        %134 = sbr.rel (%p132) target = $region16
      $region15: #{generator_forward.9} parent=11 // pred_region
        _
      $region16: #{generator_forward.9} parent=11 // pred_fallthru
        _
      // Predicated region
      $region17: #{generator_forward.9} parent=11 // pred_check
        %p135 = pneg %p89
      $region18: #{generator_forward.9} parent=11 // pred_check_branch
        %137 = sbr.rel (%p135) target = $region20
      $region19: #{generator_forward.9} parent=11 // pred_region
        _
      $region20: #{generator_forward.9} parent=11 // pred_fallthru
        _
    $region12: #{generator_forward.9} parent=5 // pred_fallthru
      _
    %p138 = scmp.lt.s32.totalorder %s9, 2
    // Predicated region
    $region21: #{generator_forward.9} parent=5 // pred_check
      %p139 = pneg %p138
    $region22: #{generator_forward.9} parent=5 // pred_check_branch
      %141 = sbr.rel (%p139) target = $region24
    $region23: #{generator_forward.9} parent=5 // pred_region
      // Predicated region
      $region25: #{generator_forward.9} parent=23 // pred_check
        %p142 = pneg %p41
      $region26: #{generator_forward.9} parent=23 // pred_check_branch
        %144 = sbr.rel (%p142) target = $region28
      $region27: #{generator_forward.9} parent=23 // pred_region
        %p145 = scmp.lt.s32.totalorder %s16, 1
        %s146 = scalar_select %p145, %s16, 1
        %s147 = smul.addr %s146, 8
        %s148 = smul.addr %s147, 4
        %s149 = scalar_lea.vmem %s0, %s148
      $region28: #{generator_forward.9} parent=23 // pred_fallthru
        _
    $region24: #{generator_forward.9} parent=5 // pred_fallthru
      _
    %p150 = scmp.le.s32.totalorder 1, %s9
    %p151 = scmp.lt.s32.totalorder %s9, 3
    %p152 = pnand %p150, %p151
    %p153 = pneg %p152
    // Predicated region
    $region29: #{generator_forward.9} parent=5 // pred_check
      _
    $region30: #{generator_forward.9} parent=5 // pred_check_branch
      %155 = sbr.rel (%p152) target = $region32
    $region31: #{generator_forward.9} parent=5 // pred_region
      %s156 = ssub.s32 %s9, 1
      %p157 = scmp.lt.s32.totalorder %s18, 1
      %s158 = scalar_select %p157, %s18, 1
      %s159 = smul.addr %s158, 8
      %s160 = smul.addr %s159, 4
      %s161 = scalar_lea.vmem %s0, %s160
      %p162 = pneg %p47
      %p163 = pneg %p44
      %p164 = pneg %p68
      %p165 = pneg %p65
      %p166 = pneg %p89
      %p167 = pneg %p86
      %p168 = pneg %p117
      %p169 = pneg %p114
      %s170 = smul.u32 8, %s19
      %p171 = scmp.lt.s32.totalorder %s18, 1
      %s172 = scalar_select %p171, %s18, 1
      %p173 = scmp.lt.s32.totalorder %s170, 7
      %s174 = scalar_select %p173, %s170, 7
      %s175 = smul.addr %s172, 8
      %s176 = sadd.s32 %s174, %s175
      %s177 = smul.addr %s176, 4
      %s178 = scalar_lea.vmem %s3, %s177
      %p179 = scmp.lt.s32.totalorder %s18, 1
      %s180 = scalar_select %p179, %s18, 1
      %s181 = smul.addr %s180, 8
      %s182 = smul.addr %s181, 4
      %s183 = scalar_lea.vmem %s0, %s182
      %s184 = smul.u32 8, %s19
      %p185 = scmp.lt.s32.totalorder %s18, 1
      %s186 = scalar_select %p185, %s18, 1
      %p187 = scmp.lt.s32.totalorder %s184, 7
      %s188 = scalar_select %p187, %s184, 7
      %s189 = smul.addr %s186, 8
      %s190 = sadd.s32 %s188, %s189
      %s191 = smul.addr %s190, 4
      %s192 = scalar_lea.vmem %s3, %s191
      %s193 = smul.u32 8, %s19
      %p195 = scmp.eq.s32.totalorder %s19, 0
      // Predicated region
      $region33: #{generator_forward.9} parent=31 // pred_check
        %p196 = pneg %p195
      $region34: #{generator_forward.9} parent=31 // pred_check_branch
        %198 = sbr.rel (%p196) target = $region36
      $region35: #{generator_forward.9} parent=31 // pred_region
        %vm199 = vcmask 60416
        %200 = vst.msk [vmem:[#allocation2] sm:$0xf] %vm199, 0
        %vm201 = vcmask 57344
        %202 = vst.msk [vmem:[#allocation2 + $0x4] sm:$0x1] %vm201, 0
        %203 = vst.msk [vmem:[#allocation2 + $0x8] sm:$0xf] %vm199, 0
        %204 = vst.msk [vmem:[#allocation2 + $0xc] sm:$0x1] %vm201, 0
        %205 = vst.msk [vmem:[#allocation2 + $0x10] sm:$0xf] %vm199, 0
        %206 = vst.msk [vmem:[#allocation2 + $0x14] sm:$0x1] %vm201, 0
        %207 = vst.msk [vmem:[#allocation2 + $0x18] sm:$0xf] %vm199, 0
        %208 = vst.msk [vmem:[#allocation2 + $0x1c] sm:$0x1] %vm201, 0
        %209 = vst.msk [vmem:[#allocation2 + $0x20] sm:$0xf] %vm199, 0
        %210 = vst.msk [vmem:[#allocation2 + $0x24] sm:$0x1] %vm201, 0
        %211 = vst.msk [vmem:[#allocation2 + $0x28] sm:$0xf] %vm199, 0
        %212 = vst.msk [vmem:[#allocation2 + $0x2c] sm:$0x1] %vm201, 0
        %213 = vst.msk [vmem:[#allocation2 + $0x30] sm:$0xf] %vm199, 0
        %214 = vst.msk [vmem:[#allocation2 + $0x34] sm:$0x1] %vm201, 0
        %215 = vst.msk [vmem:[#allocation2 + $0x38] sm:$0xf] %vm199, 0
        %216 = vst.msk [vmem:[#allocation2 + $0x3c] sm:$0x1] %vm201, 0
        %217 = vst.msk [vmem:[#allocation2 + $0x40] sm:$0xf] %vm199, 0
        %218 = vst.msk [vmem:[#allocation2 + $0x44] sm:$0x1] %vm201, 0
        %219 = vst.msk [vmem:[#allocation2 + $0x48] sm:$0xf] %vm199, 0
        %220 = vst.msk [vmem:[#allocation2 + $0x4c] sm:$0x1] %vm201, 0
        %v221 = vld [vmem:[%s183] sm:$0xf]
        %v222 = vld [vmem:[%s183 + $0x4] sm:$0xf]
        %v223 = vld [vmem:[%s183 + $0x8] sm:$0xf]
        %v224 = vld [vmem:[%s183 + $0xc] sm:$0xf]
        %v225 = vld [vmem:[%s183 + $0x10] sm:$0xf]
        %v226 = vld [vmem:[%s183 + $0x14] sm:$0xf]
        %v227 = vld [vmem:[%s183 + $0x18] sm:$0xf]
        %v228 = vld [vmem:[%s183 + $0x1c] sm:$0xf]
        %v230 = vshrl.u32 %v221, 16
        %v232 = vrot.slane %v230, 7
        %v233 = vshll.u32 %v221, 16
        %v235 = vor.u32 %v232, %v233
        %v236 = vrot.slane %v232, 4
        %v238 = vshrl.u32 %v222, 16
        %v240 = vrot.slane %v238, 7
        %v241 = vshll.u32 %v222, 16
        %v243 = vor.u32 %v240, %v241
        %v244 = vrot.slane %v240, 4
        %v246 = vshrl.u32 %v223, 16
        %v248 = vrot.slane %v246, 7
        %v249 = vshll.u32 %v223, 16
        %v251 = vor.u32 %v248, %v249
        %v252 = vrot.slane %v248, 4
        %v254 = vshrl.u32 %v224, 16
        %v256 = vrot.slane %v254, 7
        %v257 = vshll.u32 %v224, 16
        %v259 = vor.u32 %v256, %v257
        %v260 = vrot.slane %v256, 4
        %v262 = vshrl.u32 %v225, 16
        %v264 = vrot.slane %v262, 7
        %v265 = vshll.u32 %v225, 16
        %v267 = vor.u32 %v264, %v265
        %v268 = vrot.slane %v264, 4
        %v270 = vshrl.u32 %v226, 16
        %v272 = vrot.slane %v270, 7
        %v273 = vshll.u32 %v226, 16
        %v275 = vor.u32 %v272, %v273
        %v276 = vrot.slane %v272, 4
        %v278 = vshrl.u32 %v227, 16
        %v280 = vrot.slane %v278, 7
        %v281 = vshll.u32 %v227, 16
        %v283 = vor.u32 %v280, %v281
        %v284 = vrot.slane %v280, 4
        %v286 = vshrl.u32 %v228, 16
        %v288 = vrot.slane %v286, 7
        %v289 = vshll.u32 %v228, 16
        %v291 = vor.u32 %v288, %v289
        %v292 = vrot.slane %v288, 4
        %s309 = scalar_lea.vmem [#allocation2], 8
        %vm310 = vcmask 60416
        %vm311 = vsmask.f32 7938
        %vm312 = vmand %vm310, %vm311
        %v313 = vld [vmem:[%s309] sm:$0xf]
        %v314 = vsel %vm312, %v235, %v313
        %315 = vst [vmem:[%s309] sm:$0xf] %v314
        %vm316 = vcmask 57344
        %vm317 = vsmask.f32 256
        %vm318 = vmand %vm316, %vm317
        %v319 = vld [vmem:[%s309 + $0x4] sm:$0x1]
        %v320 = vsel %vm318, %v236, %v319
        %321 = vst [vmem:[%s309 + $0x4] sm:$0x1] %v320
        %v322 = vld [vmem:[%s309 + $0x8] sm:$0xf]
        %v323 = vsel %vm312, %v243, %v322
        %324 = vst [vmem:[%s309 + $0x8] sm:$0xf] %v323
        %v325 = vld [vmem:[%s309 + $0xc] sm:$0x1]
        %v326 = vsel %vm318, %v244, %v325
        %327 = vst [vmem:[%s309 + $0xc] sm:$0x1] %v326
        %v328 = vld [vmem:[%s309 + $0x10] sm:$0xf]
        %v329 = vsel %vm312, %v251, %v328
        %330 = vst [vmem:[%s309 + $0x10] sm:$0xf] %v329
        %v331 = vld [vmem:[%s309 + $0x14] sm:$0x1]
        %v332 = vsel %vm318, %v252, %v331
        %333 = vst [vmem:[%s309 + $0x14] sm:$0x1] %v332
        %v334 = vld [vmem:[%s309 + $0x18] sm:$0xf]
        %v335 = vsel %vm312, %v259, %v334
        %336 = vst [vmem:[%s309 + $0x18] sm:$0xf] %v335
        %v337 = vld [vmem:[%s309 + $0x1c] sm:$0x1]
        %v338 = vsel %vm318, %v260, %v337
        %339 = vst [vmem:[%s309 + $0x1c] sm:$0x1] %v338
        %v340 = vld [vmem:[%s309 + $0x20] sm:$0xf]
        %v341 = vsel %vm312, %v267, %v340
        %342 = vst [vmem:[%s309 + $0x20] sm:$0xf] %v341
        %v343 = vld [vmem:[%s309 + $0x24] sm:$0x1]
        %v344 = vsel %vm318, %v268, %v343
        %345 = vst [vmem:[%s309 + $0x24] sm:$0x1] %v344
        %v346 = vld [vmem:[%s309 + $0x28] sm:$0xf]
        %v347 = vsel %vm312, %v275, %v346
        %348 = vst [vmem:[%s309 + $0x28] sm:$0xf] %v347
        %v349 = vld [vmem:[%s309 + $0x2c] sm:$0x1]
        %v350 = vsel %vm318, %v276, %v349
        %351 = vst [vmem:[%s309 + $0x2c] sm:$0x1] %v350
        %v352 = vld [vmem:[%s309 + $0x30] sm:$0xf]
        %v353 = vsel %vm312, %v283, %v352
        %354 = vst [vmem:[%s309 + $0x30] sm:$0xf] %v353
        %v355 = vld [vmem:[%s309 + $0x34] sm:$0x1]
        %v356 = vsel %vm318, %v284, %v355
        %357 = vst [vmem:[%s309 + $0x34] sm:$0x1] %v356
        %v358 = vld [vmem:[%s309 + $0x38] sm:$0xf]
        %v359 = vsel %vm312, %v291, %v358
        %360 = vst [vmem:[%s309 + $0x38] sm:$0xf] %v359
        %v361 = vld [vmem:[%s309 + $0x3c] sm:$0x1]
        %v362 = vsel %vm318, %v292, %v361
        %363 = vst [vmem:[%s309 + $0x3c] sm:$0x1] %v362
      $region36: #{generator_forward.9} parent=31 // pred_fallthru
        _
      %s364 = smul.u32 %s19, 8
      %s365 = smul.u32 %s364, 2
      %s366 = smul.addr %s365, 4
      %s367 = scalar_lea.vmem [#allocation2], %s366
      %v368 = vld [vmem:[%s367] sm:$0xf]
      %v369 = vld [vmem:[%s367 + $0x4] sm:$0x1]
      %v370 = vld [vmem:[%s367 + $0x8] sm:$0xf]
      %v371 = vld [vmem:[%s367 + $0xc] sm:$0x1]
      %v372 = vld [vmem:[%s367 + $0x10] sm:$0xf]
      %v373 = vld [vmem:[%s367 + $0x14] sm:$0x1]
      %v374 = vld [vmem:[%s367 + $0x18] sm:$0xf]
      %v375 = vld [vmem:[%s367 + $0x1c] sm:$0x1]
      %v376 = vld [vmem:[%s367 + $0x20] sm:$0xf]
      %v377 = vld [vmem:[%s367 + $0x24] sm:$0x1]
      %v378 = vld [vmem:[%s367 + $0x28] sm:$0xf]
      %v379 = vld [vmem:[%s367 + $0x2c] sm:$0x1]
      %v380 = vld [vmem:[%s367 + $0x30] sm:$0xf]
      %v381 = vld [vmem:[%s367 + $0x34] sm:$0x1]
      %v382 = vld [vmem:[%s367 + $0x38] sm:$0xf]
      %v383 = vld [vmem:[%s367 + $0x3c] sm:$0x1]
      %v384 = vld [vmem:[%s367 + $0x40] sm:$0xf]
      %v385 = vld [vmem:[%s367 + $0x44] sm:$0x1]
      %v386 = vld [vmem:[%s367 + $0x48] sm:$0xf]
      %v387 = vld [vmem:[%s367 + $0x4c] sm:$0x1]
      %v404 = vunpack.c.l.b16 %v368
      %v405 = vunpack.c.l.b16 %v369
      %v406 = vunpack.c.l.b16 %v370
      %v407 = vunpack.c.l.b16 %v371
      %v408 = vunpack.c.l.b16 %v372
      %v409 = vunpack.c.l.b16 %v373
      %v410 = vunpack.c.l.b16 %v374
      %v411 = vunpack.c.l.b16 %v375
      %v412 = vunpack.c.l.b16 %v376
      %v413 = vunpack.c.l.b16 %v377
      %v414 = vunpack.c.l.b16 %v378
      %v415 = vunpack.c.l.b16 %v379
      %v416 = vunpack.c.l.b16 %v380
      %v417 = vunpack.c.l.b16 %v381
      %v418 = vunpack.c.l.b16 %v382
      %v419 = vunpack.c.l.b16 %v383
      %v420 = vpack.c.b16 %v405, %v404
      %v421 = vpack.c.b16 %v407, %v406
      %v422 = vpack.c.b16 %v409, %v408
      %v423 = vpack.c.b16 %v411, %v410
      %v424 = vpack.c.b16 %v413, %v412
      %v425 = vpack.c.b16 %v415, %v414
      %v426 = vpack.c.b16 %v417, %v416
      %v427 = vpack.c.b16 %v419, %v418
      %v429 = vshrl.u32 %v420, 16
      %v431 = vshll.u32 %v420, 16
      %v433 = vrot.slane %v431, 1
      %v434 = vor.u32 %v429, %v433
      %v436 = vshrl.u32 %v421, 16
      %v438 = vshll.u32 %v421, 16
      %v440 = vrot.slane %v438, 1
      %v441 = vor.u32 %v436, %v440
      %v443 = vshrl.u32 %v422, 16
      %v445 = vshll.u32 %v422, 16
      %v447 = vrot.slane %v445, 1
      %v448 = vor.u32 %v443, %v447
      %v450 = vshrl.u32 %v423, 16
      %v452 = vshll.u32 %v423, 16
      %v454 = vrot.slane %v452, 1
      %v455 = vor.u32 %v450, %v454
      %v457 = vshrl.u32 %v424, 16
      %v459 = vshll.u32 %v424, 16
      %v461 = vrot.slane %v459, 1
      %v462 = vor.u32 %v457, %v461
      %v464 = vshrl.u32 %v425, 16
      %v466 = vshll.u32 %v425, 16
      %v468 = vrot.slane %v466, 1
      %v469 = vor.u32 %v464, %v468
      %v471 = vshrl.u32 %v426, 16
      %v473 = vshll.u32 %v426, 16
      %v475 = vrot.slane %v473, 1
      %v476 = vor.u32 %v471, %v475
      %v478 = vshrl.u32 %v427, 16
      %v480 = vshll.u32 %v427, 16
      %v482 = vrot.slane %v480, 1
      %v483 = vor.u32 %v478, %v482
      %484 = vrot.lane.b32.xlu0 %v434, 8
      %v485 = vpop.permute.xlu0 %484
      %486 = vrot.lane.b32.xlu0 %v441, 8
      %v487 = vpop.permute.xlu0 %486
      %488 = vrot.lane.b32.xlu0 %v448, 8
      %v489 = vpop.permute.xlu0 %488
      %490 = vrot.lane.b32.xlu0 %v455, 8
      %v491 = vpop.permute.xlu0 %490
      %492 = vrot.lane.b32.xlu0 %v462, 8
      %v493 = vpop.permute.xlu0 %492
      %494 = vrot.lane.b32.xlu0 %v469, 8
      %v495 = vpop.permute.xlu0 %494
      %496 = vrot.lane.b32.xlu0 %v476, 8
      %v497 = vpop.permute.xlu0 %496
      %498 = vrot.lane.b32.xlu0 %v483, 8
      %v499 = vpop.permute.xlu0 %498
      %v500 = vrot.slane %v420, 1
      %v501 = vrot.slane %v421, 1
      %v502 = vrot.slane %v422, 1
      %v503 = vrot.slane %v423, 1
      %v504 = vrot.slane %v424, 1
      %v505 = vrot.slane %v425, 1
      %v506 = vrot.slane %v426, 1
      %v507 = vrot.slane %v427, 1
      %508 = vrot.lane.b32.xlu0 %v500, 16
      %v509 = vpop.permute.xlu0 %508
      %510 = vrot.lane.b32.xlu0 %v501, 16
      %v511 = vpop.permute.xlu0 %510
      %512 = vrot.lane.b32.xlu0 %v502, 16
      %v513 = vpop.permute.xlu0 %512
      %514 = vrot.lane.b32.xlu0 %v503, 16
      %v515 = vpop.permute.xlu0 %514
      %516 = vrot.lane.b32.xlu0 %v504, 16
      %v517 = vpop.permute.xlu0 %516
      %518 = vrot.lane.b32.xlu0 %v505, 16
      %v519 = vpop.permute.xlu0 %518
      %520 = vrot.lane.b32.xlu0 %v506, 16
      %v521 = vpop.permute.xlu0 %520
      %522 = vrot.lane.b32.xlu0 %v507, 16
      %v523 = vpop.permute.xlu0 %522
      %v525 = vunpack.c.l.b16 %v384
      %v526 = vpack.c.b16 %v406, %v406
      %v527 = vpack.c.b16 %v408, %v408
      %v528 = vpack.c.b16 %v410, %v410
      %v529 = vpack.c.b16 %v412, %v412
      %v530 = vpack.c.b16 %v414, %v414
      %v531 = vpack.c.b16 %v416, %v416
      %v532 = vpack.c.b16 %v418, %v418
      %v533 = vpack.c.b16 %v525, %v525
      %534 = vrot.lane.b32.xlu0 %v526, 24
      %v535 = vpop.permute.xlu0 %534
      %536 = vrot.lane.b32.xlu0 %v527, 24
      %v537 = vpop.permute.xlu0 %536
      %538 = vrot.lane.b32.xlu0 %v528, 24
      %v539 = vpop.permute.xlu0 %538
      %540 = vrot.lane.b32.xlu0 %v529, 24
      %v541 = vpop.permute.xlu0 %540
      %542 = vrot.lane.b32.xlu0 %v530, 24
      %v543 = vpop.permute.xlu0 %542
      %544 = vrot.lane.b32.xlu0 %v531, 24
      %v545 = vpop.permute.xlu0 %544
      %546 = vrot.lane.b32.xlu0 %v532, 24
      %v547 = vpop.permute.xlu0 %546
      %548 = vrot.lane.b32.xlu0 %v533, 24
      %v549 = vpop.permute.xlu0 %548
      %v551 = vunpack.c.l.b16 %v385
      %v552 = vpack.c.b16 %v551, %v525
      %v554 = vshrl.u32 %v552, 16
      %v556 = vshll.u32 %v552, 16
      %v558 = vrot.slane %v556, 1
      %v559 = vor.u32 %v554, %v558
      %560 = vrot.lane.b32.xlu0 %v441, 32
      %v561 = vpop.permute.xlu0 %560
      %562 = vrot.lane.b32.xlu0 %v448, 32
      %v563 = vpop.permute.xlu0 %562
      %564 = vrot.lane.b32.xlu0 %v455, 32
      %v565 = vpop.permute.xlu0 %564
      %566 = vrot.lane.b32.xlu0 %v462, 32
      %v567 = vpop.permute.xlu0 %566
      %568 = vrot.lane.b32.xlu0 %v469, 32
      %v569 = vpop.permute.xlu0 %568
      %570 = vrot.lane.b32.xlu0 %v476, 32
      %v571 = vpop.permute.xlu0 %570
      %572 = vrot.lane.b32.xlu0 %v483, 32
      %v573 = vpop.permute.xlu0 %572
      %574 = vrot.lane.b32.xlu0 %v559, 32
      %v575 = vpop.permute.xlu0 %574
      %v576 = vrot.slane %v552, 1
      %577 = vrot.lane.b32.xlu0 %v501, 40
      %v578 = vpop.permute.xlu0 %577
      %579 = vrot.lane.b32.xlu0 %v502, 40
      %v580 = vpop.permute.xlu0 %579
      %581 = vrot.lane.b32.xlu0 %v503, 40
      %v582 = vpop.permute.xlu0 %581
      %583 = vrot.lane.b32.xlu0 %v504, 40
      %v584 = vpop.permute.xlu0 %583
      %585 = vrot.lane.b32.xlu0 %v505, 40
      %v586 = vpop.permute.xlu0 %585
      %587 = vrot.lane.b32.xlu0 %v506, 40
      %v588 = vpop.permute.xlu0 %587
      %589 = vrot.lane.b32.xlu0 %v507, 40
      %v590 = vpop.permute.xlu0 %589
      %591 = vrot.lane.b32.xlu0 %v576, 40
      %v592 = vpop.permute.xlu0 %591
      %v594 = vunpack.c.l.b16 %v386
      %v595 = vpack.c.b16 %v594, %v594
      %596 = vrot.lane.b32.xlu0 %v527, 48
      %v597 = vpop.permute.xlu0 %596
      %598 = vrot.lane.b32.xlu0 %v528, 48
      %v599 = vpop.permute.xlu0 %598
      %600 = vrot.lane.b32.xlu0 %v529, 48
      %v601 = vpop.permute.xlu0 %600
      %602 = vrot.lane.b32.xlu0 %v530, 48
      %v603 = vpop.permute.xlu0 %602
      %604 = vrot.lane.b32.xlu0 %v531, 48
      %v605 = vpop.permute.xlu0 %604
      %606 = vrot.lane.b32.xlu0 %v532, 48
      %v607 = vpop.permute.xlu0 %606
      %608 = vrot.lane.b32.xlu0 %v533, 48
      %v609 = vpop.permute.xlu0 %608
      %610 = vrot.lane.b32.xlu0 %v595, 48
      %v611 = vpop.permute.xlu0 %610
      %v613 = vunpack.c.l.b16 %v387
      %v614 = vpack.c.b16 %v613, %v594
      %v616 = vshrl.u32 %v614, 16
      %v618 = vshll.u32 %v614, 16
      %v620 = vrot.slane %v618, 1
      %v621 = vor.u32 %v616, %v620
      %622 = vrot.lane.b32.xlu0 %v448, 56
      %v623 = vpop.permute.xlu0 %622
      %624 = vrot.lane.b32.xlu0 %v455, 56
      %v625 = vpop.permute.xlu0 %624
      %626 = vrot.lane.b32.xlu0 %v462, 56
      %v627 = vpop.permute.xlu0 %626
      %628 = vrot.lane.b32.xlu0 %v469, 56
      %v629 = vpop.permute.xlu0 %628
      %630 = vrot.lane.b32.xlu0 %v476, 56
      %v631 = vpop.permute.xlu0 %630
      %632 = vrot.lane.b32.xlu0 %v483, 56
      %v633 = vpop.permute.xlu0 %632
      %634 = vrot.lane.b32.xlu0 %v559, 56
      %v635 = vpop.permute.xlu0 %634
      %636 = vrot.lane.b32.xlu0 %v621, 56
      %v637 = vpop.permute.xlu0 %636
      %v638 = vrot.slane %v614, 1
      %639 = vrot.lane.b32.xlu0 %v502, 64
      %v640 = vpop.permute.xlu0 %639
      %641 = vrot.lane.b32.xlu0 %v503, 64
      %v642 = vpop.permute.xlu0 %641
      %643 = vrot.lane.b32.xlu0 %v504, 64
      %v644 = vpop.permute.xlu0 %643
      %645 = vrot.lane.b32.xlu0 %v505, 64
      %v646 = vpop.permute.xlu0 %645
      %647 = vrot.lane.b32.xlu0 %v506, 64
      %v648 = vpop.permute.xlu0 %647
      %649 = vrot.lane.b32.xlu0 %v507, 64
      %v650 = vpop.permute.xlu0 %649
      %651 = vrot.lane.b32.xlu0 %v576, 64
      %v652 = vpop.permute.xlu0 %651
      %653 = vrot.lane.b32.xlu0 %v638, 64
      %v654 = vpop.permute.xlu0 %653
      %vm655 = vcmask 64512
      %v658 = vsel %vm655, %v368, %v485
      %v661 = vsel %vm655, %v370, %v487
      %v664 = vsel %vm655, %v372, %v489
      %v667 = vsel %vm655, %v374, %v491
      %v670 = vsel %vm655, %v376, %v493
      %v673 = vsel %vm655, %v378, %v495
      %v676 = vsel %vm655, %v380, %v497
      %v679 = vsel %vm655, %v382, %v499
      %vm680 = vcmask 130048
      %v682 = vsel %vm680, %v658, %v509
      %v684 = vsel %vm680, %v661, %v511
      %v686 = vsel %vm680, %v664, %v513
      %v688 = vsel %vm680, %v667, %v515
      %v690 = vsel %vm680, %v670, %v517
      %v692 = vsel %vm680, %v673, %v519
      %v694 = vsel %vm680, %v676, %v521
      %v696 = vsel %vm680, %v679, %v523
      %vm697 = vcmask 195584
      %v699 = vsel %vm697, %v682, %v535
      %v701 = vsel %vm697, %v684, %v537
      %v703 = vsel %vm697, %v686, %v539
      %v705 = vsel %vm697, %v688, %v541
      %v707 = vsel %vm697, %v690, %v543
      %v709 = vsel %vm697, %v692, %v545
      %v711 = vsel %vm697, %v694, %v547
      %v713 = vsel %vm697, %v696, %v549
      %vm714 = vcmask 261120
      %v716 = vsel %vm714, %v699, %v561
      %v718 = vsel %vm714, %v701, %v563
      %v720 = vsel %vm714, %v703, %v565
      %v722 = vsel %vm714, %v705, %v567
      %v724 = vsel %vm714, %v707, %v569
      %v726 = vsel %vm714, %v709, %v571
      %v728 = vsel %vm714, %v711, %v573
      %v730 = vsel %vm714, %v713, %v575
      %vm731 = vcmask 326656
      %v733 = vsel %vm731, %v716, %v578
      %v735 = vsel %vm731, %v718, %v580
      %v737 = vsel %vm731, %v720, %v582
      %v739 = vsel %vm731, %v722, %v584
      %v741 = vsel %vm731, %v724, %v586
      %v743 = vsel %vm731, %v726, %v588
      %v745 = vsel %vm731, %v728, %v590
      %v747 = vsel %vm731, %v730, %v592
      %vm748 = vcmask 392192
      %v750 = vsel %vm748, %v733, %v597
      %v752 = vsel %vm748, %v735, %v599
      %v754 = vsel %vm748, %v737, %v601
      %v756 = vsel %vm748, %v739, %v603
      %v758 = vsel %vm748, %v741, %v605
      %v760 = vsel %vm748, %v743, %v607
      %v762 = vsel %vm748, %v745, %v609
      %v764 = vsel %vm748, %v747, %v611
      %vm765 = vcmask 457728
      %v767 = vsel %vm765, %v750, %v623
      %v769 = vsel %vm765, %v752, %v625
      %v771 = vsel %vm765, %v754, %v627
      %v773 = vsel %vm765, %v756, %v629
      %v775 = vsel %vm765, %v758, %v631
      %v777 = vsel %vm765, %v760, %v633
      %v779 = vsel %vm765, %v762, %v635
      %v781 = vsel %vm765, %v764, %v637
      %vm782 = vcmask 523264
      %v784 = vsel %vm782, %v767, %v640
      %v786 = vsel %vm782, %v769, %v642
      %v788 = vsel %vm782, %v771, %v644
      %v790 = vsel %vm782, %v773, %v646
      %v792 = vsel %vm782, %v775, %v648
      %v794 = vsel %vm782, %v777, %v650
      %v796 = vsel %vm782, %v779, %v652
      %v798 = vsel %vm782, %v781, %v654
      %v799 = vld [vmem:[%s1] sm:$0xf]
      %v800 = vld [vmem:[%s1 + $0x4] sm:$0xf]
      %v801 = vld [vmem:[%s1 + $0x8] sm:$0xf]
      %v802 = vld [vmem:[%s1 + $0xc] sm:$0xf]
      %v803 = vld [vmem:[%s1 + $0x10] sm:$0xf]
      %v804 = vld [vmem:[%s1 + $0x14] sm:$0xf]
      %v805 = vld [vmem:[%s1 + $0x18] sm:$0xf]
      %v806 = vld [vmem:[%s1 + $0x1c] sm:$0xf]
      %v807 = vld [vmem:[%s1 + $0x20] sm:$0xf]
      %v808 = vld [vmem:[%s2] sm:$0x1]
      %v810 = vlaneseq
      %v811 = vshrl.u32 %v810, 7
      %v812 = vsub.s32 0, %v811
      %v813 = vrot.slane %v808, %v812
      %v823 = vunpack.c.l.b16 %v784
      %v824 = vunpack.c.l.b16 %v786
      %v825 = vunpack.c.l.b16 %v788
      %v826 = vunpack.c.l.b16 %v790
      %v827 = vunpack.c.l.b16 %v792
      %v828 = vunpack.c.l.b16 %v794
      %v829 = vunpack.c.l.b16 %v796
      %v830 = vunpack.c.l.b16 %v798
      %v831 = vpack.c.b16 %v824, %v823
      %v832 = vpack.c.b16 %v826, %v825
      %v833 = vpack.c.b16 %v828, %v827
      %v834 = vpack.c.b16 %v830, %v829
      %v844 = vunpack.c.l.b16 %v799
      %v845 = vunpack.c.l.b16 %v800
      %v846 = vunpack.c.l.b16 %v801
      %v847 = vunpack.c.l.b16 %v802
      %v848 = vunpack.c.l.b16 %v803
      %v849 = vunpack.c.l.b16 %v804
      %v850 = vunpack.c.l.b16 %v805
      %v851 = vunpack.c.l.b16 %v806
      %v852 = vunpack.c.l.b16 %v807
      %v853 = vpack.c.b16 %v845, %v844
      %v854 = vpack.c.b16 %v847, %v846
      %v855 = vpack.c.b16 %v849, %v848
      %v856 = vpack.c.b16 %v851, %v850
      %v857 = vpack.c.b16 %v852, %v852
      %vm862 = vcmask 588800
      %v864 = vsel %vm862, %v831, 0
      %v867 = vsel %vm862, %v832, 0
      %v870 = vsel %vm862, %v833, 0
      %v873 = vsel %vm862, %v834, 0
      %vm875 = vcmask 1043456
      %v877 = vsel %vm875, %v857, 0
      %879 = vmatprep.subr.bf16.mxu0 0
      %880 = vmatpush1.bf16.msra.mxu0 %v853
      %881 = vmatprep.subr.bf16.mxu0 0
      %882 = vmatpush1.bf16.msra.mxu0 %v854
      %883 = vmatprep.subr.bf16.mxu0 0
      %884 = vmatpush1.bf16.msra.mxu0 %v855
      %885 = vmatprep.subr.bf16.mxu0 0
      %886 = vmatpush1.bf16.msra.mxu0 %v856
      %887 = vmatprep.subr.bf16.mxu0 0
      %888 = vmatpush1.bf16.msra.mxu0 %v877
      %889 = vmatprep.subr.bf16.mxu0 0
      %890 = vmatpush1.bf16.msra.mxu0 0
      %891 = vmatprep.subr.bf16.mxu0 0
      %892 = vmatpush1.bf16.msra.mxu0 0
      %893 = vmatprep.subr.bf16.mxu0 0
      %894 = vmatpush1.bf16.msra.mxu0 0
      %895 = vmatprep.subr.bf16.mxu0 0
      %896 = vmatpush1.bf16.msra.mxu0 0
      %897 = vmatprep.subr.bf16.mxu0 0
      %898 = vmatpush1.bf16.msra.mxu0 0
      %899 = vmatprep.subr.bf16.mxu0 0
      %900 = vmatpush1.bf16.msra.mxu0 0
      %901 = vmatprep.subr.bf16.mxu0 0
      %902 = vmatpush1.bf16.msra.mxu0 0
      %903 = vmatprep.subr.bf16.mxu0 0
      %904 = vmatpush1.bf16.msra.mxu0 0
      %905 = vmatprep.subr.bf16.mxu0 0
      %906 = vmatpush1.bf16.msra.mxu0 0
      %907 = vmatprep.subr.bf16.mxu0 0
      %908 = vmatpush1.bf16.msra.mxu0 0
      %909 = vmatprep.subr.bf16.mxu0 0
      %910 = vmatpush1.bf16.msra.mxu0 0
      %911 = vmatprep.mubr.bf16.mxu0 0
      %912 = vmatmul.mubr.bf16.gmra.mrb[0].mxu0 %v864
      %v913 = vpop.f32.mrb[0].mxu0
      %v914 = vadd.f32 %v813, %v913
      %v915 = vpop.f32.mrb[0].mxu0
      %v916 = vpop.f32.mrb[0].mxu0
      %v917 = vadd.f32 %v813, %v916
      %v918 = vpop.f32.mrb[0].mxu0
      %919 = vmatprep.mubr.bf16.mxu0 0
      %920 = vmatmul.mubr.bf16.gmra.mrb[0].mxu0 %v867
      %v921 = vpop.f32.mrb[0].mxu0
      %v922 = vadd.f32 %v813, %v921
      %v923 = vpop.f32.mrb[0].mxu0
      %v924 = vpop.f32.mrb[0].mxu0
      %v925 = vadd.f32 %v813, %v924
      %v926 = vpop.f32.mrb[0].mxu0
      %927 = vmatprep.mubr.bf16.mxu0 0
      %928 = vmatmul.mubr.bf16.gmra.mrb[0].mxu0 %v870
      %v929 = vpop.f32.mrb[0].mxu0
      %v930 = vadd.f32 %v813, %v929
      %v931 = vpop.f32.mrb[0].mxu0
      %v932 = vpop.f32.mrb[0].mxu0
      %v933 = vadd.f32 %v813, %v932
      %v934 = vpop.f32.mrb[0].mxu0
      %935 = vmatprep.mubr.bf16.mxu0 0
      %936 = vmatmul.mubr.bf16.gmra.mrb[0].mxu0 %v873
      %v937 = vpop.f32.mrb[0].mxu0
      %v938 = vadd.f32 %v813, %v937
      %v939 = vpop.f32.mrb[0].mxu0
      %v940 = vpop.f32.mrb[0].mxu0
      %v941 = vadd.f32 %v813, %v940
      %v942 = vpop.f32.mrb[0].mxu0
      %943 = vdwg.mxu0
      %vm944 = vcmp.gt.f32.partialorder %v914, 0.0
      %vm945 = vcmp.gt.f32.partialorder %v917, 0.0
      %vm946 = vcmp.gt.f32.partialorder %v922, 0.0
      %vm947 = vcmp.gt.f32.partialorder %v925, 0.0
      %vm948 = vcmp.gt.f32.partialorder %v930, 0.0
      %vm949 = vcmp.gt.f32.partialorder %v933, 0.0
      %vm950 = vcmp.gt.f32.partialorder %v938, 0.0
      %vm951 = vcmp.gt.f32.partialorder %v941, 0.0
      %v952 = vmul.f32 %v914, 0.2
      %v953 = vmul.f32 %v917, 0.2
      %v954 = vmul.f32 %v922, 0.2
      %v955 = vmul.f32 %v925, 0.2
      %v956 = vmul.f32 %v930, 0.2
      %v957 = vmul.f32 %v933, 0.2
      %v958 = vmul.f32 %v938, 0.2
      %v959 = vmul.f32 %v941, 0.2
      %v960 = vsel %vm944, %v914, %v952
      %v961 = vsel %vm945, %v917, %v953
      %v962 = vsel %vm946, %v922, %v954
      %v963 = vsel %vm947, %v925, %v955
      %v964 = vsel %vm948, %v930, %v956
      %v965 = vsel %vm949, %v933, %v957
      %v966 = vsel %vm950, %v938, %v958
      %v967 = vsel %vm951, %v941, %v959
      %v968 = vpack.c.bf16 %v960, %v960
      %v969 = vpack.c.bf16 %v961, %v961
      %v970 = vpack.c.bf16 %v962, %v962
      %v971 = vpack.c.bf16 %v963, %v963
      %v972 = vpack.c.bf16 %v964, %v964
      %v973 = vpack.c.bf16 %v965, %v965
      %v974 = vpack.c.bf16 %v966, %v966
      %v975 = vpack.c.bf16 %v967, %v967
      %vm976 = vcmask 60416
      %977 = vst.msk [vmem:[%s192] sm:$0xf] %vm976, %v968
      %978 = vst.msk [vmem:[%s192 + $0x4] sm:$0xf] %vm976, %v969
      %979 = vst.msk [vmem:[%s192 + $0x8] sm:$0xf] %vm976, %v970
      %980 = vst.msk [vmem:[%s192 + $0xc] sm:$0xf] %vm976, %v971
      %981 = vst.msk [vmem:[%s192 + $0x10] sm:$0xf] %vm976, %v972
      %982 = vst.msk [vmem:[%s192 + $0x14] sm:$0xf] %vm976, %v973
      %983 = vst.msk [vmem:[%s192 + $0x18] sm:$0xf] %vm976, %v974
      %984 = vst.msk [vmem:[%s192 + $0x1c] sm:$0xf] %vm976, %v975
      %s985 = smul.u32 8, %s19
      %p986 = scmp.lt.s32.totalorder %s18, 1
      %s987 = scalar_select %p986, %s18, 1
      %p988 = scmp.lt.s32.totalorder %s985, 7
      %s989 = scalar_select %p988, %s985, 7
      %s990 = smul.addr %s987, 8
      %s991 = sadd.s32 %s989, %s990
      %s992 = smul.addr %s991, 4
      %s993 = scalar_lea.vmem %s3, %s992
      // Predicated region
      $region37: #{generator_forward.9} parent=31 // pred_check
        %p994 = pneg %p114
      $region38: #{generator_forward.9} parent=31 // pred_check_branch
        %996 = sbr.rel (%p994) target = $region40
      $region39: #{generator_forward.9} parent=31 // pred_region
        %s997 = smul.u32 8, %s19
      $region40: #{generator_forward.9} parent=31 // pred_fallthru
        _
    $region32: #{generator_forward.9} parent=5 // pred_fallthru
      _
    %p998 = scmp.le.s32.totalorder 2, %s9
    // Predicated region
    $region41: #{generator_forward.9} parent=5 // pred_check
      %p999 = pneg %p998
    $region42: #{generator_forward.9} parent=5 // pred_check_branch
      %1001 = sbr.rel (%p999) target = $region44
    $region43: #{generator_forward.9} parent=5 // pred_region
      %s1002 = ssub.s32 %s9, 2
      // Predicated region
      $region45: #{generator_forward.9} parent=43 // pred_check
        %p1003 = pneg %p120
      $region46: #{generator_forward.9} parent=43 // pred_check_branch
        %1005 = sbr.rel (%p1003) target = $region48
      $region47: #{generator_forward.9} parent=43 // pred_region
        %s1006 = smul.u32 8, %s21
        %p1007 = scmp.lt.s32.totalorder %s20, 1
        %s1008 = scalar_select %p1007, %s20, 1
        %p1009 = scmp.lt.s32.totalorder %s1006, 7
        %s1010 = scalar_select %p1009, %s1006, 7
        %s1011 = smul.addr %s1008, 8
        %s1012 = sadd.s32 %s1010, %s1011
        %s1013 = smul.addr %s1012, 4
        %s1014 = scalar_lea.vmem %s3, %s1013
      $region48: #{generator_forward.9} parent=43 // pred_fallthru
        _
    $region44: #{generator_forward.9} parent=5 // pred_fallthru
      _
  $region6: #{generator_forward.9} parent=0 // loop_footer
    %s13 = sadd.s32 1, %s9
  $region7: #{generator_forward.9} parent=0 // loop_footer_branch
    %8 = sbr.rel target = $region3
  $region8: #{generator_forward.9} parent=0 // loop_exit
    _

// kernel: generator_forward.11
$region0: #{generator_forward.11}
  #allocation0 [shape = 'u32[]', space=smem, size = 0x4, offset = 0x4, fixed_abs, tag = 'smem constant byte address 0x4 - core index']
  #allocation1 [shape = 'u32[144,128]{1,0:T(1,128)}', space=vmem, size = 0x12000, scoped, tag = 'internal scratch']
  %s0 = inlined_call_operand.vmem [shape: bf16[2,10,18,8], index: 0, kind: input, shape index: {}]
  %s1 = inlined_call_operand.vmem [shape: bf16[72,4], index: 1, kind: input, shape index: {}]
  %s2 = inlined_call_operand.vmem [shape: f32[1,4], index: 2, kind: input, shape index: {}]
  %s3 = inlined_call_operand.vmem [shape: bf16[2,16,16,4], index: 3, kind: output, shape index: {}]
  %s4 = sld [smem:[#allocation0]]
  $region45: #{generator_forward.11} parent=0
    _
  %s6 = ssub.s32 1, %s4
  %s7 = scalar_select 0, %s6, %s4
  loop: start=0, step=1, limit=6
  $region2: #{generator_forward.11} parent=0 // loop_pre_header
    _
  $region3: #{generator_forward.11} parent=0 // loop_header
    %s9 = sphi 0, %s13
    %p10 = scmp.ge.s32.totalorder %s9, 6
    %s16 = sphi 0, %s28
    %s17 = sphi 0, %s24
    %s18 = sphi 0, %s16
    %s19 = sphi 0, %s17
    %s20 = sphi 0, %s18
    %s21 = sphi 0, %s19
    %s31 = sphi 0, %s33
    %s34 = sphi 0, %s31
    %s35 = sphi 0, %s34
    %s51 = sphi 0, %s35
    %s55 = sphi 0, %s55
    %s57 = sphi 0, %s55
    %s58 = sphi 0, %s57
    %s72 = sphi 0, %s58
    %s76 = sphi 0, %s76
    %s78 = sphi 0, %s76
    %s79 = sphi 0, %s78
    %s93 = sphi 0, %s79
    %s101 = sphi 0, %s103
    %s104 = sphi 0, %s101
    %s105 = sphi 0, %s104
    %s121 = sphi 0, %s105
  $region4: #{generator_forward.11} parent=0 // loop_header_branch
    %12 = sbr.rel (%p10) target = $region8
  $region5: #{generator_forward.11} parent=0 // loop_body
    %s14 = ssub.s32 %s9, 1
    %s15 = ssub.s32 %s9, 2
    %s22 = sadd.s32 1, %s17
    %p23 = scmp.ge.s32.totalorder %s22, 2
    %s24 = scalar_select %p23, 0, %s22
    %s25 = sadd.s32 1, %s16
    %s26 = scalar_select %p23, %s25, %s16
    %p27 = scmp.ge.s32.totalorder %s26, 2
    %s28 = scalar_select %p27, 0, %s26
    %s29 = ssub.s32 %s16, %s28
    %p30 = scmp.eq.s32.totalorder %s29, 0
    %s32 = sadd.s32 %s31, 1
    %s33 = scalar_select %p30, %s31, %s32
    %p36 = pneg %p30
    %p37 = scmp.eq.s32.totalorder %s9, 3
    %p38 = por %p36, %p37
    %p39 = scmp.ne.s32.totalorder %s31, %s34
    %p40 = scmp.eq.s32.totalorder %s9, 0
    %p41 = por %p39, %p40
    %p42 = scmp.ne.s32.totalorder %s31, %s34
    %p43 = scmp.eq.s32.totalorder %s14, 3
    %p44 = por %p42, %p43
    %p45 = scmp.ne.s32.totalorder %s34, %s35
    %p46 = scmp.eq.s32.totalorder %s14, 0
    %p47 = por %p45, %p46
    %p48 = scmp.ne.s32.totalorder %s34, %s35
    %p49 = scmp.eq.s32.totalorder %s15, 3
    %p50 = por %p48, %p49
    %p52 = scmp.ne.s32.totalorder %s35, %s51
    %p53 = scmp.eq.s32.totalorder %s15, 0
    %p54 = por %p52, %p53
    %s56 = sadd.s32 %s55, 1
    %p59 = scmp.eq.s32.totalorder %s9, 3
    %p60 = scmp.ne.s32.totalorder %s55, %s57
    %p61 = scmp.eq.s32.totalorder %s9, 0
    %p62 = por %p60, %p61
    %p63 = scmp.ne.s32.totalorder %s55, %s57
    %p64 = scmp.eq.s32.totalorder %s14, 3
    %p65 = por %p63, %p64
    %p66 = scmp.ne.s32.totalorder %s57, %s58
    %p67 = scmp.eq.s32.totalorder %s14, 0
    %p68 = por %p66, %p67
    %p69 = scmp.ne.s32.totalorder %s57, %s58
    %p70 = scmp.eq.s32.totalorder %s15, 3
    %p71 = por %p69, %p70
    %p73 = scmp.ne.s32.totalorder %s58, %s72
    %p74 = scmp.eq.s32.totalorder %s15, 0
    %p75 = por %p73, %p74
    %s77 = sadd.s32 %s76, 1
    %p80 = scmp.eq.s32.totalorder %s9, 3
    %p81 = scmp.ne.s32.totalorder %s76, %s78
    %p82 = scmp.eq.s32.totalorder %s9, 0
    %p83 = por %p81, %p82
    %p84 = scmp.ne.s32.totalorder %s76, %s78
    %p85 = scmp.eq.s32.totalorder %s14, 3
    %p86 = por %p84, %p85
    %p87 = scmp.ne.s32.totalorder %s78, %s79
    %p88 = scmp.eq.s32.totalorder %s14, 0
    %p89 = por %p87, %p88
    %p90 = scmp.ne.s32.totalorder %s78, %s79
    %p91 = scmp.eq.s32.totalorder %s15, 3
    %p92 = por %p90, %p91
    %p94 = scmp.ne.s32.totalorder %s79, %s93
    %p95 = scmp.eq.s32.totalorder %s15, 0
    %p96 = por %p94, %p95
    %s97 = ssub.s32 %s16, %s28
    %s98 = ssub.s32 %s17, %s24
    %s99 = sor.u32 %s97, %s98
    %p100 = scmp.eq.s32.totalorder %s99, 0
    %s102 = sadd.s32 %s101, 1
    %s103 = scalar_select %p100, %s101, %s102
    %p106 = pneg %p100
    %p107 = scmp.eq.s32.totalorder %s9, 3
    %p108 = por %p106, %p107
    %p109 = scmp.ne.s32.totalorder %s101, %s104
    %p110 = scmp.eq.s32.totalorder %s9, 0
    %p111 = por %p109, %p110
    %p112 = scmp.ne.s32.totalorder %s101, %s104
    %p113 = scmp.eq.s32.totalorder %s14, 3
    %p114 = por %p112, %p113
    %p115 = scmp.ne.s32.totalorder %s104, %s105
    %p116 = scmp.eq.s32.totalorder %s14, 0
    %p117 = por %p115, %p116
    %p118 = scmp.ne.s32.totalorder %s104, %s105
    %p119 = scmp.eq.s32.totalorder %s15, 3
    %p120 = por %p118, %p119
    %p122 = scmp.ne.s32.totalorder %s105, %s121
    %p123 = scmp.eq.s32.totalorder %s15, 0
    %p124 = por %p122, %p123
    %p125 = scmp.le.s32.totalorder 1, %s9
    %p126 = scmp.lt.s32.totalorder %s9, 5
    %p127 = pnand %p125, %p126
    %p128 = pneg %p127
    // Predicated region
    $region9: #{generator_forward.11} parent=5 // pred_check
      _
    $region10: #{generator_forward.11} parent=5 // pred_check_branch
      %130 = sbr.rel (%p127) target = $region12
    $region11: #{generator_forward.11} parent=5 // pred_region
      %s131 = ssub.s32 %s9, 1
      // Predicated region
      $region13: #{generator_forward.11} parent=11 // pred_check
        %p132 = pneg %p68
      $region14: #{generator_forward.11} parent=11 // pred_check_branch
        %134 = sbr.rel (%p132) target = $region16
      $region15: #{generator_forward.11} parent=11 // pred_region
        _
      $region16: #{generator_forward.11} parent=11 // pred_fallthru
        _
      // Predicated region
      $region17: #{generator_forward.11} parent=11 // pred_check
        %p135 = pneg %p89
      $region18: #{generator_forward.11} parent=11 // pred_check_branch
        %137 = sbr.rel (%p135) target = $region20
      $region19: #{generator_forward.11} parent=11 // pred_region
        _
      $region20: #{generator_forward.11} parent=11 // pred_fallthru
        _
    $region12: #{generator_forward.11} parent=5 // pred_fallthru
      _
    %p138 = scmp.lt.s32.totalorder %s9, 4
    // Predicated region
    $region21: #{generator_forward.11} parent=5 // pred_check
      %p139 = pneg %p138
    $region22: #{generator_forward.11} parent=5 // pred_check_branch
      %141 = sbr.rel (%p139) target = $region24
    $region23: #{generator_forward.11} parent=5 // pred_region
      // Predicated region
      $region25: #{generator_forward.11} parent=23 // pred_check
        %p142 = pneg %p41
      $region26: #{generator_forward.11} parent=23 // pred_check_branch
        %144 = sbr.rel (%p142) target = $region28
      $region27: #{generator_forward.11} parent=23 // pred_region
        %p145 = scmp.lt.s32.totalorder %s16, 1
        %s146 = scalar_select %p145, %s16, 1
        %s147 = smul.addr %s146, 30
        %s148 = smul.addr %s147, 4
        %s149 = scalar_lea.vmem %s0, %s148
      $region28: #{generator_forward.11} parent=23 // pred_fallthru
        _
    $region24: #{generator_forward.11} parent=5 // pred_fallthru
      _
    %p150 = scmp.le.s32.totalorder 1, %s9
    %p151 = scmp.lt.s32.totalorder %s9, 5
    %p152 = pnand %p150, %p151
    %p153 = pneg %p152
    // Predicated region
    $region29: #{generator_forward.11} parent=5 // pred_check
      _
    $region30: #{generator_forward.11} parent=5 // pred_check_branch
      %155 = sbr.rel (%p152) target = $region32
    $region31: #{generator_forward.11} parent=5 // pred_region
      %s156 = ssub.s32 %s9, 1
      %p157 = scmp.lt.s32.totalorder %s18, 1
      %s158 = scalar_select %p157, %s18, 1
      %s159 = smul.addr %s158, 30
      %s160 = smul.addr %s159, 4
      %s161 = scalar_lea.vmem %s0, %s160
      %p162 = pneg %p47
      %p163 = pneg %p44
      %p164 = pneg %p68
      %p165 = pneg %p65
      %p166 = pneg %p89
      %p167 = pneg %p86
      %p168 = pneg %p117
      %p169 = pneg %p114
      %s170 = smul.u32 8, %s19
      %p171 = scmp.lt.s32.totalorder %s18, 1
      %s172 = scalar_select %p171, %s18, 1
      %p173 = scmp.lt.s32.totalorder %s170, 15
      %s174 = scalar_select %p173, %s170, 15
      %s175 = smul.addr %s174, 2
      %s176 = smul.addr %s172, 32
      %s177 = sadd.s32 %s175, %s176
      %s178 = smul.addr %s177, 4
      %s179 = scalar_lea.vmem %s3, %s178
      %p180 = scmp.lt.s32.totalorder %s18, 1
      %s181 = scalar_select %p180, %s18, 1
      %s182 = smul.addr %s181, 30
      %s183 = smul.addr %s182, 4
      %s184 = scalar_lea.vmem %s0, %s183
      %s185 = smul.u32 8, %s19
      %p186 = scmp.lt.s32.totalorder %s18, 1
      %s187 = scalar_select %p186, %s18, 1
      %p188 = scmp.lt.s32.totalorder %s185, 15
      %s189 = scalar_select %p188, %s185, 15
      %s190 = smul.addr %s189, 2
      %s191 = smul.addr %s187, 32
      %s192 = sadd.s32 %s190, %s191
      %s193 = smul.addr %s192, 4
      %s194 = scalar_lea.vmem %s3, %s193
      %s195 = smul.u32 8, %s19
      %s197 = smul.u32 %s19, 4
      %s198 = smul.u32 %s197, 3
      %s199 = smul.addr %s198, 4
      %s200 = scalar_lea.vmem %s184, %s199
      %v201 = vld [vmem:[%s200] sm:$0xf]
      %v202 = vld [vmem:[%s200 + $0x4] sm:$0xf]
      %v203 = vld [vmem:[%s200 + $0x8] sm:$0x1]
      %v204 = vld [vmem:[%s200 + $0xc] sm:$0xf]
      %v205 = vld [vmem:[%s200 + $0x10] sm:$0xf]
      %v206 = vld [vmem:[%s200 + $0x14] sm:$0x1]
      %v207 = vld [vmem:[%s200 + $0x18] sm:$0xf]
      %v208 = vld [vmem:[%s200 + $0x1c] sm:$0xf]
      %v209 = vld [vmem:[%s200 + $0x20] sm:$0x1]
      %v210 = vld [vmem:[%s200 + $0x24] sm:$0xf]
      %v211 = vld [vmem:[%s200 + $0x28] sm:$0xf]
      %v212 = vld [vmem:[%s200 + $0x2c] sm:$0x1]
      %v213 = vld [vmem:[%s200 + $0x30] sm:$0xf]
      %v214 = vld [vmem:[%s200 + $0x34] sm:$0xf]
      %v215 = vld [vmem:[%s200 + $0x38] sm:$0x1]
      %v216 = vld [vmem:[%s200 + $0x3c] sm:$0xf]
      %v217 = vld [vmem:[%s200 + $0x40] sm:$0xf]
      %v218 = vld [vmem:[%s200 + $0x44] sm:$0x1]
      %v229 = vunpack.c.l.b16 %v201
      %v230 = vunpack.c.l.b16 %v202
      %v231 = vunpack.c.l.b16 %v204
      %v232 = vunpack.c.l.b16 %v205
      %v233 = vunpack.c.l.b16 %v207
      %v234 = vunpack.c.l.b16 %v208
      %v235 = vunpack.c.l.b16 %v210
      %v236 = vunpack.c.l.b16 %v211
      %v237 = vunpack.c.l.b16 %v213
      %v238 = vunpack.c.l.b16 %v214
      %v239 = vpack.c.b16 %v230, %v229
      %v240 = vpack.c.b16 %v232, %v231
      %v241 = vpack.c.b16 %v234, %v233
      %v242 = vpack.c.b16 %v236, %v235
      %v243 = vpack.c.b16 %v238, %v237
      %v249 = vunpack.c.l.b16 %v203
      %v250 = vunpack.c.l.b16 %v206
      %v251 = vunpack.c.l.b16 %v209
      %v252 = vunpack.c.l.b16 %v212
      %v253 = vunpack.c.l.b16 %v215
      %v254 = vpack.c.b16 %v249, %v249
      %v255 = vpack.c.b16 %v250, %v250
      %v256 = vpack.c.b16 %v251, %v251
      %v257 = vpack.c.b16 %v252, %v252
      %v258 = vpack.c.b16 %v253, %v253
      %vm259 = vsmask.f32 7424
      %v261 = vshrl.u32 %v239, 16
      %v263 = vshll.u32 %v239, 16
      %v265 = vrot.slane %v263, 1
      %v266 = vor.u32 %v261, %v265
      %v268 = vshll.u32 %v254, 16
      %v270 = vrot.slane %v268, 1
      %v271 = vsel %vm259, %v266, %v270
      %v273 = vshrl.u32 %v240, 16
      %v275 = vshll.u32 %v240, 16
      %v277 = vrot.slane %v275, 1
      %v278 = vor.u32 %v273, %v277
      %v280 = vshll.u32 %v255, 16
      %v282 = vrot.slane %v280, 1
      %v283 = vsel %vm259, %v278, %v282
      %v285 = vshrl.u32 %v241, 16
      %v287 = vshll.u32 %v241, 16
      %v289 = vrot.slane %v287, 1
      %v290 = vor.u32 %v285, %v289
      %v292 = vshll.u32 %v256, 16
      %v294 = vrot.slane %v292, 1
      %v295 = vsel %vm259, %v290, %v294
      %v297 = vshrl.u32 %v242, 16
      %v299 = vshll.u32 %v242, 16
      %v301 = vrot.slane %v299, 1
      %v302 = vor.u32 %v297, %v301
      %v304 = vshll.u32 %v257, 16
      %v306 = vrot.slane %v304, 1
      %v307 = vsel %vm259, %v302, %v306
      %v309 = vshrl.u32 %v243, 16
      %v311 = vshll.u32 %v243, 16
      %v313 = vrot.slane %v311, 1
      %v314 = vor.u32 %v309, %v313
      %v316 = vshll.u32 %v258, 16
      %v318 = vrot.slane %v316, 1
      %v319 = vsel %vm259, %v314, %v318
      %320 = vrot.lane.b32.xlu0 %v271, 8
      %v321 = vpop.permute.xlu0 %320
      %322 = vrot.lane.b32.xlu0 %v283, 8
      %v323 = vpop.permute.xlu0 %322
      %324 = vrot.lane.b32.xlu0 %v295, 8
      %v325 = vpop.permute.xlu0 %324
      %326 = vrot.lane.b32.xlu0 %v307, 8
      %v327 = vpop.permute.xlu0 %326
      %328 = vrot.lane.b32.xlu0 %v319, 8
      %v329 = vpop.permute.xlu0 %328
      %vm330 = vcmask 1046528
      %v331 = vrot.slane %v239, 1
      %v332 = vrot.slane %v254, 1
      %v333 = vsel %vm330, %v331, %v332
      %v334 = vrot.slane %v240, 1
      %v335 = vrot.slane %v255, 1
      %v336 = vsel %vm330, %v334, %v335
      %v337 = vrot.slane %v241, 1
      %v338 = vrot.slane %v256, 1
      %v339 = vsel %vm330, %v337, %v338
      %v340 = vrot.slane %v242, 1
      %v341 = vrot.slane %v257, 1
      %v342 = vsel %vm330, %v340, %v341
      %v343 = vrot.slane %v243, 1
      %v344 = vrot.slane %v258, 1
      %v345 = vsel %vm330, %v343, %v344
      %346 = vrot.lane.b32.xlu0 %v333, 16
      %v347 = vpop.permute.xlu0 %346
      %348 = vrot.lane.b32.xlu0 %v336, 16
      %v349 = vpop.permute.xlu0 %348
      %350 = vrot.lane.b32.xlu0 %v339, 16
      %v351 = vpop.permute.xlu0 %350
      %352 = vrot.lane.b32.xlu0 %v342, 16
      %v353 = vpop.permute.xlu0 %352
      %354 = vrot.lane.b32.xlu0 %v345, 16
      %v355 = vpop.permute.xlu0 %354
      %356 = vrot.lane.b32.xlu0 %v240, 24
      %v357 = vpop.permute.xlu0 %356
      %358 = vrot.lane.b32.xlu0 %v241, 24
      %v359 = vpop.permute.xlu0 %358
      %360 = vrot.lane.b32.xlu0 %v242, 24
      %v361 = vpop.permute.xlu0 %360
      %362 = vrot.lane.b32.xlu0 %v243, 24
      %v363 = vpop.permute.xlu0 %362
      %364 = vrot.lane.b32.xlu0 %v283, 32
      %v365 = vpop.permute.xlu0 %364
      %366 = vrot.lane.b32.xlu0 %v295, 32
      %v367 = vpop.permute.xlu0 %366
      %368 = vrot.lane.b32.xlu0 %v307, 32
      %v369 = vpop.permute.xlu0 %368
      %370 = vrot.lane.b32.xlu0 %v319, 32
      %v371 = vpop.permute.xlu0 %370
      %372 = vrot.lane.b32.xlu0 %v336, 40
      %v373 = vpop.permute.xlu0 %372
      %374 = vrot.lane.b32.xlu0 %v339, 40
      %v375 = vpop.permute.xlu0 %374
      %376 = vrot.lane.b32.xlu0 %v342, 40
      %v377 = vpop.permute.xlu0 %376
      %378 = vrot.lane.b32.xlu0 %v345, 40
      %v379 = vpop.permute.xlu0 %378
      %v382 = vunpack.c.l.b16 %v216
      %v383 = vunpack.c.l.b16 %v217
      %v384 = vpack.c.b16 %v383, %v382
      %385 = vrot.lane.b32.xlu0 %v240, 48
      %v386 = vpop.permute.xlu0 %385
      %387 = vrot.lane.b32.xlu0 %v241, 48
      %v388 = vpop.permute.xlu0 %387
      %389 = vrot.lane.b32.xlu0 %v242, 48
      %v390 = vpop.permute.xlu0 %389
      %391 = vrot.lane.b32.xlu0 %v243, 48
      %v392 = vpop.permute.xlu0 %391
      %393 = vrot.lane.b32.xlu0 %v384, 48
      %v394 = vpop.permute.xlu0 %393
      %v396 = vunpack.c.l.b16 %v218
      %v397 = vpack.c.b16 %v396, %v396
      %v399 = vshrl.u32 %v384, 16
      %v401 = vshll.u32 %v384, 16
      %v403 = vrot.slane %v401, 1
      %v404 = vor.u32 %v399, %v403
      %v406 = vshll.u32 %v397, 16
      %v408 = vrot.slane %v406, 1
      %v409 = vsel %vm259, %v404, %v408
      %410 = vrot.lane.b32.xlu0 %v283, 56
      %v411 = vpop.permute.xlu0 %410
      %412 = vrot.lane.b32.xlu0 %v295, 56
      %v413 = vpop.permute.xlu0 %412
      %414 = vrot.lane.b32.xlu0 %v307, 56
      %v415 = vpop.permute.xlu0 %414
      %416 = vrot.lane.b32.xlu0 %v319, 56
      %v417 = vpop.permute.xlu0 %416
      %418 = vrot.lane.b32.xlu0 %v409, 56
      %v419 = vpop.permute.xlu0 %418
      %v420 = vrot.slane %v384, 1
      %v421 = vrot.slane %v397, 1
      %v422 = vsel %vm330, %v420, %v421
      %423 = vrot.lane.b32.xlu0 %v336, 64
      %v424 = vpop.permute.xlu0 %423
      %425 = vrot.lane.b32.xlu0 %v339, 64
      %v426 = vpop.permute.xlu0 %425
      %427 = vrot.lane.b32.xlu0 %v342, 64
      %v428 = vpop.permute.xlu0 %427
      %429 = vrot.lane.b32.xlu0 %v345, 64
      %v430 = vpop.permute.xlu0 %429
      %431 = vrot.lane.b32.xlu0 %v422, 64
      %v432 = vpop.permute.xlu0 %431
      %vm433 = vcmask 64512
      %v435 = vsel %vm433, %v239, %v321
      %v437 = vsel %vm433, %v240, %v323
      %v439 = vsel %vm433, %v241, %v325
      %v441 = vsel %vm433, %v242, %v327
      %v443 = vsel %vm433, %v243, %v329
      %vm444 = vcmask 130048
      %v446 = vsel %vm444, %v435, %v347
      %v448 = vsel %vm444, %v437, %v349
      %v450 = vsel %vm444, %v439, %v351
      %v452 = vsel %vm444, %v441, %v353
      %v454 = vsel %vm444, %v443, %v355
      %vm455 = vcmask 195584
      %v457 = vsel %vm455, %v446, %v357
      %v458 = vsel %vm455, %v448, %v357
      %v460 = vsel %vm455, %v448, %v359
      %v461 = vsel %vm455, %v450, %v359
      %v463 = vsel %vm455, %v450, %v361
      %v464 = vsel %vm455, %v452, %v361
      %v466 = vsel %vm455, %v452, %v363
      %v467 = vsel %vm455, %v454, %v363
      %vm468 = vcmask 261120
      %v470 = vsel %vm468, %v457, %v365
      %v471 = vsel %vm468, %v458, %v365
      %v473 = vsel %vm468, %v460, %v367
      %v474 = vsel %vm468, %v461, %v367
      %v476 = vsel %vm468, %v463, %v369
      %v477 = vsel %vm468, %v464, %v369
      %v479 = vsel %vm468, %v466, %v371
      %v480 = vsel %vm468, %v467, %v371
      %vm481 = vcmask 326656
      %v483 = vsel %vm481, %v470, %v373
      %v484 = vsel %vm481, %v471, %v373
      %v486 = vsel %vm481, %v473, %v375
      %v487 = vsel %vm481, %v474, %v375
      %v489 = vsel %vm481, %v476, %v377
      %v490 = vsel %vm481, %v477, %v377
      %v492 = vsel %vm481, %v479, %v379
      %v493 = vsel %vm481, %v480, %v379
      %vm494 = vcmask 392192
      %v496 = vsel %vm494, %v483, %v386
      %v498 = vsel %vm494, %v484, %v388
      %v499 = vsel %vm494, %v486, %v388
      %v501 = vsel %vm494, %v487, %v390
      %v502 = vsel %vm494, %v489, %v390
      %v504 = vsel %vm494, %v490, %v392
      %v505 = vsel %vm494, %v492, %v392
      %v507 = vsel %vm494, %v493, %v394
      %vm508 = vcmask 457728
      %v510 = vsel %vm508, %v496, %v411
      %v512 = vsel %vm508, %v498, %v413
      %v513 = vsel %vm508, %v499, %v413
      %v515 = vsel %vm508, %v501, %v415
      %v516 = vsel %vm508, %v502, %v415
      %v518 = vsel %vm508, %v504, %v417
      %v519 = vsel %vm508, %v505, %v417
      %v521 = vsel %vm508, %v507, %v419
      %vm522 = vcmask 523264
      %v524 = vsel %vm522, %v510, %v424
      %v526 = vsel %vm522, %v512, %v426
      %v527 = vsel %vm522, %v513, %v426
      %v529 = vsel %vm522, %v515, %v428
      %v530 = vsel %vm522, %v516, %v428
      %v532 = vsel %vm522, %v518, %v430
      %v533 = vsel %vm522, %v519, %v430
      %v535 = vsel %vm522, %v521, %v432
      %v536 = vld [vmem:[%s1] sm:$0xf]
      %v537 = vld [vmem:[%s1 + $0x4] sm:$0xf]
      %v538 = vld [vmem:[%s1 + $0x8] sm:$0xf]
      %v539 = vld [vmem:[%s1 + $0xc] sm:$0xf]
      %v540 = vld [vmem:[%s1 + $0x10] sm:$0xf]
      %v541 = vld [vmem:[%s1 + $0x14] sm:$0xf]
      %v542 = vld [vmem:[%s1 + $0x18] sm:$0xf]
      %v543 = vld [vmem:[%s1 + $0x1c] sm:$0xf]
      %v544 = vld [vmem:[%s1 + $0x20] sm:$0xf]
      %v545 = vld [vmem:[%s2] sm:$0x1]
      %v547 = vlaneseq
      %v548 = vshrl.u32 %v547, 7
      %v549 = vsub.s32 0, %v548
      %v550 = vrot.slane %v545, %v549
      %v561 = vunpack.c.l.b16 %v536
      %v562 = vunpack.c.l.b16 %v537
      %v563 = vunpack.c.l.b16 %v538
      %v564 = vunpack.c.l.b16 %v539
      %v565 = vunpack.c.l.b16 %v540
      %v566 = vunpack.c.l.b16 %v541
      %v567 = vunpack.c.l.b16 %v542
      %v568 = vunpack.c.l.b16 %v543
      %v569 = vunpack.c.l.b16 %v544
      %v570 = vpack.c.b16 %v562, %v561
      %v571 = vpack.c.b16 %v564, %v563
      %v572 = vpack.c.b16 %v566, %v565
      %v573 = vpack.c.b16 %v568, %v567
      %v574 = vpack.c.b16 %v569, %v569
      %vm579 = vcmask 588800
      %v580 = vsel %vm579, %v524, 0
      %v582 = vsel %vm579, %v526, 0
      %v584 = vsel %vm579, %v527, 0
      %v586 = vsel %vm579, %v529, 0
      %v588 = vsel %vm579, %v530, 0
      %v590 = vsel %vm579, %v532, 0
      %v592 = vsel %vm579, %v533, 0
      %v594 = vsel %vm579, %v535, 0
      %vm596 = vcmask 1043456
      %v598 = vsel %vm596, %v574, 0
      %600 = vmatprep.subr.bf16.mxu0 0
      %601 = vmatpush1.bf16.msra.mxu0 %v570
      %602 = vmatprep.subr.bf16.mxu0 0
      %603 = vmatpush1.bf16.msra.mxu0 %v571
      %604 = vmatprep.subr.bf16.mxu0 0
      %605 = vmatpush1.bf16.msra.mxu0 %v572
      %606 = vmatprep.subr.bf16.mxu0 0
      %607 = vmatpush1.bf16.msra.mxu0 %v573
      %608 = vmatprep.subr.bf16.mxu0 0
      %609 = vmatpush1.bf16.msra.mxu0 %v598
      %610 = vmatprep.subr.bf16.mxu0 0
      %611 = vmatpush1.bf16.msra.mxu0 0
      %612 = vmatprep.subr.bf16.mxu0 0
      %613 = vmatpush1.bf16.msra.mxu0 0
      %614 = vmatprep.subr.bf16.mxu0 0
      %615 = vmatpush1.bf16.msra.mxu0 0
      %616 = vmatprep.subr.bf16.mxu0 0
      %617 = vmatpush1.bf16.msra.mxu0 0
      %618 = vmatprep.subr.bf16.mxu0 0
      %619 = vmatpush1.bf16.msra.mxu0 0
      %620 = vmatprep.subr.bf16.mxu0 0
      %621 = vmatpush1.bf16.msra.mxu0 0
      %622 = vmatprep.subr.bf16.mxu0 0
      %623 = vmatpush1.bf16.msra.mxu0 0
      %624 = vmatprep.subr.bf16.mxu0 0
      %625 = vmatpush1.bf16.msra.mxu0 0
      %626 = vmatprep.subr.bf16.mxu0 0
      %627 = vmatpush1.bf16.msra.mxu0 0
      %628 = vmatprep.subr.bf16.mxu0 0
      %629 = vmatpush1.bf16.msra.mxu0 0
      %630 = vmatprep.subr.bf16.mxu0 0
      %631 = vmatpush1.bf16.msra.mxu0 0
      %632 = vmatprep.mubr.bf16.mxu0 0
      %633 = vmatmul.mubr.bf16.gmra.mrb[0].mxu0 %v580
      %v634 = vpop.f32.mrb[0].mxu0
      %v635 = vadd.f32 %v550, %v634
      %v636 = vpop.f32.mrb[0].mxu0
      %v637 = vpop.f32.mrb[0].mxu0
      %v638 = vadd.f32 %v550, %v637
      %v639 = vpop.f32.mrb[0].mxu0
      %640 = vmatprep.mubr.bf16.mxu0 0
      %641 = vmatmul.mubr.bf16.gmra.mrb[0].mxu0 %v582
      %v642 = vpop.f32.mrb[0].mxu0
      %v643 = vadd.f32 %v550, %v642
      %v644 = vpop.f32.mrb[0].mxu0
      %v645 = vpop.f32.mrb[0].mxu0
      %v646 = vadd.f32 %v550, %v645
      %v647 = vpop.f32.mrb[0].mxu0
      %648 = vmatprep.mubr.bf16.mxu0 0
      %649 = vmatmul.mubr.bf16.gmra.mrb[0].mxu0 %v584
      %v650 = vpop.f32.mrb[0].mxu0
      %v651 = vadd.f32 %v550, %v650
      %v652 = vpop.f32.mrb[0].mxu0
      %v653 = vpop.f32.mrb[0].mxu0
      %v654 = vadd.f32 %v550, %v653
      %v655 = vpop.f32.mrb[0].mxu0
      %656 = vmatprep.mubr.bf16.mxu0 0
      %657 = vmatmul.mubr.bf16.gmra.mrb[0].mxu0 %v586
      %v658 = vpop.f32.mrb[0].mxu0
      %v659 = vadd.f32 %v550, %v658
      %v660 = vpop.f32.mrb[0].mxu0
      %v661 = vpop.f32.mrb[0].mxu0
      %v662 = vadd.f32 %v550, %v661
      %v663 = vpop.f32.mrb[0].mxu0
      %664 = vmatprep.mubr.bf16.mxu0 0
      %665 = vmatmul.mubr.bf16.gmra.mrb[0].mxu0 %v588
      %v666 = vpop.f32.mrb[0].mxu0
      %v667 = vadd.f32 %v550, %v666
      %v668 = vpop.f32.mrb[0].mxu0
      %v669 = vpop.f32.mrb[0].mxu0
      %v670 = vadd.f32 %v550, %v669
      %v671 = vpop.f32.mrb[0].mxu0
      %672 = vmatprep.mubr.bf16.mxu0 0
      %673 = vmatmul.mubr.bf16.gmra.mrb[0].mxu0 %v590
      %v674 = vpop.f32.mrb[0].mxu0
      %v675 = vadd.f32 %v550, %v674
      %v676 = vpop.f32.mrb[0].mxu0
      %v677 = vpop.f32.mrb[0].mxu0
      %v678 = vadd.f32 %v550, %v677
      %v679 = vpop.f32.mrb[0].mxu0
      %680 = vmatprep.mubr.bf16.mxu0 0
      %681 = vmatmul.mubr.bf16.gmra.mrb[0].mxu0 %v592
      %v682 = vpop.f32.mrb[0].mxu0
      %v683 = vadd.f32 %v550, %v682
      %v684 = vpop.f32.mrb[0].mxu0
      %v685 = vpop.f32.mrb[0].mxu0
      %v686 = vadd.f32 %v550, %v685
      %v687 = vpop.f32.mrb[0].mxu0
      %688 = vmatprep.mubr.bf16.mxu0 0
      %689 = vmatmul.mubr.bf16.gmra.mrb[0].mxu0 %v594
      %v690 = vpop.f32.mrb[0].mxu0
      %v691 = vadd.f32 %v550, %v690
      %v692 = vpop.f32.mrb[0].mxu0
      %v693 = vpop.f32.mrb[0].mxu0
      %v694 = vadd.f32 %v550, %v693
      %v695 = vpop.f32.mrb[0].mxu0
      %696 = vdwg.mxu0
      %vm697 = vcmp.gt.f32.partialorder %v635, 0.0
      %vm698 = vcmp.gt.f32.partialorder %v638, 0.0
      %vm699 = vcmp.gt.f32.partialorder %v643, 0.0
      %vm700 = vcmp.gt.f32.partialorder %v646, 0.0
      %vm701 = vcmp.gt.f32.partialorder %v651, 0.0
      %vm702 = vcmp.gt.f32.partialorder %v654, 0.0
      %vm703 = vcmp.gt.f32.partialorder %v659, 0.0
      %vm704 = vcmp.gt.f32.partialorder %v662, 0.0
      %vm705 = vcmp.gt.f32.partialorder %v667, 0.0
      %vm706 = vcmp.gt.f32.partialorder %v670, 0.0
      %vm707 = vcmp.gt.f32.partialorder %v675, 0.0
      %vm708 = vcmp.gt.f32.partialorder %v678, 0.0
      %vm709 = vcmp.gt.f32.partialorder %v683, 0.0
      %vm710 = vcmp.gt.f32.partialorder %v686, 0.0
      %vm711 = vcmp.gt.f32.partialorder %v691, 0.0
      %vm712 = vcmp.gt.f32.partialorder %v694, 0.0
      %v713 = vmul.f32 %v635, 0.2
      %v714 = vmul.f32 %v638, 0.2
      %v715 = vmul.f32 %v643, 0.2
      %v716 = vmul.f32 %v646, 0.2
      %v717 = vmul.f32 %v651, 0.2
      %v718 = vmul.f32 %v654, 0.2
      %v719 = vmul.f32 %v659, 0.2
      %v720 = vmul.f32 %v662, 0.2
      %v721 = vmul.f32 %v667, 0.2
      %v722 = vmul.f32 %v670, 0.2
      %v723 = vmul.f32 %v675, 0.2
      %v724 = vmul.f32 %v678, 0.2
      %v725 = vmul.f32 %v683, 0.2
      %v726 = vmul.f32 %v686, 0.2
      %v727 = vmul.f32 %v691, 0.2
      %v728 = vmul.f32 %v694, 0.2
      %v729 = vsel %vm697, %v635, %v713
      %v730 = vsel %vm698, %v638, %v714
      %v731 = vsel %vm699, %v643, %v715
      %v732 = vsel %vm700, %v646, %v716
      %v733 = vsel %vm701, %v651, %v717
      %v734 = vsel %vm702, %v654, %v718
      %v735 = vsel %vm703, %v659, %v719
      %v736 = vsel %vm704, %v662, %v720
      %v737 = vsel %vm705, %v667, %v721
      %v738 = vsel %vm706, %v670, %v722
      %v739 = vsel %vm707, %v675, %v723
      %v740 = vsel %vm708, %v678, %v724
      %v741 = vsel %vm709, %v683, %v725
      %v742 = vsel %vm710, %v686, %v726
      %v743 = vsel %vm711, %v691, %v727
      %v744 = vsel %vm712, %v694, %v728
      %v745 = vpack.c.bf16 %v730, %v729
      %v746 = vpack.c.bf16 %v732, %v731
      %v747 = vpack.c.bf16 %v734, %v733
      %v748 = vpack.c.bf16 %v736, %v735
      %v749 = vpack.c.bf16 %v738, %v737
      %v750 = vpack.c.bf16 %v740, %v739
      %v751 = vpack.c.bf16 %v742, %v741
      %v752 = vpack.c.bf16 %v744, %v743
      %v761 = vunpack.c.l.b16 %v745
      %v762 = vunpack.c.h.b16 %v745
      %v763 = vunpack.c.l.b16 %v746
      %v764 = vunpack.c.h.b16 %v746
      %v765 = vunpack.c.l.b16 %v747
      %v766 = vunpack.c.h.b16 %v747
      %v767 = vunpack.c.l.b16 %v748
      %v768 = vunpack.c.h.b16 %v748
      %v769 = vunpack.c.l.b16 %v749
      %v770 = vunpack.c.h.b16 %v749
      %v771 = vunpack.c.l.b16 %v750
      %v772 = vunpack.c.h.b16 %v750
      %v773 = vunpack.c.l.b16 %v751
      %v774 = vunpack.c.h.b16 %v751
      %v775 = vunpack.c.l.b16 %v752
      %v776 = vunpack.c.h.b16 %v752
      %v777 = vpack.c.b16 %v761, %v761
      %v778 = vpack.c.b16 %v762, %v762
      %v779 = vpack.c.b16 %v763, %v763
      %v780 = vpack.c.b16 %v764, %v764
      %v781 = vpack.c.b16 %v765, %v765
      %v782 = vpack.c.b16 %v766, %v766
      %v783 = vpack.c.b16 %v767, %v767
      %v784 = vpack.c.b16 %v768, %v768
      %v785 = vpack.c.b16 %v769, %v769
      %v786 = vpack.c.b16 %v770, %v770
      %v787 = vpack.c.b16 %v771, %v771
      %v788 = vpack.c.b16 %v772, %v772
      %v789 = vpack.c.b16 %v773, %v773
      %v790 = vpack.c.b16 %v774, %v774
      %v791 = vpack.c.b16 %v775, %v775
      %v792 = vpack.c.b16 %v776, %v776
      %vm809 = vcmask 27648
      %810 = vst.msk [vmem:[%s194] sm:$0xf] %vm809, %v777
      %811 = vst.msk [vmem:[%s194 + $0x4] sm:$0xf] %vm809, %v778
      %812 = vst.msk [vmem:[%s194 + $0x8] sm:$0xf] %vm809, %v779
      %813 = vst.msk [vmem:[%s194 + $0xc] sm:$0xf] %vm809, %v780
      %814 = vst.msk [vmem:[%s194 + $0x10] sm:$0xf] %vm809, %v781
      %815 = vst.msk [vmem:[%s194 + $0x14] sm:$0xf] %vm809, %v782
      %816 = vst.msk [vmem:[%s194 + $0x18] sm:$0xf] %vm809, %v783
      %817 = vst.msk [vmem:[%s194 + $0x1c] sm:$0xf] %vm809, %v784
      %818 = vst.msk [vmem:[%s194 + $0x20] sm:$0xf] %vm809, %v785
      %819 = vst.msk [vmem:[%s194 + $0x24] sm:$0xf] %vm809, %v786
      %820 = vst.msk [vmem:[%s194 + $0x28] sm:$0xf] %vm809, %v787
      %821 = vst.msk [vmem:[%s194 + $0x2c] sm:$0xf] %vm809, %v788
      %822 = vst.msk [vmem:[%s194 + $0x30] sm:$0xf] %vm809, %v789
      %823 = vst.msk [vmem:[%s194 + $0x34] sm:$0xf] %vm809, %v790
      %824 = vst.msk [vmem:[%s194 + $0x38] sm:$0xf] %vm809, %v791
      %825 = vst.msk [vmem:[%s194 + $0x3c] sm:$0xf] %vm809, %v792
      %s826 = smul.u32 8, %s19
      %p827 = scmp.lt.s32.totalorder %s18, 1
      %s828 = scalar_select %p827, %s18, 1
      %p829 = scmp.lt.s32.totalorder %s826, 15
      %s830 = scalar_select %p829, %s826, 15
      %s831 = smul.addr %s830, 2
      %s832 = smul.addr %s828, 32
      %s833 = sadd.s32 %s831, %s832
      %s834 = smul.addr %s833, 4
      %s835 = scalar_lea.vmem %s3, %s834
      // Predicated region
      $region33: #{generator_forward.11} parent=31 // pred_check
        %p836 = pneg %p114
      $region34: #{generator_forward.11} parent=31 // pred_check_branch
        %838 = sbr.rel (%p836) target = $region36
      $region35: #{generator_forward.11} parent=31 // pred_region
        %s839 = smul.u32 8, %s19
      $region36: #{generator_forward.11} parent=31 // pred_fallthru
        _
    $region32: #{generator_forward.11} parent=5 // pred_fallthru
      _
    %p840 = scmp.le.s32.totalorder 2, %s9
    // Predicated region
    $region37: #{generator_forward.11} parent=5 // pred_check
      %p841 = pneg %p840
    $region38: #{generator_forward.11} parent=5 // pred_check_branch
      %843 = sbr.rel (%p841) target = $region40
    $region39: #{generator_forward.11} parent=5 // pred_region
      %s844 = ssub.s32 %s9, 2
      // Predicated region
      $region41: #{generator_forward.11} parent=39 // pred_check
        %p845 = pneg %p120
      $region42: #{generator_forward.11} parent=39 // pred_check_branch
        %847 = sbr.rel (%p845) target = $region44
      $region43: #{generator_forward.11} parent=39 // pred_region
        %s848 = smul.u32 8, %s21
        %p849 = scmp.lt.s32.totalorder %s20, 1
        %s850 = scalar_select %p849, %s20, 1
        %p851 = scmp.lt.s32.totalorder %s848, 15
        %s852 = scalar_select %p851, %s848, 15
        %s853 = smul.addr %s852, 2
        %s854 = smul.addr %s850, 32
        %s855 = sadd.s32 %s853, %s854
        %s856 = smul.addr %s855, 4
        %s857 = scalar_lea.vmem %s3, %s856
      $region44: #{generator_forward.11} parent=39 // pred_fallthru
        _
    $region40: #{generator_forward.11} parent=5 // pred_fallthru
      _
  $region6: #{generator_forward.11} parent=0 // loop_footer
    %s13 = sadd.s32 1, %s9
  $region7: #{generator_forward.11} parent=0 // loop_footer_branch
    %8 = sbr.rel target = $region3
  $region8: #{generator_forward.11} parent=0 // loop_exit
    _

// kernel: generator_forward.13
$region0: #{generator_forward.13}
  #allocation0 [shape = 'u32[]', space=smem, size = 0x4, offset = 0x4, fixed_abs, tag = 'smem constant byte address 0x4 - core index']
  #allocation1 [shape = 'u32[144,128]{1,0:T(1,128)}', space=vmem, size = 0x12000, scoped, tag = 'internal scratch']
  #allocation2 [shape = 'f32[1,1]{1,0:T(1,128)S(6)}', space=smem, size = 0x200, scoped, tag = 'scoped memory for generator_forward.13']
  %s0 = inlined_call_operand.<no memory space> [shape: f32[1,1], index: 0, kind: input, shape index: {}]
  %s1 = inlined_call_operand.vmem [shape: bf16[2,16,16,4], index: 1, kind: input, shape index: {}]
  %s2 = inlined_call_operand.vmem [shape: bf16[4,4], index: 2, kind: input, shape index: {}]
  %s3 = inlined_call_operand.vmem [shape: f32[1,4], index: 3, kind: input, shape index: {}]
  %s4 = inlined_call_operand.vmem [shape: bf16[2,8,16,4], index: 4, kind: input, shape index: {}]
  %s5 = inlined_call_operand.vmem [shape: f32[2,16,16,4], index: 5, kind: output, shape index: {}]
  %s6 = sld [smem:[#allocation0]]
  $region53: #{generator_forward.13} parent=0
    _
  %s8 = ssub.s32 1, %s6
  %s9 = scalar_select 0, %s8, %s6
  %10 = sst [smem:[#allocation2]] %s0
  loop: start=0, step=1, limit=6
  $region2: #{generator_forward.13} parent=0 // loop_pre_header
    _
  $region3: #{generator_forward.13} parent=0 // loop_header
    %s12 = sphi 0, %s16
    %p13 = scmp.ge.s32.totalorder %s12, 6
    %s19 = sphi 0, %s31
    %s20 = sphi 0, %s27
    %s21 = sphi 0, %s19
    %s22 = sphi 0, %s20
    %s23 = sphi 0, %s21
    %s24 = sphi 0, %s22
    %s32 = sphi 0, %s32
    %s34 = sphi 0, %s32
    %s35 = sphi 0, %s34
    %s49 = sphi 0, %s35
    %s57 = sphi 0, %s59
    %s60 = sphi 0, %s57
    %s61 = sphi 0, %s60
    %s77 = sphi 0, %s61
    %s81 = sphi 0, %s81
    %s83 = sphi 0, %s81
    %s84 = sphi 0, %s83
    %s98 = sphi 0, %s84
    %s102 = sphi 0, %s102
    %s104 = sphi 0, %s102
    %s105 = sphi 0, %s104
    %s119 = sphi 0, %s105
    %s127 = sphi 0, %s129
    %s130 = sphi 0, %s127
    %s131 = sphi 0, %s130
    %s147 = sphi 0, %s131
    %s155 = sphi 0, %s157
    %s158 = sphi 0, %s155
    %s159 = sphi 0, %s158
    %s175 = sphi 0, %s159
  $region4: #{generator_forward.13} parent=0 // loop_header_branch
    %15 = sbr.rel (%p13) target = $region8
  $region5: #{generator_forward.13} parent=0 // loop_body
    %s17 = ssub.s32 %s12, 1
    %s18 = ssub.s32 %s12, 2
    %s25 = sadd.s32 1, %s20
    %p26 = scmp.ge.s32.totalorder %s25, 2
    %s27 = scalar_select %p26, 0, %s25
    %s28 = sadd.s32 1, %s19
    %s29 = scalar_select %p26, %s28, %s19
    %p30 = scmp.ge.s32.totalorder %s29, 2
    %s31 = scalar_select %p30, 0, %s29
    %s33 = sadd.s32 %s32, 1
    %p36 = scmp.eq.s32.totalorder %s12, 3
    %p37 = scmp.ne.s32.totalorder %s32, %s34
    %p38 = scmp.eq.s32.totalorder %s12, 0
    %p39 = por %p37, %p38
    %p40 = scmp.ne.s32.totalorder %s32, %s34
    %p41 = scmp.eq.s32.totalorder %s17, 3
    %p42 = por %p40, %p41
    %p43 = scmp.ne.s32.totalorder %s34, %s35
    %p44 = scmp.eq.s32.totalorder %s17, 0
    %p45 = por %p43, %p44
    %p46 = scmp.ne.s32.totalorder %s34, %s35
    %p47 = scmp.eq.s32.totalorder %s18, 3
    %p48 = por %p46, %p47
    %p50 = scmp.ne.s32.totalorder %s35, %s49
    %p51 = scmp.eq.s32.totalorder %s18, 0
    %p52 = por %p50, %p51
    %s53 = ssub.s32 %s19, %s31
    %s54 = ssub.s32 %s20, %s27
    %s55 = sor.u32 %s53, %s54
    %p56 = scmp.eq.s32.totalorder %s55, 0
    %s58 = sadd.s32 %s57, 1
    %s59 = scalar_select %p56, %s57, %s58
    %p62 = pneg %p56
    %p63 = scmp.eq.s32.totalorder %s12, 3
    %p64 = por %p62, %p63
    %p65 = scmp.ne.s32.totalorder %s57, %s60
    %p66 = scmp.eq.s32.totalorder %s12, 0
    %p67 = por %p65, %p66
    %p68 = scmp.ne.s32.totalorder %s57, %s60
    %p69 = scmp.eq.s32.totalorder %s17, 3
    %p70 = por %p68, %p69
    %p71 = scmp.ne.s32.totalorder %s60, %s61
    %p72 = scmp.eq.s32.totalorder %s17, 0
    %p73 = por %p71, %p72
    %p74 = scmp.ne.s32.totalorder %s60, %s61
    %p75 = scmp.eq.s32.totalorder %s18, 3
    %p76 = por %p74, %p75
    %p78 = scmp.ne.s32.totalorder %s61, %s77
    %p79 = scmp.eq.s32.totalorder %s18, 0
    %p80 = por %p78, %p79
    %s82 = sadd.s32 %s81, 1
    %p85 = scmp.eq.s32.totalorder %s12, 3
    %p86 = scmp.ne.s32.totalorder %s81, %s83
    %p87 = scmp.eq.s32.totalorder %s12, 0
    %p88 = por %p86, %p87
    %p89 = scmp.ne.s32.totalorder %s81, %s83
    %p90 = scmp.eq.s32.totalorder %s17, 3
    %p91 = por %p89, %p90
    %p92 = scmp.ne.s32.totalorder %s83, %s84
    %p93 = scmp.eq.s32.totalorder %s17, 0
    %p94 = por %p92, %p93
    %p95 = scmp.ne.s32.totalorder %s83, %s84
    %p96 = scmp.eq.s32.totalorder %s18, 3
    %p97 = por %p95, %p96
    %p99 = scmp.ne.s32.totalorder %s84, %s98
    %p100 = scmp.eq.s32.totalorder %s18, 0
    %p101 = por %p99, %p100
    %s103 = sadd.s32 %s102, 1
    %p106 = scmp.eq.s32.totalorder %s12, 3
    %p107 = scmp.ne.s32.totalorder %s102, %s104
    %p108 = scmp.eq.s32.totalorder %s12, 0
    %p109 = por %p107, %p108
    %p110 = scmp.ne.s32.totalorder %s102, %s104
    %p111 = scmp.eq.s32.totalorder %s17, 3
    %p112 = por %p110, %p111
    %p113 = scmp.ne.s32.totalorder %s104, %s105
    %p114 = scmp.eq.s32.totalorder %s17, 0
    %p115 = por %p113, %p114
    %p116 = scmp.ne.s32.totalorder %s104, %s105
    %p117 = scmp.eq.s32.totalorder %s18, 3
    %p118 = por %p116, %p117
    %p120 = scmp.ne.s32.totalorder %s105, %s119
    %p121 = scmp.eq.s32.totalorder %s18, 0
    %p122 = por %p120, %p121
    %s123 = ssub.s32 %s19, %s31
    %s124 = ssub.s32 %s20, %s27
    %s125 = sor.u32 %s123, %s124
    %p126 = scmp.eq.s32.totalorder %s125, 0
    %s128 = sadd.s32 %s127, 1
    %s129 = scalar_select %p126, %s127, %s128
    %p132 = pneg %p126
    %p133 = scmp.eq.s32.totalorder %s12, 3
    %p134 = por %p132, %p133
    %p135 = scmp.ne.s32.totalorder %s127, %s130
    %p136 = scmp.eq.s32.totalorder %s12, 0
    %p137 = por %p135, %p136
    %p138 = scmp.ne.s32.totalorder %s127, %s130
    %p139 = scmp.eq.s32.totalorder %s17, 3
    %p140 = por %p138, %p139
    %p141 = scmp.ne.s32.totalorder %s130, %s131
    %p142 = scmp.eq.s32.totalorder %s17, 0
    %p143 = por %p141, %p142
    %p144 = scmp.ne.s32.totalorder %s130, %s131
    %p145 = scmp.eq.s32.totalorder %s18, 3
    %p146 = por %p144, %p145
    %p148 = scmp.ne.s32.totalorder %s131, %s147
    %p149 = scmp.eq.s32.totalorder %s18, 0
    %p150 = por %p148, %p149
    %s151 = ssub.s32 %s19, %s31
    %s152 = ssub.s32 %s20, %s27
    %s153 = sor.u32 %s151, %s152
    %p154 = scmp.eq.s32.totalorder %s153, 0
    %s156 = sadd.s32 %s155, 1
    %s157 = scalar_select %p154, %s155, %s156
    %p160 = pneg %p154
    %p161 = scmp.eq.s32.totalorder %s12, 3
    %p162 = por %p160, %p161
    %p163 = scmp.ne.s32.totalorder %s155, %s158
    %p164 = scmp.eq.s32.totalorder %s12, 0
    %p165 = por %p163, %p164
    %p166 = scmp.ne.s32.totalorder %s155, %s158
    %p167 = scmp.eq.s32.totalorder %s17, 3
    %p168 = por %p166, %p167
    %p169 = scmp.ne.s32.totalorder %s158, %s159
    %p170 = scmp.eq.s32.totalorder %s17, 0
    %p171 = por %p169, %p170
    %p172 = scmp.ne.s32.totalorder %s158, %s159
    %p173 = scmp.eq.s32.totalorder %s18, 3
    %p174 = por %p172, %p173
    %p176 = scmp.ne.s32.totalorder %s159, %s175
    %p177 = scmp.eq.s32.totalorder %s18, 0
    %p178 = por %p176, %p177
    %p179 = scmp.le.s32.totalorder 1, %s12
    %p180 = scmp.lt.s32.totalorder %s12, 5
    %p181 = pnand %p179, %p180
    %p182 = pneg %p181
    // Predicated region
    $region9: #{generator_forward.13} parent=5 // pred_check
      _
    $region10: #{generator_forward.13} parent=5 // pred_check_branch
      %184 = sbr.rel (%p181) target = $region12
    $region11: #{generator_forward.13} parent=5 // pred_region
      %s185 = ssub.s32 %s12, 1
      // Predicated region
      $region13: #{generator_forward.13} parent=11 // pred_check
        %p186 = pneg %p45
      $region14: #{generator_forward.13} parent=11 // pred_check_branch
        %188 = sbr.rel (%p186) target = $region16
      $region15: #{generator_forward.13} parent=11 // pred_region
        _
      $region16: #{generator_forward.13} parent=11 // pred_fallthru
        _
      // Predicated region
      $region17: #{generator_forward.13} parent=11 // pred_check
        %p189 = pneg %p94
      $region18: #{generator_forward.13} parent=11 // pred_check_branch
        %191 = sbr.rel (%p189) target = $region20
      $region19: #{generator_forward.13} parent=11 // pred_region
        _
      $region20: #{generator_forward.13} parent=11 // pred_fallthru
        _
      // Predicated region
      $region21: #{generator_forward.13} parent=11 // pred_check
        %p192 = pneg %p115
      $region22: #{generator_forward.13} parent=11 // pred_check_branch
        %194 = sbr.rel (%p192) target = $region24
      $region23: #{generator_forward.13} parent=11 // pred_region
        _
      $region24: #{generator_forward.13} parent=11 // pred_fallthru
        _
    $region12: #{generator_forward.13} parent=5 // pred_fallthru
      _
    %p195 = scmp.lt.s32.totalorder %s12, 4
    // Predicated region
    $region25: #{generator_forward.13} parent=5 // pred_check
      %p196 = pneg %p195
    $region26: #{generator_forward.13} parent=5 // pred_check_branch
      %198 = sbr.rel (%p196) target = $region28
    $region27: #{generator_forward.13} parent=5 // pred_region
      // Predicated region
      $region29: #{generator_forward.13} parent=27 // pred_check
        %p199 = pneg %p67
      $region30: #{generator_forward.13} parent=27 // pred_check_branch
        %201 = sbr.rel (%p199) target = $region32
      $region31: #{generator_forward.13} parent=27 // pred_region
        %s202 = smul.u32 8, %s20
        %p203 = scmp.lt.s32.totalorder %s19, 1
        %s204 = scalar_select %p203, %s19, 1
        %p205 = scmp.lt.s32.totalorder %s202, 15
        %s206 = scalar_select %p205, %s202, 15
        %s207 = smul.addr %s206, 2
        %s208 = smul.addr %s204, 32
        %s209 = sadd.s32 %s207, %s208
        %s210 = smul.addr %s209, 4
        %s211 = scalar_lea.vmem %s1, %s210
        %s212 = smul.u32 8, %s20
      $region32: #{generator_forward.13} parent=27 // pred_fallthru
        _
      // Predicated region
      $region33: #{generator_forward.13} parent=27 // pred_check
        %p213 = pneg %p137
      $region34: #{generator_forward.13} parent=27 // pred_check_branch
        %215 = sbr.rel (%p213) target = $region36
      $region35: #{generator_forward.13} parent=27 // pred_region
        %s216 = smul.u32 4, %s20
        %p217 = scmp.lt.s32.totalorder %s19, 1
        %s218 = scalar_select %p217, %s19, 1
        %p219 = scmp.lt.s32.totalorder %s216, 7
        %s220 = scalar_select %p219, %s216, 7
        %s221 = smul.addr %s220, 2
        %s222 = smul.addr %s218, 16
        %s223 = sadd.s32 %s221, %s222
        %s224 = smul.addr %s223, 4
        %s225 = scalar_lea.vmem %s4, %s224
        %s226 = smul.u32 4, %s20
      $region36: #{generator_forward.13} parent=27 // pred_fallthru
        _
    $region28: #{generator_forward.13} parent=5 // pred_fallthru
      _
    %p227 = scmp.le.s32.totalorder 1, %s12
    %p228 = scmp.lt.s32.totalorder %s12, 5
    %p229 = pnand %p227, %p228
    %p230 = pneg %p229
    // Predicated region
    $region37: #{generator_forward.13} parent=5 // pred_check
      _
    $region38: #{generator_forward.13} parent=5 // pred_check_branch
      %232 = sbr.rel (%p229) target = $region40
    $region39: #{generator_forward.13} parent=5 // pred_region
      %s233 = ssub.s32 %s12, 1
      %p234 = pneg %p45
      %p235 = pneg %p42
      %s236 = smul.u32 8, %s22
      %p237 = scmp.lt.s32.totalorder %s21, 1
      %s238 = scalar_select %p237, %s21, 1
      %p239 = scmp.lt.s32.totalorder %s236, 15
      %s240 = scalar_select %p239, %s236, 15
      %s241 = smul.addr %s240, 2
      %s242 = smul.addr %s238, 32
      %s243 = sadd.s32 %s241, %s242
      %s244 = smul.addr %s243, 4
      %s245 = scalar_lea.vmem %s1, %s244
      %p246 = pneg %p73
      %p247 = pneg %p70
      %p248 = pneg %p94
      %p249 = pneg %p91
      %p250 = pneg %p115
      %p251 = pneg %p112
      %s252 = smul.u32 4, %s22
      %p253 = scmp.lt.s32.totalorder %s21, 1
      %s254 = scalar_select %p253, %s21, 1
      %p255 = scmp.lt.s32.totalorder %s252, 7
      %s256 = scalar_select %p255, %s252, 7
      %s257 = smul.addr %s256, 2
      %s258 = smul.addr %s254, 16
      %s259 = sadd.s32 %s257, %s258
      %s260 = smul.addr %s259, 4
      %s261 = scalar_lea.vmem %s4, %s260
      %p262 = pneg %p143
      %p263 = pneg %p140
      %p264 = pneg %p171
      %p265 = pneg %p168
      %s266 = smul.u32 8, %s22
      %p267 = scmp.lt.s32.totalorder %s21, 1
      %s268 = scalar_select %p267, %s21, 1
      %p269 = scmp.lt.s32.totalorder %s266, 15
      %s270 = scalar_select %p269, %s266, 15
      %s271 = smul.addr %s270, 2
      %s272 = smul.addr %s268, 32
      %s273 = sadd.s32 %s271, %s272
      %s274 = smul.addr %s273, 8
      %s275 = scalar_lea.vmem %s5, %s274
      %s276 = smul.u32 8, %s22
      %p277 = scmp.lt.s32.totalorder %s21, 1
      %s278 = scalar_select %p277, %s21, 1
      %p279 = scmp.lt.s32.totalorder %s276, 15
      %s280 = scalar_select %p279, %s276, 15
      %s281 = smul.addr %s280, 2
      %s282 = smul.addr %s278, 32
      %s283 = sadd.s32 %s281, %s282
      %s284 = smul.addr %s283, 4
      %s285 = scalar_lea.vmem %s1, %s284
      %s286 = smul.u32 8, %s22
      %s287 = smul.u32 4, %s22
      %p288 = scmp.lt.s32.totalorder %s21, 1
      %s289 = scalar_select %p288, %s21, 1
      %p290 = scmp.lt.s32.totalorder %s287, 7
      %s291 = scalar_select %p290, %s287, 7
      %s292 = smul.addr %s291, 2
      %s293 = smul.addr %s289, 16
      %s294 = sadd.s32 %s292, %s293
      %s295 = smul.addr %s294, 4
      %s296 = scalar_lea.vmem %s4, %s295
      %s297 = smul.u32 4, %s22
      %s298 = smul.u32 8, %s22
      %p299 = scmp.lt.s32.totalorder %s21, 1
      %s300 = scalar_select %p299, %s21, 1
      %p301 = scmp.lt.s32.totalorder %s298, 15
      %s302 = scalar_select %p301, %s298, 15
      %s303 = smul.addr %s302, 2
      %s304 = smul.addr %s300, 32
      %s305 = sadd.s32 %s303, %s304
      %s306 = smul.addr %s305, 8
      %s307 = scalar_lea.vmem %s5, %s306
      %s308 = smul.u32 8, %s22
      %s310 = sld [smem:[#allocation2]]
      %v311 = vld [vmem:[%s285] sm:$0xf]
      %v312 = vld [vmem:[%s285 + $0x4] sm:$0xf]
      %v313 = vld [vmem:[%s285 + $0x8] sm:$0xf]
      %v314 = vld [vmem:[%s285 + $0xc] sm:$0xf]
      %v315 = vld [vmem:[%s285 + $0x10] sm:$0xf]
      %v316 = vld [vmem:[%s285 + $0x14] sm:$0xf]
      %v317 = vld [vmem:[%s285 + $0x18] sm:$0xf]
      %v318 = vld [vmem:[%s285 + $0x1c] sm:$0xf]
      %v319 = vld [vmem:[%s285 + $0x20] sm:$0xf]
      %v320 = vld [vmem:[%s285 + $0x24] sm:$0xf]
      %v321 = vld [vmem:[%s285 + $0x28] sm:$0xf]
      %v322 = vld [vmem:[%s285 + $0x2c] sm:$0xf]
      %v323 = vld [vmem:[%s285 + $0x30] sm:$0xf]
      %v324 = vld [vmem:[%s285 + $0x34] sm:$0xf]
      %v325 = vld [vmem:[%s285 + $0x38] sm:$0xf]
      %v326 = vld [vmem:[%s285 + $0x3c] sm:$0xf]
      %v327 = vld [vmem:[%s2] sm:$0x3]
      %v328 = vld [vmem:[%s3] sm:$0x1]
      %v330 = vlaneseq
      %v331 = vshrl.u32 %v330, 7
      %v332 = vsub.s32 0, %v331
      %v333 = vrot.slane %v328, %v332
      %v351 = vunpack.c.l.b16 %v311
      %v352 = vunpack.c.l.b16 %v312
      %v353 = vunpack.c.l.b16 %v313
      %v354 = vunpack.c.l.b16 %v314
      %v355 = vunpack.c.l.b16 %v315
      %v356 = vunpack.c.l.b16 %v316
      %v357 = vunpack.c.l.b16 %v317
      %v358 = vunpack.c.l.b16 %v318
      %v359 = vunpack.c.l.b16 %v319
      %v360 = vunpack.c.l.b16 %v320
      %v361 = vunpack.c.l.b16 %v321
      %v362 = vunpack.c.l.b16 %v322
      %v363 = vunpack.c.l.b16 %v323
      %v364 = vunpack.c.l.b16 %v324
      %v365 = vunpack.c.l.b16 %v325
      %v366 = vunpack.c.l.b16 %v326
      %v367 = vpack.c.b16 %v352, %v351
      %v368 = vpack.c.b16 %v354, %v353
      %v369 = vpack.c.b16 %v356, %v355
      %v370 = vpack.c.b16 %v358, %v357
      %v371 = vpack.c.b16 %v360, %v359
      %v372 = vpack.c.b16 %v362, %v361
      %v373 = vpack.c.b16 %v364, %v363
      %v374 = vpack.c.b16 %v366, %v365
      %vm375 = vcmask 31744
      %v377 = vsel %vm375, %v367, 0
      %v380 = vsel %vm375, %v368, 0
      %v383 = vsel %vm375, %v369, 0
      %v386 = vsel %vm375, %v370, 0
      %v389 = vsel %vm375, %v371, 0
      %v392 = vsel %vm375, %v372, 0
      %v395 = vsel %vm375, %v373, 0
      %v398 = vsel %vm375, %v374, 0
      %vm400 = vcmask 1041408
      %v402 = vsel %vm400, %v327, 0
      %404 = vmatprep.subr.bf16.mxu0 0
      %405 = vmatpush1.bf16.msra.mxu0 %v402
      %406 = vmatprep.subr.bf16.mxu0 0
      %407 = vmatpush1.bf16.msra.mxu0 0
      %408 = vmatprep.subr.bf16.mxu0 0
      %409 = vmatpush1.bf16.msra.mxu0 0
      %410 = vmatprep.subr.bf16.mxu0 0
      %411 = vmatpush1.bf16.msra.mxu0 0
      %412 = vmatprep.subr.bf16.mxu0 0
      %413 = vmatpush1.bf16.msra.mxu0 0
      %414 = vmatprep.subr.bf16.mxu0 0
      %415 = vmatpush1.bf16.msra.mxu0 0
      %416 = vmatprep.subr.bf16.mxu0 0
      %417 = vmatpush1.bf16.msra.mxu0 0
      %418 = vmatprep.subr.bf16.mxu0 0
      %419 = vmatpush1.bf16.msra.mxu0 0
      %420 = vmatprep.subr.bf16.mxu0 0
      %421 = vmatpush1.bf16.msra.mxu0 0
      %422 = vmatprep.subr.bf16.mxu0 0
      %423 = vmatpush1.bf16.msra.mxu0 0
      %424 = vmatprep.subr.bf16.mxu0 0
      %425 = vmatpush1.bf16.msra.mxu0 0
      %426 = vmatprep.subr.bf16.mxu0 0
      %427 = vmatpush1.bf16.msra.mxu0 0
      %428 = vmatprep.subr.bf16.mxu0 0
      %429 = vmatpush1.bf16.msra.mxu0 0
      %430 = vmatprep.subr.bf16.mxu0 0
      %431 = vmatpush1.bf16.msra.mxu0 0
      %432 = vmatprep.subr.bf16.mxu0 0
      %433 = vmatpush1.bf16.msra.mxu0 0
      %434 = vmatprep.subr.bf16.mxu0 0
      %435 = vmatpush1.bf16.msra.mxu0 0
      %436 = vmatprep.mubr.bf16.mxu0 0
      %437 = vmatmul.mubr.bf16.gmra.mrb[0].mxu0 %v377
      %v438 = vpop.f32.mrb[0].mxu0
      %v439 = vadd.f32 %v333, %v438
      %v440 = vpop.f32.mrb[0].mxu0
      %v441 = vpop.f32.mrb[0].mxu0
      %v442 = vadd.f32 %v333, %v441
      %v443 = vpop.f32.mrb[0].mxu0
      %444 = vmatprep.mubr.bf16.mxu0 0
      %445 = vmatmul.mubr.bf16.gmra.mrb[0].mxu0 %v380
      %v446 = vpop.f32.mrb[0].mxu0
      %v447 = vadd.f32 %v333, %v446
      %v448 = vpop.f32.mrb[0].mxu0
      %v449 = vpop.f32.mrb[0].mxu0
      %v450 = vadd.f32 %v333, %v449
      %v451 = vpop.f32.mrb[0].mxu0
      %452 = vmatprep.mubr.bf16.mxu0 0
      %453 = vmatmul.mubr.bf16.gmra.mrb[0].mxu0 %v383
      %v454 = vpop.f32.mrb[0].mxu0
      %v455 = vadd.f32 %v333, %v454
      %v456 = vpop.f32.mrb[0].mxu0
      %v457 = vpop.f32.mrb[0].mxu0
      %v458 = vadd.f32 %v333, %v457
      %v459 = vpop.f32.mrb[0].mxu0
      %460 = vmatprep.mubr.bf16.mxu0 0
      %461 = vmatmul.mubr.bf16.gmra.mrb[0].mxu0 %v386
      %v462 = vpop.f32.mrb[0].mxu0
      %v463 = vadd.f32 %v333, %v462
      %v464 = vpop.f32.mrb[0].mxu0
      %v465 = vpop.f32.mrb[0].mxu0
      %v466 = vadd.f32 %v333, %v465
      %v467 = vpop.f32.mrb[0].mxu0
      %468 = vmatprep.mubr.bf16.mxu0 0
      %469 = vmatmul.mubr.bf16.gmra.mrb[0].mxu0 %v389
      %v470 = vpop.f32.mrb[0].mxu0
      %v471 = vadd.f32 %v333, %v470
      %v472 = vpop.f32.mrb[0].mxu0
      %v473 = vpop.f32.mrb[0].mxu0
      %v474 = vadd.f32 %v333, %v473
      %v475 = vpop.f32.mrb[0].mxu0
      %476 = vmatprep.mubr.bf16.mxu0 0
      %477 = vmatmul.mubr.bf16.gmra.mrb[0].mxu0 %v392
      %v478 = vpop.f32.mrb[0].mxu0
      %v479 = vadd.f32 %v333, %v478
      %v480 = vpop.f32.mrb[0].mxu0
      %v481 = vpop.f32.mrb[0].mxu0
      %v482 = vadd.f32 %v333, %v481
      %v483 = vpop.f32.mrb[0].mxu0
      %484 = vmatprep.mubr.bf16.mxu0 0
      %485 = vmatmul.mubr.bf16.gmra.mrb[0].mxu0 %v395
      %v486 = vpop.f32.mrb[0].mxu0
      %v487 = vadd.f32 %v333, %v486
      %v488 = vpop.f32.mrb[0].mxu0
      %v489 = vpop.f32.mrb[0].mxu0
      %v490 = vadd.f32 %v333, %v489
      %v491 = vpop.f32.mrb[0].mxu0
      %492 = vmatprep.mubr.bf16.mxu0 0
      %493 = vmatmul.mubr.bf16.gmra.mrb[0].mxu0 %v398
      %v494 = vpop.f32.mrb[0].mxu0
      %v495 = vadd.f32 %v333, %v494
      %v496 = vpop.f32.mrb[0].mxu0
      %v497 = vpop.f32.mrb[0].mxu0
      %v498 = vadd.f32 %v333, %v497
      %v499 = vpop.f32.mrb[0].mxu0
      %500 = vdwg.mxu0
      %v501 = vld [vmem:[%s296] sm:$0xf]
      %v502 = vld [vmem:[%s296 + $0x4] sm:$0xf]
      %v503 = vld [vmem:[%s296 + $0x8] sm:$0xf]
      %v504 = vld [vmem:[%s296 + $0xc] sm:$0xf]
      %v505 = vld [vmem:[%s296 + $0x10] sm:$0xf]
      %v506 = vld [vmem:[%s296 + $0x14] sm:$0xf]
      %v507 = vld [vmem:[%s296 + $0x18] sm:$0xf]
      %v508 = vld [vmem:[%s296 + $0x1c] sm:$0xf]
      %v509 = vunpack.c.l.bf16 %v501
      %v510 = vunpack.c.l.bf16 %v502
      %v511 = vunpack.c.l.bf16 %v503
      %v512 = vunpack.c.l.bf16 %v504
      %v513 = vunpack.c.l.bf16 %v505
      %v514 = vunpack.c.l.bf16 %v506
      %v515 = vunpack.c.l.bf16 %v507
      %v516 = vunpack.c.l.bf16 %v508
      %v517 = vstv %s310
      %v518 = vmul.f32 %v517, %v439
      %v519 = vmul.f32 %v517, %v442
      %v520 = vmul.f32 %v517, %v447
      %v521 = vmul.f32 %v517, %v450
      %v522 = vmul.f32 %v517, %v455
      %v523 = vmul.f32 %v517, %v458
      %v524 = vmul.f32 %v517, %v463
      %v525 = vmul.f32 %v517, %v466
      %v526 = vmul.f32 %v517, %v471
      %v527 = vmul.f32 %v517, %v474
      %v528 = vmul.f32 %v517, %v479
      %v529 = vmul.f32 %v517, %v482
      %v530 = vmul.f32 %v517, %v487
      %v531 = vmul.f32 %v517, %v490
      %v532 = vmul.f32 %v517, %v495
      %v533 = vmul.f32 %v517, %v498
      %s534 = ssub.f32 1.0, %s310
      %v535 = vstv %s534
      %v536 = vmul.f32 %v535, %v509
      %v537 = vmul.f32 %v535, %v510
      %v538 = vmul.f32 %v535, %v511
      %v539 = vmul.f32 %v535, %v512
      %v540 = vmul.f32 %v535, %v513
      %v541 = vmul.f32 %v535, %v514
      %v542 = vmul.f32 %v535, %v515
      %v543 = vmul.f32 %v535, %v516
      %v544 = vadd.f32 %v518, %v536
      %v545 = vadd.f32 %v519, %v537
      %v546 = vadd.f32 %v520, %v536
      %v547 = vadd.f32 %v521, %v537
      %v548 = vadd.f32 %v522, %v538
      %v549 = vadd.f32 %v523, %v539
      %v550 = vadd.f32 %v524, %v538
      %v551 = vadd.f32 %v525, %v539
      %v552 = vadd.f32 %v526, %v540
      %v553 = vadd.f32 %v527, %v541
      %v554 = vadd.f32 %v528, %v540
      %v555 = vadd.f32 %v529, %v541
      %v556 = vadd.f32 %v530, %v542
      %v557 = vadd.f32 %v531, %v543
      %v558 = vadd.f32 %v532, %v542
      %v559 = vadd.f32 %v533, %v543
      %v560 = vtanh.pop %v544
      %v561 = vtanh.pop %v545
      %v562 = vtanh.pop %v546
      %v563 = vtanh.pop %v547
      %v564 = vtanh.pop %v548
      %v565 = vtanh.pop %v549
      %v566 = vtanh.pop %v550
      %v567 = vtanh.pop %v551
      %v568 = vtanh.pop %v552
      %v569 = vtanh.pop %v553
      %v570 = vtanh.pop %v554
      %v571 = vtanh.pop %v555
      %v572 = vtanh.pop %v556
      %v573 = vtanh.pop %v557
      %v574 = vtanh.pop %v558
      %v575 = vtanh.pop %v559
      %576 = vst.msk [vmem:[%s307] sm:$0xff] %vm375, %v560
      %577 = vst.msk [vmem:[%s307 + $0x8] sm:$0xff] %vm375, %v561
      %578 = vst.msk [vmem:[%s307 + $0x10] sm:$0xff] %vm375, %v562
      %579 = vst.msk [vmem:[%s307 + $0x18] sm:$0xff] %vm375, %v563
      %580 = vst.msk [vmem:[%s307 + $0x20] sm:$0xff] %vm375, %v564
      %581 = vst.msk [vmem:[%s307 + $0x28] sm:$0xff] %vm375, %v565
      %582 = vst.msk [vmem:[%s307 + $0x30] sm:$0xff] %vm375, %v566
      %583 = vst.msk [vmem:[%s307 + $0x38] sm:$0xff] %vm375, %v567
      %584 = vst.msk [vmem:[%s307 + $0x40] sm:$0xff] %vm375, %v568
      %585 = vst.msk [vmem:[%s307 + $0x48] sm:$0xff] %vm375, %v569
      %586 = vst.msk [vmem:[%s307 + $0x50] sm:$0xff] %vm375, %v570
      %587 = vst.msk [vmem:[%s307 + $0x58] sm:$0xff] %vm375, %v571
      %588 = vst.msk [vmem:[%s307 + $0x60] sm:$0xff] %vm375, %v572
      %589 = vst.msk [vmem:[%s307 + $0x68] sm:$0xff] %vm375, %v573
      %590 = vst.msk [vmem:[%s307 + $0x70] sm:$0xff] %vm375, %v574
      %591 = vst.msk [vmem:[%s307 + $0x78] sm:$0xff] %vm375, %v575
      %s592 = smul.u32 8, %s22
      %p593 = scmp.lt.s32.totalorder %s21, 1
      %s594 = scalar_select %p593, %s21, 1
      %p595 = scmp.lt.s32.totalorder %s592, 15
      %s596 = scalar_select %p595, %s592, 15
      %s597 = smul.addr %s596, 2
      %s598 = smul.addr %s594, 32
      %s599 = sadd.s32 %s597, %s598
      %s600 = smul.addr %s599, 8
      %s601 = scalar_lea.vmem %s5, %s600
      // Predicated region
      $region41: #{generator_forward.13} parent=39 // pred_check
        %p602 = pneg %p168
      $region42: #{generator_forward.13} parent=39 // pred_check_branch
        %604 = sbr.rel (%p602) target = $region44
      $region43: #{generator_forward.13} parent=39 // pred_region
        %s605 = smul.u32 8, %s22
      $region44: #{generator_forward.13} parent=39 // pred_fallthru
        _
    $region40: #{generator_forward.13} parent=5 // pred_fallthru
      _
    %p606 = scmp.le.s32.totalorder 2, %s12
    // Predicated region
    $region45: #{generator_forward.13} parent=5 // pred_check
      %p607 = pneg %p606
    $region46: #{generator_forward.13} parent=5 // pred_check_branch
      %609 = sbr.rel (%p607) target = $region48
    $region47: #{generator_forward.13} parent=5 // pred_region
      %s610 = ssub.s32 %s12, 2
      // Predicated region
      $region49: #{generator_forward.13} parent=47 // pred_check
        %p611 = pneg %p174
      $region50: #{generator_forward.13} parent=47 // pred_check_branch
        %613 = sbr.rel (%p611) target = $region52
      $region51: #{generator_forward.13} parent=47 // pred_region
        %s614 = smul.u32 8, %s24
        %p615 = scmp.lt.s32.totalorder %s23, 1
        %s616 = scalar_select %p615, %s23, 1
        %p617 = scmp.lt.s32.totalorder %s614, 15
        %s618 = scalar_select %p617, %s614, 15
        %s619 = smul.addr %s618, 2
        %s620 = smul.addr %s616, 32
        %s621 = sadd.s32 %s619, %s620
        %s622 = smul.addr %s621, 8
        %s623 = scalar_lea.vmem %s5, %s622
      $region52: #{generator_forward.13} parent=47 // pred_fallthru
        _
    $region48: #{generator_forward.13} parent=5 // pred_fallthru
      _
  $region6: #{generator_forward.13} parent=0 // loop_footer
    %s16 = sadd.s32 1, %s12
  $region7: #{generator_forward.13} parent=0 // loop_footer_branch
    %11 = sbr.rel target = $region3
  $region8: #{generator_forward.13} parent=0 // loop_exit
    _

// kernel: generator_forward.12
$region0: #{generator_forward.12}
  #allocation0 [shape = 'u32[]', space=smem, size = 0x4, offset = 0x4, fixed_abs, tag = 'smem constant byte address 0x4 - core index']
  #allocation1 [shape = 'u32[144,128]{1,0:T(1,128)}', space=vmem, size = 0x12000, scoped, tag = 'internal scratch']
  #allocation2 [shape = 'bf16[18,18,4]{2,1,0:T(8,128)(2,1)}', space=vmem, size = 0x1b000, scoped, tag = 'scratch operand']
  %s0 = inlined_call_operand.vmem [shape: bf16[2,16,16,4], index: 0, kind: input, shape index: {}]
  %s1 = inlined_call_operand.vmem [shape: bf16[36,4], index: 1, kind: input, shape index: {}]
  %s2 = inlined_call_operand.vmem [shape: f32[1,4], index: 2, kind: input, shape index: {}]
  %s3 = inlined_call_operand.vmem [shape: bf16[2,16,16,4], index: 3, kind: output, shape index: {}]
  %s4 = sld [smem:[#allocation0]]
  $region49: #{generator_forward.12} parent=0
    _
  %s6 = ssub.s32 1, %s4
  %s7 = scalar_select 0, %s6, %s4
  loop: start=0, step=1, limit=6
  $region2: #{generator_forward.12} parent=0 // loop_pre_header
    _
  $region3: #{generator_forward.12} parent=0 // loop_header
    %s9 = sphi 0, %s13
    %p10 = scmp.ge.s32.totalorder %s9, 6
    %s16 = sphi 0, %s28
    %s17 = sphi 0, %s24
    %s18 = sphi 0, %s16
    %s19 = sphi 0, %s17
    %s20 = sphi 0, %s18
    %s21 = sphi 0, %s19
    %s31 = sphi 0, %s33
    %s34 = sphi 0, %s31
    %s35 = sphi 0, %s34
    %s51 = sphi 0, %s35
    %s55 = sphi 0, %s55
    %s57 = sphi 0, %s55
    %s58 = sphi 0, %s57
    %s72 = sphi 0, %s58
    %s76 = sphi 0, %s76
    %s78 = sphi 0, %s76
    %s79 = sphi 0, %s78
    %s93 = sphi 0, %s79
    %s101 = sphi 0, %s103
    %s104 = sphi 0, %s101
    %s105 = sphi 0, %s104
    %s121 = sphi 0, %s105
  $region4: #{generator_forward.12} parent=0 // loop_header_branch
    %12 = sbr.rel (%p10) target = $region8
  $region5: #{generator_forward.12} parent=0 // loop_body
    %s14 = ssub.s32 %s9, 1
    %s15 = ssub.s32 %s9, 2
    %s22 = sadd.s32 1, %s17
    %p23 = scmp.ge.s32.totalorder %s22, 2
    %s24 = scalar_select %p23, 0, %s22
    %s25 = sadd.s32 1, %s16
    %s26 = scalar_select %p23, %s25, %s16
    %p27 = scmp.ge.s32.totalorder %s26, 2
    %s28 = scalar_select %p27, 0, %s26
    %s29 = ssub.s32 %s16, %s28
    %p30 = scmp.eq.s32.totalorder %s29, 0
    %s32 = sadd.s32 %s31, 1
    %s33 = scalar_select %p30, %s31, %s32
    %p36 = pneg %p30
    %p37 = scmp.eq.s32.totalorder %s9, 3
    %p38 = por %p36, %p37
    %p39 = scmp.ne.s32.totalorder %s31, %s34
    %p40 = scmp.eq.s32.totalorder %s9, 0
    %p41 = por %p39, %p40
    %p42 = scmp.ne.s32.totalorder %s31, %s34
    %p43 = scmp.eq.s32.totalorder %s14, 3
    %p44 = por %p42, %p43
    %p45 = scmp.ne.s32.totalorder %s34, %s35
    %p46 = scmp.eq.s32.totalorder %s14, 0
    %p47 = por %p45, %p46
    %p48 = scmp.ne.s32.totalorder %s34, %s35
    %p49 = scmp.eq.s32.totalorder %s15, 3
    %p50 = por %p48, %p49
    %p52 = scmp.ne.s32.totalorder %s35, %s51
    %p53 = scmp.eq.s32.totalorder %s15, 0
    %p54 = por %p52, %p53
    %s56 = sadd.s32 %s55, 1
    %p59 = scmp.eq.s32.totalorder %s9, 3
    %p60 = scmp.ne.s32.totalorder %s55, %s57
    %p61 = scmp.eq.s32.totalorder %s9, 0
    %p62 = por %p60, %p61
    %p63 = scmp.ne.s32.totalorder %s55, %s57
    %p64 = scmp.eq.s32.totalorder %s14, 3
    %p65 = por %p63, %p64
    %p66 = scmp.ne.s32.totalorder %s57, %s58
    %p67 = scmp.eq.s32.totalorder %s14, 0
    %p68 = por %p66, %p67
    %p69 = scmp.ne.s32.totalorder %s57, %s58
    %p70 = scmp.eq.s32.totalorder %s15, 3
    %p71 = por %p69, %p70
    %p73 = scmp.ne.s32.totalorder %s58, %s72
    %p74 = scmp.eq.s32.totalorder %s15, 0
    %p75 = por %p73, %p74
    %s77 = sadd.s32 %s76, 1
    %p80 = scmp.eq.s32.totalorder %s9, 3
    %p81 = scmp.ne.s32.totalorder %s76, %s78
    %p82 = scmp.eq.s32.totalorder %s9, 0
    %p83 = por %p81, %p82
    %p84 = scmp.ne.s32.totalorder %s76, %s78
    %p85 = scmp.eq.s32.totalorder %s14, 3
    %p86 = por %p84, %p85
    %p87 = scmp.ne.s32.totalorder %s78, %s79
    %p88 = scmp.eq.s32.totalorder %s14, 0
    %p89 = por %p87, %p88
    %p90 = scmp.ne.s32.totalorder %s78, %s79
    %p91 = scmp.eq.s32.totalorder %s15, 3
    %p92 = por %p90, %p91
    %p94 = scmp.ne.s32.totalorder %s79, %s93
    %p95 = scmp.eq.s32.totalorder %s15, 0
    %p96 = por %p94, %p95
    %s97 = ssub.s32 %s16, %s28
    %s98 = ssub.s32 %s17, %s24
    %s99 = sor.u32 %s97, %s98
    %p100 = scmp.eq.s32.totalorder %s99, 0
    %s102 = sadd.s32 %s101, 1
    %s103 = scalar_select %p100, %s101, %s102
    %p106 = pneg %p100
    %p107 = scmp.eq.s32.totalorder %s9, 3
    %p108 = por %p106, %p107
    %p109 = scmp.ne.s32.totalorder %s101, %s104
    %p110 = scmp.eq.s32.totalorder %s9, 0
    %p111 = por %p109, %p110
    %p112 = scmp.ne.s32.totalorder %s101, %s104
    %p113 = scmp.eq.s32.totalorder %s14, 3
    %p114 = por %p112, %p113
    %p115 = scmp.ne.s32.totalorder %s104, %s105
    %p116 = scmp.eq.s32.totalorder %s14, 0
    %p117 = por %p115, %p116
    %p118 = scmp.ne.s32.totalorder %s104, %s105
    %p119 = scmp.eq.s32.totalorder %s15, 3
    %p120 = por %p118, %p119
    %p122 = scmp.ne.s32.totalorder %s105, %s121
    %p123 = scmp.eq.s32.totalorder %s15, 0
    %p124 = por %p122, %p123
    %p125 = scmp.le.s32.totalorder 1, %s9
    %p126 = scmp.lt.s32.totalorder %s9, 5
    %p127 = pnand %p125, %p126
    %p128 = pneg %p127
    // Predicated region
    $region9: #{generator_forward.12} parent=5 // pred_check
      _
    $region10: #{generator_forward.12} parent=5 // pred_check_branch
      %130 = sbr.rel (%p127) target = $region12
    $region11: #{generator_forward.12} parent=5 // pred_region
      %s131 = ssub.s32 %s9, 1
      // Predicated region
      $region13: #{generator_forward.12} parent=11 // pred_check
        %p132 = pneg %p68
      $region14: #{generator_forward.12} parent=11 // pred_check_branch
        %134 = sbr.rel (%p132) target = $region16
      $region15: #{generator_forward.12} parent=11 // pred_region
        _
      $region16: #{generator_forward.12} parent=11 // pred_fallthru
        _
      // Predicated region
      $region17: #{generator_forward.12} parent=11 // pred_check
        %p135 = pneg %p89
      $region18: #{generator_forward.12} parent=11 // pred_check_branch
        %137 = sbr.rel (%p135) target = $region20
      $region19: #{generator_forward.12} parent=11 // pred_region
        _
      $region20: #{generator_forward.12} parent=11 // pred_fallthru
        _
    $region12: #{generator_forward.12} parent=5 // pred_fallthru
      _
    %p138 = scmp.lt.s32.totalorder %s9, 4
    // Predicated region
    $region21: #{generator_forward.12} parent=5 // pred_check
      %p139 = pneg %p138
    $region22: #{generator_forward.12} parent=5 // pred_check_branch
      %141 = sbr.rel (%p139) target = $region24
    $region23: #{generator_forward.12} parent=5 // pred_region
      // Predicated region
      $region25: #{generator_forward.12} parent=23 // pred_check
        %p142 = pneg %p41
      $region26: #{generator_forward.12} parent=23 // pred_check_branch
        %144 = sbr.rel (%p142) target = $region28
      $region27: #{generator_forward.12} parent=23 // pred_region
        %p145 = scmp.lt.s32.totalorder %s16, 1
        %s146 = scalar_select %p145, %s16, 1
        %s147 = smul.addr %s146, 32
        %s148 = smul.addr %s147, 4
        %s149 = scalar_lea.vmem %s0, %s148
      $region28: #{generator_forward.12} parent=23 // pred_fallthru
        _
    $region24: #{generator_forward.12} parent=5 // pred_fallthru
      _
    %p150 = scmp.le.s32.totalorder 1, %s9
    %p151 = scmp.lt.s32.totalorder %s9, 5
    %p152 = pnand %p150, %p151
    %p153 = pneg %p152
    // Predicated region
    $region29: #{generator_forward.12} parent=5 // pred_check
      _
    $region30: #{generator_forward.12} parent=5 // pred_check_branch
      %155 = sbr.rel (%p152) target = $region32
    $region31: #{generator_forward.12} parent=5 // pred_region
      %s156 = ssub.s32 %s9, 1
      %p157 = scmp.lt.s32.totalorder %s18, 1
      %s158 = scalar_select %p157, %s18, 1
      %s159 = smul.addr %s158, 32
      %s160 = smul.addr %s159, 4
      %s161 = scalar_lea.vmem %s0, %s160
      %p162 = pneg %p47
      %p163 = pneg %p44
      %p164 = pneg %p68
      %p165 = pneg %p65
      %p166 = pneg %p89
      %p167 = pneg %p86
      %p168 = pneg %p117
      %p169 = pneg %p114
      %s170 = smul.u32 8, %s19
      %p171 = scmp.lt.s32.totalorder %s18, 1
      %s172 = scalar_select %p171, %s18, 1
      %p173 = scmp.lt.s32.totalorder %s170, 15
      %s174 = scalar_select %p173, %s170, 15
      %s175 = smul.addr %s174, 2
      %s176 = smul.addr %s172, 32
      %s177 = sadd.s32 %s175, %s176
      %s178 = smul.addr %s177, 4
      %s179 = scalar_lea.vmem %s3, %s178
      %p180 = scmp.lt.s32.totalorder %s18, 1
      %s181 = scalar_select %p180, %s18, 1
      %s182 = smul.addr %s181, 32
      %s183 = smul.addr %s182, 4
      %s184 = scalar_lea.vmem %s0, %s183
      %s185 = smul.u32 8, %s19
      %p186 = scmp.lt.s32.totalorder %s18, 1
      %s187 = scalar_select %p186, %s18, 1
      %p188 = scmp.lt.s32.totalorder %s185, 15
      %s189 = scalar_select %p188, %s185, 15
      %s190 = smul.addr %s189, 2
      %s191 = smul.addr %s187, 32
      %s192 = sadd.s32 %s190, %s191
      %s193 = smul.addr %s192, 4
      %s194 = scalar_lea.vmem %s3, %s193
      %s195 = smul.u32 8, %s19
      %p197 = scmp.eq.s32.totalorder %s19, 0
      // Predicated region
      $region33: #{generator_forward.12} parent=31 // pred_check
        %p198 = pneg %p197
      $region34: #{generator_forward.12} parent=31 // pred_check_branch
        %200 = sbr.rel (%p198) target = $region36
      $region35: #{generator_forward.12} parent=31 // pred_region
        %vm201 = vcmask 27648
        %202 = vst.msk [vmem:[#allocation2] sm:$0xf] %vm201, 0
        %203 = vst.msk [vmem:[#allocation2 + $0x4] sm:$0xf] %vm201, 0
        %vm204 = vcmask 24576
        %205 = vst.msk [vmem:[#allocation2 + $0x8] sm:$0x1] %vm204, 0
        %206 = vst.msk [vmem:[#allocation2 + $0xc] sm:$0xf] %vm201, 0
        %207 = vst.msk [vmem:[#allocation2 + $0x10] sm:$0xf] %vm201, 0
        %208 = vst.msk [vmem:[#allocation2 + $0x14] sm:$0x1] %vm204, 0
        %209 = vst.msk [vmem:[#allocation2 + $0x18] sm:$0xf] %vm201, 0
        %210 = vst.msk [vmem:[#allocation2 + $0x1c] sm:$0xf] %vm201, 0
        %211 = vst.msk [vmem:[#allocation2 + $0x20] sm:$0x1] %vm204, 0
        %212 = vst.msk [vmem:[#allocation2 + $0x24] sm:$0xf] %vm201, 0
        %213 = vst.msk [vmem:[#allocation2 + $0x28] sm:$0xf] %vm201, 0
        %214 = vst.msk [vmem:[#allocation2 + $0x2c] sm:$0x1] %vm204, 0
        %215 = vst.msk [vmem:[#allocation2 + $0x30] sm:$0xf] %vm201, 0
        %216 = vst.msk [vmem:[#allocation2 + $0x34] sm:$0xf] %vm201, 0
        %217 = vst.msk [vmem:[#allocation2 + $0x38] sm:$0x1] %vm204, 0
        %218 = vst.msk [vmem:[#allocation2 + $0x3c] sm:$0xf] %vm201, 0
        %219 = vst.msk [vmem:[#allocation2 + $0x40] sm:$0xf] %vm201, 0
        %220 = vst.msk [vmem:[#allocation2 + $0x44] sm:$0x1] %vm204, 0
        %221 = vst.msk [vmem:[#allocation2 + $0x48] sm:$0xf] %vm201, 0
        %222 = vst.msk [vmem:[#allocation2 + $0x4c] sm:$0xf] %vm201, 0
        %223 = vst.msk [vmem:[#allocation2 + $0x50] sm:$0x1] %vm204, 0
        %224 = vst.msk [vmem:[#allocation2 + $0x54] sm:$0xf] %vm201, 0
        %225 = vst.msk [vmem:[#allocation2 + $0x58] sm:$0xf] %vm201, 0
        %226 = vst.msk [vmem:[#allocation2 + $0x5c] sm:$0x1] %vm204, 0
        %227 = vst.msk [vmem:[#allocation2 + $0x60] sm:$0xf] %vm201, 0
        %228 = vst.msk [vmem:[#allocation2 + $0x64] sm:$0xf] %vm201, 0
        %229 = vst.msk [vmem:[#allocation2 + $0x68] sm:$0x1] %vm204, 0
        %230 = vst.msk [vmem:[#allocation2 + $0x6c] sm:$0xf] %vm201, 0
        %231 = vst.msk [vmem:[#allocation2 + $0x70] sm:$0xf] %vm201, 0
        %232 = vst.msk [vmem:[#allocation2 + $0x74] sm:$0x1] %vm204, 0
        %233 = vst.msk [vmem:[#allocation2 + $0x78] sm:$0xf] %vm201, 0
        %234 = vst.msk [vmem:[#allocation2 + $0x7c] sm:$0xf] %vm201, 0
        %235 = vst.msk [vmem:[#allocation2 + $0x80] sm:$0x1] %vm204, 0
        %236 = vst.msk [vmem:[#allocation2 + $0x84] sm:$0xf] %vm201, 0
        %237 = vst.msk [vmem:[#allocation2 + $0x88] sm:$0xf] %vm201, 0
        %238 = vst.msk [vmem:[#allocation2 + $0x8c] sm:$0x1] %vm204, 0
        %239 = vst.msk [vmem:[#allocation2 + $0x90] sm:$0xf] %vm201, 0
        %240 = vst.msk [vmem:[#allocation2 + $0x94] sm:$0xf] %vm201, 0
        %241 = vst.msk [vmem:[#allocation2 + $0x98] sm:$0x1] %vm204, 0
        %242 = vst.msk [vmem:[#allocation2 + $0x9c] sm:$0xf] %vm201, 0
        %243 = vst.msk [vmem:[#allocation2 + $0xa0] sm:$0xf] %vm201, 0
        %244 = vst.msk [vmem:[#allocation2 + $0xa4] sm:$0x1] %vm204, 0
        %245 = vst.msk [vmem:[#allocation2 + $0xa8] sm:$0xf] %vm201, 0
        %246 = vst.msk [vmem:[#allocation2 + $0xac] sm:$0xf] %vm201, 0
        %247 = vst.msk [vmem:[#allocation2 + $0xb0] sm:$0x1] %vm204, 0
        %248 = vst.msk [vmem:[#allocation2 + $0xb4] sm:$0xf] %vm201, 0
        %249 = vst.msk [vmem:[#allocation2 + $0xb8] sm:$0xf] %vm201, 0
        %250 = vst.msk [vmem:[#allocation2 + $0xbc] sm:$0x1] %vm204, 0
        %251 = vst.msk [vmem:[#allocation2 + $0xc0] sm:$0xf] %vm201, 0
        %252 = vst.msk [vmem:[#allocation2 + $0xc4] sm:$0xf] %vm201, 0
        %253 = vst.msk [vmem:[#allocation2 + $0xc8] sm:$0x1] %vm204, 0
        %254 = vst.msk [vmem:[#allocation2 + $0xcc] sm:$0xf] %vm201, 0
        %255 = vst.msk [vmem:[#allocation2 + $0xd0] sm:$0xf] %vm201, 0
        %256 = vst.msk [vmem:[#allocation2 + $0xd4] sm:$0x1] %vm204, 0
        %v257 = vld [vmem:[%s184] sm:$0xf]
        %v258 = vld [vmem:[%s184 + $0x4] sm:$0xf]
        %v259 = vld [vmem:[%s184 + $0x8] sm:$0xf]
        %v260 = vld [vmem:[%s184 + $0xc] sm:$0xf]
        %v261 = vld [vmem:[%s184 + $0x10] sm:$0xf]
        %v262 = vld [vmem:[%s184 + $0x14] sm:$0xf]
        %v263 = vld [vmem:[%s184 + $0x18] sm:$0xf]
        %v264 = vld [vmem:[%s184 + $0x1c] sm:$0xf]
        %v265 = vld [vmem:[%s184 + $0x20] sm:$0xf]
        %v266 = vld [vmem:[%s184 + $0x24] sm:$0xf]
        %v267 = vld [vmem:[%s184 + $0x28] sm:$0xf]
        %v268 = vld [vmem:[%s184 + $0x2c] sm:$0xf]
        %v269 = vld [vmem:[%s184 + $0x30] sm:$0xf]
        %v270 = vld [vmem:[%s184 + $0x34] sm:$0xf]
        %v271 = vld [vmem:[%s184 + $0x38] sm:$0xf]
        %v272 = vld [vmem:[%s184 + $0x3c] sm:$0xf]
        %v273 = vld [vmem:[%s184 + $0x40] sm:$0xf]
        %v274 = vld [vmem:[%s184 + $0x44] sm:$0xf]
        %v275 = vld [vmem:[%s184 + $0x48] sm:$0xf]
        %v276 = vld [vmem:[%s184 + $0x4c] sm:$0xf]
        %v277 = vld [vmem:[%s184 + $0x50] sm:$0xf]
        %v278 = vld [vmem:[%s184 + $0x54] sm:$0xf]
        %v279 = vld [vmem:[%s184 + $0x58] sm:$0xf]
        %v280 = vld [vmem:[%s184 + $0x5c] sm:$0xf]
        %v281 = vld [vmem:[%s184 + $0x60] sm:$0xf]
        %v282 = vld [vmem:[%s184 + $0x64] sm:$0xf]
        %v283 = vld [vmem:[%s184 + $0x68] sm:$0xf]
        %v284 = vld [vmem:[%s184 + $0x6c] sm:$0xf]
        %v285 = vld [vmem:[%s184 + $0x70] sm:$0xf]
        %v286 = vld [vmem:[%s184 + $0x74] sm:$0xf]
        %v287 = vld [vmem:[%s184 + $0x78] sm:$0xf]
        %v288 = vld [vmem:[%s184 + $0x7c] sm:$0xf]
        %vm289 = vsmask.f32 256
        %vm290 = vsmask.f32 4368
        %vm291 = vmor %vm289, %vm290
        %v293 = vshrl.u32 %v257, 16
        %v295 = vrot.slane %v293, 7
        %v296 = vshll.u32 %v257, 16
        %v298 = vor.u32 %v295, %v296
        %v299 = vrot.slane %v295, 4
        %v301 = vshrl.u32 %v258, 16
        %v303 = vrot.slane %v301, 7
        %v304 = vshll.u32 %v258, 16
        %v306 = vor.u32 %v303, %v304
        %v307 = vsel %vm291, %v299, %v306
        %v308 = vrot.slane %v303, 4
        %v310 = vshrl.u32 %v259, 16
        %v312 = vrot.slane %v310, 7
        %v313 = vshll.u32 %v259, 16
        %v315 = vor.u32 %v312, %v313
        %v316 = vrot.slane %v312, 4
        %v318 = vshrl.u32 %v260, 16
        %v320 = vrot.slane %v318, 7
        %v321 = vshll.u32 %v260, 16
        %v323 = vor.u32 %v320, %v321
        %v324 = vsel %vm291, %v316, %v323
        %v325 = vrot.slane %v320, 4
        %v327 = vshrl.u32 %v261, 16
        %v329 = vrot.slane %v327, 7
        %v330 = vshll.u32 %v261, 16
        %v332 = vor.u32 %v329, %v330
        %v333 = vrot.slane %v329, 4
        %v335 = vshrl.u32 %v262, 16
        %v337 = vrot.slane %v335, 7
        %v338 = vshll.u32 %v262, 16
        %v340 = vor.u32 %v337, %v338
        %v341 = vsel %vm291, %v333, %v340
        %v342 = vrot.slane %v337, 4
        %v344 = vshrl.u32 %v263, 16
        %v346 = vrot.slane %v344, 7
        %v347 = vshll.u32 %v263, 16
        %v349 = vor.u32 %v346, %v347
        %v350 = vrot.slane %v346, 4
        %v352 = vshrl.u32 %v264, 16
        %v354 = vrot.slane %v352, 7
        %v355 = vshll.u32 %v264, 16
        %v357 = vor.u32 %v354, %v355
        %v358 = vsel %vm291, %v350, %v357
        %v359 = vrot.slane %v354, 4
        %v361 = vshrl.u32 %v265, 16
        %v363 = vrot.slane %v361, 7
        %v364 = vshll.u32 %v265, 16
        %v366 = vor.u32 %v363, %v364
        %v367 = vrot.slane %v363, 4
        %v369 = vshrl.u32 %v266, 16
        %v371 = vrot.slane %v369, 7
        %v372 = vshll.u32 %v266, 16
        %v374 = vor.u32 %v371, %v372
        %v375 = vsel %vm291, %v367, %v374
        %v376 = vrot.slane %v371, 4
        %v378 = vshrl.u32 %v267, 16
        %v380 = vrot.slane %v378, 7
        %v381 = vshll.u32 %v267, 16
        %v383 = vor.u32 %v380, %v381
        %v384 = vrot.slane %v380, 4
        %v386 = vshrl.u32 %v268, 16
        %v388 = vrot.slane %v386, 7
        %v389 = vshll.u32 %v268, 16
        %v391 = vor.u32 %v388, %v389
        %v392 = vsel %vm291, %v384, %v391
        %v393 = vrot.slane %v388, 4
        %v395 = vshrl.u32 %v269, 16
        %v397 = vrot.slane %v395, 7
        %v398 = vshll.u32 %v269, 16
        %v400 = vor.u32 %v397, %v398
        %v401 = vrot.slane %v397, 4
        %v403 = vshrl.u32 %v270, 16
        %v405 = vrot.slane %v403, 7
        %v406 = vshll.u32 %v270, 16
        %v408 = vor.u32 %v405, %v406
        %v409 = vsel %vm291, %v401, %v408
        %v410 = vrot.slane %v405, 4
        %v412 = vshrl.u32 %v271, 16
        %v414 = vrot.slane %v412, 7
        %v415 = vshll.u32 %v271, 16
        %v417 = vor.u32 %v414, %v415
        %v418 = vrot.slane %v414, 4
        %v420 = vshrl.u32 %v272, 16
        %v422 = vrot.slane %v420, 7
        %v423 = vshll.u32 %v272, 16
        %v425 = vor.u32 %v422, %v423
        %v426 = vsel %vm291, %v418, %v425
        %v427 = vrot.slane %v422, 4
        %v429 = vshrl.u32 %v273, 16
        %v431 = vrot.slane %v429, 7
        %v432 = vshll.u32 %v273, 16
        %v434 = vor.u32 %v431, %v432
        %v435 = vrot.slane %v431, 4
        %v437 = vshrl.u32 %v274, 16
        %v439 = vrot.slane %v437, 7
        %v440 = vshll.u32 %v274, 16
        %v442 = vor.u32 %v439, %v440
        %v443 = vsel %vm291, %v435, %v442
        %v444 = vrot.slane %v439, 4
        %v446 = vshrl.u32 %v275, 16
        %v448 = vrot.slane %v446, 7
        %v449 = vshll.u32 %v275, 16
        %v451 = vor.u32 %v448, %v449
        %v452 = vrot.slane %v448, 4
        %v454 = vshrl.u32 %v276, 16
        %v456 = vrot.slane %v454, 7
        %v457 = vshll.u32 %v276, 16
        %v459 = vor.u32 %v456, %v457
        %v460 = vsel %vm291, %v452, %v459
        %v461 = vrot.slane %v456, 4
        %v463 = vshrl.u32 %v277, 16
        %v465 = vrot.slane %v463, 7
        %v466 = vshll.u32 %v277, 16
        %v468 = vor.u32 %v465, %v466
        %v469 = vrot.slane %v465, 4
        %v471 = vshrl.u32 %v278, 16
        %v473 = vrot.slane %v471, 7
        %v474 = vshll.u32 %v278, 16
        %v476 = vor.u32 %v473, %v474
        %v477 = vsel %vm291, %v469, %v476
        %v478 = vrot.slane %v473, 4
        %v480 = vshrl.u32 %v279, 16
        %v482 = vrot.slane %v480, 7
        %v483 = vshll.u32 %v279, 16
        %v485 = vor.u32 %v482, %v483
        %v486 = vrot.slane %v482, 4
        %v488 = vshrl.u32 %v280, 16
        %v490 = vrot.slane %v488, 7
        %v491 = vshll.u32 %v280, 16
        %v493 = vor.u32 %v490, %v491
        %v494 = vsel %vm291, %v486, %v493
        %v495 = vrot.slane %v490, 4
        %v497 = vshrl.u32 %v281, 16
        %v499 = vrot.slane %v497, 7
        %v500 = vshll.u32 %v281, 16
        %v502 = vor.u32 %v499, %v500
        %v503 = vrot.slane %v499, 4
        %v505 = vshrl.u32 %v282, 16
        %v507 = vrot.slane %v505, 7
        %v508 = vshll.u32 %v282, 16
        %v510 = vor.u32 %v507, %v508
        %v511 = vsel %vm291, %v503, %v510
        %v512 = vrot.slane %v507, 4
        %v514 = vshrl.u32 %v283, 16
        %v516 = vrot.slane %v514, 7
        %v517 = vshll.u32 %v283, 16
        %v519 = vor.u32 %v516, %v517
        %v520 = vrot.slane %v516, 4
        %v522 = vshrl.u32 %v284, 16
        %v524 = vrot.slane %v522, 7
        %v525 = vshll.u32 %v284, 16
        %v527 = vor.u32 %v524, %v525
        %v528 = vsel %vm291, %v520, %v527
        %v529 = vrot.slane %v524, 4
        %v531 = vshrl.u32 %v285, 16
        %v533 = vrot.slane %v531, 7
        %v534 = vshll.u32 %v285, 16
        %v536 = vor.u32 %v533, %v534
        %v537 = vrot.slane %v533, 4
        %v539 = vshrl.u32 %v286, 16
        %v541 = vrot.slane %v539, 7
        %v542 = vshll.u32 %v286, 16
        %v544 = vor.u32 %v541, %v542
        %v545 = vsel %vm291, %v537, %v544
        %v546 = vrot.slane %v541, 4
        %v548 = vshrl.u32 %v287, 16
        %v550 = vrot.slane %v548, 7
        %v551 = vshll.u32 %v287, 16
        %v553 = vor.u32 %v550, %v551
        %v554 = vrot.slane %v550, 4
        %v556 = vshrl.u32 %v288, 16
        %v558 = vrot.slane %v556, 7
        %v559 = vshll.u32 %v288, 16
        %v561 = vor.u32 %v558, %v559
        %v562 = vsel %vm291, %v554, %v561
        %v563 = vrot.slane %v558, 4
        %s612 = scalar_lea.vmem [#allocation2], 12
        %vm613 = vcmask 27648
        %vm614 = vsmask.f32 7938
        %vm615 = vmand %vm613, %vm614
        %v616 = vld [vmem:[%s612] sm:$0xf]
        %v617 = vsel %vm615, %v298, %v616
        %618 = vst [vmem:[%s612] sm:$0xf] %v617
        %619 = vst.msk [vmem:[%s612 + $0x4] sm:$0xf] %vm201, %v307
        %vm620 = vcmask 24576
        %vm621 = vmand %vm620, %vm289
        %v622 = vld [vmem:[%s612 + $0x8] sm:$0x1]
        %v623 = vsel %vm621, %v308, %v622
        %624 = vst [vmem:[%s612 + $0x8] sm:$0x1] %v623
        %v625 = vld [vmem:[%s612 + $0xc] sm:$0xf]
        %v626 = vsel %vm615, %v315, %v625
        %627 = vst [vmem:[%s612 + $0xc] sm:$0xf] %v626
        %628 = vst.msk [vmem:[%s612 + $0x10] sm:$0xf] %vm201, %v324
        %v629 = vld [vmem:[%s612 + $0x14] sm:$0x1]
        %v630 = vsel %vm621, %v325, %v629
        %631 = vst [vmem:[%s612 + $0x14] sm:$0x1] %v630
        %v632 = vld [vmem:[%s612 + $0x18] sm:$0xf]
        %v633 = vsel %vm615, %v332, %v632
        %634 = vst [vmem:[%s612 + $0x18] sm:$0xf] %v633
        %635 = vst.msk [vmem:[%s612 + $0x1c] sm:$0xf] %vm201, %v341
        %v636 = vld [vmem:[%s612 + $0x20] sm:$0x1]
        %v637 = vsel %vm621, %v342, %v636
        %638 = vst [vmem:[%s612 + $0x20] sm:$0x1] %v637
        %v639 = vld [vmem:[%s612 + $0x24] sm:$0xf]
        %v640 = vsel %vm615, %v349, %v639
        %641 = vst [vmem:[%s612 + $0x24] sm:$0xf] %v640
        %642 = vst.msk [vmem:[%s612 + $0x28] sm:$0xf] %vm201, %v358
        %v643 = vld [vmem:[%s612 + $0x2c] sm:$0x1]
        %v644 = vsel %vm621, %v359, %v643
        %645 = vst [vmem:[%s612 + $0x2c] sm:$0x1] %v644
        %v646 = vld [vmem:[%s612 + $0x30] sm:$0xf]
        %v647 = vsel %vm615, %v366, %v646
        %648 = vst [vmem:[%s612 + $0x30] sm:$0xf] %v647
        %649 = vst.msk [vmem:[%s612 + $0x34] sm:$0xf] %vm201, %v375
        %v650 = vld [vmem:[%s612 + $0x38] sm:$0x1]
        %v651 = vsel %vm621, %v376, %v650
        %652 = vst [vmem:[%s612 + $0x38] sm:$0x1] %v651
        %v653 = vld [vmem:[%s612 + $0x3c] sm:$0xf]
        %v654 = vsel %vm615, %v383, %v653
        %655 = vst [vmem:[%s612 + $0x3c] sm:$0xf] %v654
        %656 = vst.msk [vmem:[%s612 + $0x40] sm:$0xf] %vm201, %v392
        %v657 = vld [vmem:[%s612 + $0x44] sm:$0x1]
        %v658 = vsel %vm621, %v393, %v657
        %659 = vst [vmem:[%s612 + $0x44] sm:$0x1] %v658
        %v660 = vld [vmem:[%s612 + $0x48] sm:$0xf]
        %v661 = vsel %vm615, %v400, %v660
        %662 = vst [vmem:[%s612 + $0x48] sm:$0xf] %v661
        %663 = vst.msk [vmem:[%s612 + $0x4c] sm:$0xf] %vm201, %v409
        %v664 = vld [vmem:[%s612 + $0x50] sm:$0x1]
        %v665 = vsel %vm621, %v410, %v664
        %666 = vst [vmem:[%s612 + $0x50] sm:$0x1] %v665
        %v667 = vld [vmem:[%s612 + $0x54] sm:$0xf]
        %v668 = vsel %vm615, %v417, %v667
        %669 = vst [vmem:[%s612 + $0x54] sm:$0xf] %v668
        %670 = vst.msk [vmem:[%s612 + $0x58] sm:$0xf] %vm201, %v426
        %v671 = vld [vmem:[%s612 + $0x5c] sm:$0x1]
        %v672 = vsel %vm621, %v427, %v671
        %673 = vst [vmem:[%s612 + $0x5c] sm:$0x1] %v672
        %v674 = vld [vmem:[%s612 + $0x60] sm:$0xf]
        %v675 = vsel %vm615, %v434, %v674
        %676 = vst [vmem:[%s612 + $0x60] sm:$0xf] %v675
        %677 = vst.msk [vmem:[%s612 + $0x64] sm:$0xf] %vm201, %v443
        %v678 = vld [vmem:[%s612 + $0x68] sm:$0x1]
        %v679 = vsel %vm621, %v444, %v678
        %680 = vst [vmem:[%s612 + $0x68] sm:$0x1] %v679
        %v681 = vld [vmem:[%s612 + $0x6c] sm:$0xf]
        %v682 = vsel %vm615, %v451, %v681
        %683 = vst [vmem:[%s612 + $0x6c] sm:$0xf] %v682
        %684 = vst.msk [vmem:[%s612 + $0x70] sm:$0xf] %vm201, %v460
        %v685 = vld [vmem:[%s612 + $0x74] sm:$0x1]
        %v686 = vsel %vm621, %v461, %v685
        %687 = vst [vmem:[%s612 + $0x74] sm:$0x1] %v686
        %v688 = vld [vmem:[%s612 + $0x78] sm:$0xf]
        %v689 = vsel %vm615, %v468, %v688
        %690 = vst [vmem:[%s612 + $0x78] sm:$0xf] %v689
        %691 = vst.msk [vmem:[%s612 + $0x7c] sm:$0xf] %vm201, %v477
        %v692 = vld [vmem:[%s612 + $0x80] sm:$0x1]
        %v693 = vsel %vm621, %v478, %v692
        %694 = vst [vmem:[%s612 + $0x80] sm:$0x1] %v693
        %v695 = vld [vmem:[%s612 + $0x84] sm:$0xf]
        %v696 = vsel %vm615, %v485, %v695
        %697 = vst [vmem:[%s612 + $0x84] sm:$0xf] %v696
        %698 = vst.msk [vmem:[%s612 + $0x88] sm:$0xf] %vm201, %v494
        %v699 = vld [vmem:[%s612 + $0x8c] sm:$0x1]
        %v700 = vsel %vm621, %v495, %v699
        %701 = vst [vmem:[%s612 + $0x8c] sm:$0x1] %v700
        %v702 = vld [vmem:[%s612 + $0x90] sm:$0xf]
        %v703 = vsel %vm615, %v502, %v702
        %704 = vst [vmem:[%s612 + $0x90] sm:$0xf] %v703
        %705 = vst.msk [vmem:[%s612 + $0x94] sm:$0xf] %vm201, %v511
        %v706 = vld [vmem:[%s612 + $0x98] sm:$0x1]
        %v707 = vsel %vm621, %v512, %v706
        %708 = vst [vmem:[%s612 + $0x98] sm:$0x1] %v707
        %v709 = vld [vmem:[%s612 + $0x9c] sm:$0xf]
        %v710 = vsel %vm615, %v519, %v709
        %711 = vst [vmem:[%s612 + $0x9c] sm:$0xf] %v710
        %712 = vst.msk [vmem:[%s612 + $0xa0] sm:$0xf] %vm201, %v528
        %v713 = vld [vmem:[%s612 + $0xa4] sm:$0x1]
        %v714 = vsel %vm621, %v529, %v713
        %715 = vst [vmem:[%s612 + $0xa4] sm:$0x1] %v714
        %v716 = vld [vmem:[%s612 + $0xa8] sm:$0xf]
        %v717 = vsel %vm615, %v536, %v716
        %718 = vst [vmem:[%s612 + $0xa8] sm:$0xf] %v717
        %719 = vst.msk [vmem:[%s612 + $0xac] sm:$0xf] %vm201, %v545
        %v720 = vld [vmem:[%s612 + $0xb0] sm:$0x1]
        %v721 = vsel %vm621, %v546, %v720
        %722 = vst [vmem:[%s612 + $0xb0] sm:$0x1] %v721
        %v723 = vld [vmem:[%s612 + $0xb4] sm:$0xf]
        %v724 = vsel %vm615, %v553, %v723
        %725 = vst [vmem:[%s612 + $0xb4] sm:$0xf] %v724
        %726 = vst.msk [vmem:[%s612 + $0xb8] sm:$0xf] %vm201, %v562
        %v727 = vld [vmem:[%s612 + $0xbc] sm:$0x1]
        %v728 = vsel %vm621, %v563, %v727
        %729 = vst [vmem:[%s612 + $0xbc] sm:$0x1] %v728
      $region36: #{generator_forward.12} parent=31 // pred_fallthru
        _
      %s730 = smul.u32 %s19, 8
      %s731 = smul.u32 %s730, 3
      %s732 = smul.addr %s731, 4
      %s733 = scalar_lea.vmem [#allocation2], %s732
      %v734 = vld [vmem:[%s733] sm:$0xf]
      %v735 = vld [vmem:[%s733 + $0x4] sm:$0xf]
      %v736 = vld [vmem:[%s733 + $0x8] sm:$0x1]
      %v737 = vld [vmem:[%s733 + $0xc] sm:$0xf]
      %v738 = vld [vmem:[%s733 + $0x10] sm:$0xf]
      %v739 = vld [vmem:[%s733 + $0x14] sm:$0x1]
      %v740 = vld [vmem:[%s733 + $0x18] sm:$0xf]
      %v741 = vld [vmem:[%s733 + $0x1c] sm:$0xf]
      %v742 = vld [vmem:[%s733 + $0x20] sm:$0x1]
      %v743 = vld [vmem:[%s733 + $0x24] sm:$0xf]
      %v744 = vld [vmem:[%s733 + $0x28] sm:$0xf]
      %v745 = vld [vmem:[%s733 + $0x2c] sm:$0x1]
      %v746 = vld [vmem:[%s733 + $0x30] sm:$0xf]
      %v747 = vld [vmem:[%s733 + $0x34] sm:$0xf]
      %v748 = vld [vmem:[%s733 + $0x38] sm:$0x1]
      %v749 = vld [vmem:[%s733 + $0x3c] sm:$0xf]
      %v750 = vld [vmem:[%s733 + $0x40] sm:$0xf]
      %v751 = vld [vmem:[%s733 + $0x44] sm:$0x1]
      %v752 = vld [vmem:[%s733 + $0x48] sm:$0xf]
      %v753 = vld [vmem:[%s733 + $0x4c] sm:$0xf]
      %v754 = vld [vmem:[%s733 + $0x50] sm:$0x1]
      %v755 = vld [vmem:[%s733 + $0x54] sm:$0xf]
      %v756 = vld [vmem:[%s733 + $0x58] sm:$0xf]
      %v757 = vld [vmem:[%s733 + $0x5c] sm:$0x1]
      %v758 = vld [vmem:[%s733 + $0x60] sm:$0xf]
      %v759 = vld [vmem:[%s733 + $0x64] sm:$0xf]
      %v760 = vld [vmem:[%s733 + $0x68] sm:$0x1]
      %v761 = vld [vmem:[%s733 + $0x6c] sm:$0xf]
      %v762 = vld [vmem:[%s733 + $0x70] sm:$0xf]
      %v763 = vld [vmem:[%s733 + $0x74] sm:$0x1]
      %v780 = vunpack.c.l.b16 %v734
      %v781 = vunpack.c.l.b16 %v735
      %v782 = vunpack.c.l.b16 %v737
      %v783 = vunpack.c.l.b16 %v738
      %v784 = vunpack.c.l.b16 %v740
      %v785 = vunpack.c.l.b16 %v741
      %v786 = vunpack.c.l.b16 %v743
      %v787 = vunpack.c.l.b16 %v744
      %v788 = vunpack.c.l.b16 %v746
      %v789 = vunpack.c.l.b16 %v747
      %v790 = vunpack.c.l.b16 %v749
      %v791 = vunpack.c.l.b16 %v750
      %v792 = vunpack.c.l.b16 %v752
      %v793 = vunpack.c.l.b16 %v753
      %v794 = vunpack.c.l.b16 %v755
      %v795 = vunpack.c.l.b16 %v756
      %v796 = vpack.c.b16 %v781, %v780
      %v797 = vpack.c.b16 %v783, %v782
      %v798 = vpack.c.b16 %v785, %v784
      %v799 = vpack.c.b16 %v787, %v786
      %v800 = vpack.c.b16 %v789, %v788
      %v801 = vpack.c.b16 %v791, %v790
      %v802 = vpack.c.b16 %v793, %v792
      %v803 = vpack.c.b16 %v795, %v794
      %v812 = vunpack.c.l.b16 %v736
      %v813 = vunpack.c.l.b16 %v739
      %v814 = vunpack.c.l.b16 %v742
      %v815 = vunpack.c.l.b16 %v745
      %v816 = vunpack.c.l.b16 %v748
      %v817 = vunpack.c.l.b16 %v751
      %v818 = vunpack.c.l.b16 %v754
      %v819 = vunpack.c.l.b16 %v757
      %v820 = vpack.c.b16 %v812, %v812
      %v821 = vpack.c.b16 %v813, %v813
      %v822 = vpack.c.b16 %v814, %v814
      %v823 = vpack.c.b16 %v815, %v815
      %v824 = vpack.c.b16 %v816, %v816
      %v825 = vpack.c.b16 %v817, %v817
      %v826 = vpack.c.b16 %v818, %v818
      %v827 = vpack.c.b16 %v819, %v819
      %vm828 = vsmask.f32 7424
      %v830 = vshrl.u32 %v796, 16
      %v832 = vshll.u32 %v796, 16
      %v834 = vrot.slane %v832, 1
      %v835 = vor.u32 %v830, %v834
      %v837 = vshll.u32 %v820, 16
      %v839 = vrot.slane %v837, 1
      %v840 = vsel %vm828, %v835, %v839
      %v842 = vshrl.u32 %v797, 16
      %v844 = vshll.u32 %v797, 16
      %v846 = vrot.slane %v844, 1
      %v847 = vor.u32 %v842, %v846
      %v849 = vshll.u32 %v821, 16
      %v851 = vrot.slane %v849, 1
      %v852 = vsel %vm828, %v847, %v851
      %v854 = vshrl.u32 %v798, 16
      %v856 = vshll.u32 %v798, 16
      %v858 = vrot.slane %v856, 1
      %v859 = vor.u32 %v854, %v858
      %v861 = vshll.u32 %v822, 16
      %v863 = vrot.slane %v861, 1
      %v864 = vsel %vm828, %v859, %v863
      %v866 = vshrl.u32 %v799, 16
      %v868 = vshll.u32 %v799, 16
      %v870 = vrot.slane %v868, 1
      %v871 = vor.u32 %v866, %v870
      %v873 = vshll.u32 %v823, 16
      %v875 = vrot.slane %v873, 1
      %v876 = vsel %vm828, %v871, %v875
      %v878 = vshrl.u32 %v800, 16
      %v880 = vshll.u32 %v800, 16
      %v882 = vrot.slane %v880, 1
      %v883 = vor.u32 %v878, %v882
      %v885 = vshll.u32 %v824, 16
      %v887 = vrot.slane %v885, 1
      %v888 = vsel %vm828, %v883, %v887
      %v890 = vshrl.u32 %v801, 16
      %v892 = vshll.u32 %v801, 16
      %v894 = vrot.slane %v892, 1
      %v895 = vor.u32 %v890, %v894
      %v897 = vshll.u32 %v825, 16
      %v899 = vrot.slane %v897, 1
      %v900 = vsel %vm828, %v895, %v899
      %v902 = vshrl.u32 %v802, 16
      %v904 = vshll.u32 %v802, 16
      %v906 = vrot.slane %v904, 1
      %v907 = vor.u32 %v902, %v906
      %v909 = vshll.u32 %v826, 16
      %v911 = vrot.slane %v909, 1
      %v912 = vsel %vm828, %v907, %v911
      %v914 = vshrl.u32 %v803, 16
      %v916 = vshll.u32 %v803, 16
      %v918 = vrot.slane %v916, 1
      %v919 = vor.u32 %v914, %v918
      %v921 = vshll.u32 %v827, 16
      %v923 = vrot.slane %v921, 1
      %v924 = vsel %vm828, %v919, %v923
      %925 = vrot.lane.b32.xlu0 %v840, 4
      %v926 = vpop.permute.xlu0 %925
      %927 = vrot.lane.b32.xlu0 %v852, 4
      %v928 = vpop.permute.xlu0 %927
      %929 = vrot.lane.b32.xlu0 %v864, 4
      %v930 = vpop.permute.xlu0 %929
      %931 = vrot.lane.b32.xlu0 %v876, 4
      %v932 = vpop.permute.xlu0 %931
      %933 = vrot.lane.b32.xlu0 %v888, 4
      %v934 = vpop.permute.xlu0 %933
      %935 = vrot.lane.b32.xlu0 %v900, 4
      %v936 = vpop.permute.xlu0 %935
      %937 = vrot.lane.b32.xlu0 %v912, 4
      %v938 = vpop.permute.xlu0 %937
      %939 = vrot.lane.b32.xlu0 %v924, 4
      %v940 = vpop.permute.xlu0 %939
      %vm941 = vcmask 1046528
      %v942 = vrot.slane %v796, 1
      %v943 = vrot.slane %v820, 1
      %v944 = vsel %vm941, %v942, %v943
      %v945 = vrot.slane %v797, 1
      %v946 = vrot.slane %v821, 1
      %v947 = vsel %vm941, %v945, %v946
      %v948 = vrot.slane %v798, 1
      %v949 = vrot.slane %v822, 1
      %v950 = vsel %vm941, %v948, %v949
      %v951 = vrot.slane %v799, 1
      %v952 = vrot.slane %v823, 1
      %v953 = vsel %vm941, %v951, %v952
      %v954 = vrot.slane %v800, 1
      %v955 = vrot.slane %v824, 1
      %v956 = vsel %vm941, %v954, %v955
      %v957 = vrot.slane %v801, 1
      %v958 = vrot.slane %v825, 1
      %v959 = vsel %vm941, %v957, %v958
      %v960 = vrot.slane %v802, 1
      %v961 = vrot.slane %v826, 1
      %v962 = vsel %vm941, %v960, %v961
      %v963 = vrot.slane %v803, 1
      %v964 = vrot.slane %v827, 1
      %v965 = vsel %vm941, %v963, %v964
      %966 = vrot.lane.b32.xlu0 %v944, 8
      %v967 = vpop.permute.xlu0 %966
      %968 = vrot.lane.b32.xlu0 %v947, 8
      %v969 = vpop.permute.xlu0 %968
      %970 = vrot.lane.b32.xlu0 %v950, 8
      %v971 = vpop.permute.xlu0 %970
      %972 = vrot.lane.b32.xlu0 %v953, 8
      %v973 = vpop.permute.xlu0 %972
      %974 = vrot.lane.b32.xlu0 %v956, 8
      %v975 = vpop.permute.xlu0 %974
      %976 = vrot.lane.b32.xlu0 %v959, 8
      %v977 = vpop.permute.xlu0 %976
      %978 = vrot.lane.b32.xlu0 %v962, 8
      %v979 = vpop.permute.xlu0 %978
      %980 = vrot.lane.b32.xlu0 %v965, 8
      %v981 = vpop.permute.xlu0 %980
      %v984 = vunpack.c.l.b16 %v758
      %v985 = vunpack.c.l.b16 %v759
      %v986 = vpack.c.b16 %v985, %v984
      %987 = vrot.lane.b32.xlu0 %v797, 12
      %v988 = vpop.permute.xlu0 %987
      %989 = vrot.lane.b32.xlu0 %v798, 12
      %v990 = vpop.permute.xlu0 %989
      %991 = vrot.lane.b32.xlu0 %v799, 12
      %v992 = vpop.permute.xlu0 %991
      %993 = vrot.lane.b32.xlu0 %v800, 12
      %v994 = vpop.permute.xlu0 %993
      %995 = vrot.lane.b32.xlu0 %v801, 12
      %v996 = vpop.permute.xlu0 %995
      %997 = vrot.lane.b32.xlu0 %v802, 12
      %v998 = vpop.permute.xlu0 %997
      %999 = vrot.lane.b32.xlu0 %v803, 12
      %v1000 = vpop.permute.xlu0 %999
      %1001 = vrot.lane.b32.xlu0 %v986, 12
      %v1002 = vpop.permute.xlu0 %1001
      %v1004 = vunpack.c.l.b16 %v760
      %v1005 = vpack.c.b16 %v1004, %v1004
      %v1007 = vshrl.u32 %v986, 16
      %v1009 = vshll.u32 %v986, 16
      %v1011 = vrot.slane %v1009, 1
      %v1012 = vor.u32 %v1007, %v1011
      %v1014 = vshll.u32 %v1005, 16
      %v1016 = vrot.slane %v1014, 1
      %v1017 = vsel %vm828, %v1012, %v1016
      %1018 = vrot.lane.b32.xlu0 %v852, 16
      %v1019 = vpop.permute.xlu0 %1018
      %1020 = vrot.lane.b32.xlu0 %v864, 16
      %v1021 = vpop.permute.xlu0 %1020
      %1022 = vrot.lane.b32.xlu0 %v876, 16
      %v1023 = vpop.permute.xlu0 %1022
      %1024 = vrot.lane.b32.xlu0 %v888, 16
      %v1025 = vpop.permute.xlu0 %1024
      %1026 = vrot.lane.b32.xlu0 %v900, 16
      %v1027 = vpop.permute.xlu0 %1026
      %1028 = vrot.lane.b32.xlu0 %v912, 16
      %v1029 = vpop.permute.xlu0 %1028
      %1030 = vrot.lane.b32.xlu0 %v924, 16
      %v1031 = vpop.permute.xlu0 %1030
      %1032 = vrot.lane.b32.xlu0 %v1017, 16
      %v1033 = vpop.permute.xlu0 %1032
      %v1034 = vrot.slane %v986, 1
      %v1035 = vrot.slane %v1005, 1
      %v1036 = vsel %vm941, %v1034, %v1035
      %1037 = vrot.lane.b32.xlu0 %v947, 20
      %v1038 = vpop.permute.xlu0 %1037
      %1039 = vrot.lane.b32.xlu0 %v950, 20
      %v1040 = vpop.permute.xlu0 %1039
      %1041 = vrot.lane.b32.xlu0 %v953, 20
      %v1042 = vpop.permute.xlu0 %1041
      %1043 = vrot.lane.b32.xlu0 %v956, 20
      %v1044 = vpop.permute.xlu0 %1043
      %1045 = vrot.lane.b32.xlu0 %v959, 20
      %v1046 = vpop.permute.xlu0 %1045
      %1047 = vrot.lane.b32.xlu0 %v962, 20
      %v1048 = vpop.permute.xlu0 %1047
      %1049 = vrot.lane.b32.xlu0 %v965, 20
      %v1050 = vpop.permute.xlu0 %1049
      %1051 = vrot.lane.b32.xlu0 %v1036, 20
      %v1052 = vpop.permute.xlu0 %1051
      %v1055 = vunpack.c.l.b16 %v761
      %v1056 = vunpack.c.l.b16 %v762
      %v1057 = vpack.c.b16 %v1056, %v1055
      %1058 = vrot.lane.b32.xlu0 %v798, 24
      %v1059 = vpop.permute.xlu0 %1058
      %1060 = vrot.lane.b32.xlu0 %v799, 24
      %v1061 = vpop.permute.xlu0 %1060
      %1062 = vrot.lane.b32.xlu0 %v800, 24
      %v1063 = vpop.permute.xlu0 %1062
      %1064 = vrot.lane.b32.xlu0 %v801, 24
      %v1065 = vpop.permute.xlu0 %1064
      %1066 = vrot.lane.b32.xlu0 %v802, 24
      %v1067 = vpop.permute.xlu0 %1066
      %1068 = vrot.lane.b32.xlu0 %v803, 24
      %v1069 = vpop.permute.xlu0 %1068
      %1070 = vrot.lane.b32.xlu0 %v986, 24
      %v1071 = vpop.permute.xlu0 %1070
      %1072 = vrot.lane.b32.xlu0 %v1057, 24
      %v1073 = vpop.permute.xlu0 %1072
      %v1075 = vunpack.c.l.b16 %v763
      %v1076 = vpack.c.b16 %v1075, %v1075
      %v1078 = vshrl.u32 %v1057, 16
      %v1080 = vshll.u32 %v1057, 16
      %v1082 = vrot.slane %v1080, 1
      %v1083 = vor.u32 %v1078, %v1082
      %v1085 = vshll.u32 %v1076, 16
      %v1087 = vrot.slane %v1085, 1
      %v1088 = vsel %vm828, %v1083, %v1087
      %1089 = vrot.lane.b32.xlu0 %v864, 28
      %v1090 = vpop.permute.xlu0 %1089
      %1091 = vrot.lane.b32.xlu0 %v876, 28
      %v1092 = vpop.permute.xlu0 %1091
      %1093 = vrot.lane.b32.xlu0 %v888, 28
      %v1094 = vpop.permute.xlu0 %1093
      %1095 = vrot.lane.b32.xlu0 %v900, 28
      %v1096 = vpop.permute.xlu0 %1095
      %1097 = vrot.lane.b32.xlu0 %v912, 28
      %v1098 = vpop.permute.xlu0 %1097
      %1099 = vrot.lane.b32.xlu0 %v924, 28
      %v1100 = vpop.permute.xlu0 %1099
      %1101 = vrot.lane.b32.xlu0 %v1017, 28
      %v1102 = vpop.permute.xlu0 %1101
      %1103 = vrot.lane.b32.xlu0 %v1088, 28
      %v1104 = vpop.permute.xlu0 %1103
      %v1105 = vrot.slane %v1057, 1
      %v1106 = vrot.slane %v1076, 1
      %v1107 = vsel %vm941, %v1105, %v1106
      %1108 = vrot.lane.b32.xlu0 %v950, 32
      %v1109 = vpop.permute.xlu0 %1108
      %1110 = vrot.lane.b32.xlu0 %v953, 32
      %v1111 = vpop.permute.xlu0 %1110
      %1112 = vrot.lane.b32.xlu0 %v956, 32
      %v1113 = vpop.permute.xlu0 %1112
      %1114 = vrot.lane.b32.xlu0 %v959, 32
      %v1115 = vpop.permute.xlu0 %1114
      %1116 = vrot.lane.b32.xlu0 %v962, 32
      %v1117 = vpop.permute.xlu0 %1116
      %1118 = vrot.lane.b32.xlu0 %v965, 32
      %v1119 = vpop.permute.xlu0 %1118
      %1120 = vrot.lane.b32.xlu0 %v1036, 32
      %v1121 = vpop.permute.xlu0 %1120
      %1122 = vrot.lane.b32.xlu0 %v1107, 32
      %v1123 = vpop.permute.xlu0 %1122
      %vm1124 = vcmask 31744
      %v1126 = vsel %vm1124, %v796, %v926
      %v1128 = vsel %vm1124, %v797, %v928
      %v1130 = vsel %vm1124, %v798, %v930
      %v1132 = vsel %vm1124, %v799, %v932
      %v1134 = vsel %vm1124, %v800, %v934
      %v1136 = vsel %vm1124, %v801, %v936
      %v1138 = vsel %vm1124, %v802, %v938
      %v1140 = vsel %vm1124, %v803, %v940
      %vm1141 = vcmask 64512
      %v1143 = vsel %vm1141, %v1126, %v967
      %v1145 = vsel %vm1141, %v1128, %v969
      %v1147 = vsel %vm1141, %v1130, %v971
      %v1149 = vsel %vm1141, %v1132, %v973
      %v1151 = vsel %vm1141, %v1134, %v975
      %v1153 = vsel %vm1141, %v1136, %v977
      %v1155 = vsel %vm1141, %v1138, %v979
      %v1157 = vsel %vm1141, %v1140, %v981
      %vm1158 = vcmask 97280
      %v1160 = vsel %vm1158, %v1143, %v988
      %v1162 = vsel %vm1158, %v1145, %v990
      %v1164 = vsel %vm1158, %v1147, %v992
      %v1166 = vsel %vm1158, %v1149, %v994
      %v1168 = vsel %vm1158, %v1151, %v996
      %v1170 = vsel %vm1158, %v1153, %v998
      %v1172 = vsel %vm1158, %v1155, %v1000
      %v1174 = vsel %vm1158, %v1157, %v1002
      %vm1175 = vcmask 130048
      %v1177 = vsel %vm1175, %v1160, %v1019
      %v1179 = vsel %vm1175, %v1162, %v1021
      %v1181 = vsel %vm1175, %v1164, %v1023
      %v1183 = vsel %vm1175, %v1166, %v1025
      %v1185 = vsel %vm1175, %v1168, %v1027
      %v1187 = vsel %vm1175, %v1170, %v1029
      %v1189 = vsel %vm1175, %v1172, %v1031
      %v1191 = vsel %vm1175, %v1174, %v1033
      %vm1192 = vcmask 162816
      %v1194 = vsel %vm1192, %v1177, %v1038
      %v1196 = vsel %vm1192, %v1179, %v1040
      %v1198 = vsel %vm1192, %v1181, %v1042
      %v1200 = vsel %vm1192, %v1183, %v1044
      %v1202 = vsel %vm1192, %v1185, %v1046
      %v1204 = vsel %vm1192, %v1187, %v1048
      %v1206 = vsel %vm1192, %v1189, %v1050
      %v1208 = vsel %vm1192, %v1191, %v1052
      %vm1209 = vcmask 195584
      %v1211 = vsel %vm1209, %v1194, %v1059
      %v1213 = vsel %vm1209, %v1196, %v1061
      %v1215 = vsel %vm1209, %v1198, %v1063
      %v1217 = vsel %vm1209, %v1200, %v1065
      %v1219 = vsel %vm1209, %v1202, %v1067
      %v1221 = vsel %vm1209, %v1204, %v1069
      %v1223 = vsel %vm1209, %v1206, %v1071
      %v1225 = vsel %vm1209, %v1208, %v1073
      %vm1226 = vcmask 228352
      %v1228 = vsel %vm1226, %v1211, %v1090
      %v1230 = vsel %vm1226, %v1213, %v1092
      %v1232 = vsel %vm1226, %v1215, %v1094
      %v1234 = vsel %vm1226, %v1217, %v1096
      %v1236 = vsel %vm1226, %v1219, %v1098
      %v1238 = vsel %vm1226, %v1221, %v1100
      %v1240 = vsel %vm1226, %v1223, %v1102
      %v1242 = vsel %vm1226, %v1225, %v1104
      %vm1243 = vcmask 261120
      %v1245 = vsel %vm1243, %v1228, %v1109
      %v1247 = vsel %vm1243, %v1230, %v1111
      %v1249 = vsel %vm1243, %v1232, %v1113
      %v1251 = vsel %vm1243, %v1234, %v1115
      %v1253 = vsel %vm1243, %v1236, %v1117
      %v1255 = vsel %vm1243, %v1238, %v1119
      %v1257 = vsel %vm1243, %v1240, %v1121
      %v1259 = vsel %vm1243, %v1242, %v1123
      %v1260 = vld [vmem:[%s1] sm:$0xf]
      %v1261 = vld [vmem:[%s1 + $0x4] sm:$0xf]
      %v1262 = vld [vmem:[%s1 + $0x8] sm:$0xf]
      %v1263 = vld [vmem:[%s1 + $0xc] sm:$0xf]
      %v1264 = vld [vmem:[%s1 + $0x10] sm:$0x3]
      %v1265 = vld [vmem:[%s2] sm:$0x1]
      %v1267 = vlaneseq
      %v1268 = vshrl.u32 %v1267, 7
      %v1269 = vsub.s32 0, %v1268
      %v1270 = vrot.slane %v1265, %v1269
      %v1277 = vunpack.c.l.b16 %v1260
      %v1278 = vunpack.c.l.b16 %v1261
      %v1279 = vunpack.c.l.b16 %v1262
      %v1280 = vunpack.c.l.b16 %v1263
      %v1281 = vunpack.c.l.b16 %v1264
      %v1282 = vpack.c.b16 %v1278, %v1277
      %v1283 = vpack.c.b16 %v1280, %v1279
      %v1284 = vpack.c.b16 %v1281, %v1281
      %vm1287 = vcmask 293888
      %v1288 = vsel %vm1287, %v1245, 0
      %v1290 = vsel %vm1287, %v1247, 0
      %v1292 = vsel %vm1287, %v1249, 0
      %v1294 = vsel %vm1287, %v1251, 0
      %v1296 = vsel %vm1287, %v1253, 0
      %v1298 = vsel %vm1287, %v1255, 0
      %v1300 = vsel %vm1287, %v1257, 0
      %v1302 = vsel %vm1287, %v1259, 0
      %vm1304 = vcmask 1041408
      %v1306 = vsel %vm1304, %v1284, 0
      %1308 = vmatprep.subr.bf16.mxu0 0
      %1309 = vmatpush1.bf16.msra.mxu0 %v1282
      %1310 = vmatprep.subr.bf16.mxu0 0
      %1311 = vmatpush1.bf16.msra.mxu0 %v1283
      %1312 = vmatprep.subr.bf16.mxu0 0
      %1313 = vmatpush1.bf16.msra.mxu0 %v1306
      %1314 = vmatprep.subr.bf16.mxu0 0
      %1315 = vmatpush1.bf16.msra.mxu0 0
      %1316 = vmatprep.subr.bf16.mxu0 0
      %1317 = vmatpush1.bf16.msra.mxu0 0
      %1318 = vmatprep.subr.bf16.mxu0 0
      %1319 = vmatpush1.bf16.msra.mxu0 0
      %1320 = vmatprep.subr.bf16.mxu0 0
      %1321 = vmatpush1.bf16.msra.mxu0 0
      %1322 = vmatprep.subr.bf16.mxu0 0
      %1323 = vmatpush1.bf16.msra.mxu0 0
      %1324 = vmatprep.subr.bf16.mxu0 0
      %1325 = vmatpush1.bf16.msra.mxu0 0
      %1326 = vmatprep.subr.bf16.mxu0 0
      %1327 = vmatpush1.bf16.msra.mxu0 0
      %1328 = vmatprep.subr.bf16.mxu0 0
      %1329 = vmatpush1.bf16.msra.mxu0 0
      %1330 = vmatprep.subr.bf16.mxu0 0
      %1331 = vmatpush1.bf16.msra.mxu0 0
      %1332 = vmatprep.subr.bf16.mxu0 0
      %1333 = vmatpush1.bf16.msra.mxu0 0
      %1334 = vmatprep.subr.bf16.mxu0 0
      %1335 = vmatpush1.bf16.msra.mxu0 0
      %1336 = vmatprep.subr.bf16.mxu0 0
      %1337 = vmatpush1.bf16.msra.mxu0 0
      %1338 = vmatprep.subr.bf16.mxu0 0
      %1339 = vmatpush1.bf16.msra.mxu0 0
      %1340 = vmatprep.mubr.bf16.mxu0 0
      %1341 = vmatmul.mubr.bf16.gmra.mrb[0].mxu0 %v1288
      %v1342 = vpop.f32.mrb[0].mxu0
      %v1343 = vadd.f32 %v1270, %v1342
      %v1344 = vpop.f32.mrb[0].mxu0
      %v1345 = vpop.f32.mrb[0].mxu0
      %v1346 = vadd.f32 %v1270, %v1345
      %v1347 = vpop.f32.mrb[0].mxu0
      %1348 = vmatprep.mubr.bf16.mxu0 0
      %1349 = vmatmul.mubr.bf16.gmra.mrb[0].mxu0 %v1290
      %v1350 = vpop.f32.mrb[0].mxu0
      %v1351 = vadd.f32 %v1270, %v1350
      %v1352 = vpop.f32.mrb[0].mxu0
      %v1353 = vpop.f32.mrb[0].mxu0
      %v1354 = vadd.f32 %v1270, %v1353
      %v1355 = vpop.f32.mrb[0].mxu0
      %1356 = vmatprep.mubr.bf16.mxu0 0
      %1357 = vmatmul.mubr.bf16.gmra.mrb[0].mxu0 %v1292
      %v1358 = vpop.f32.mrb[0].mxu0
      %v1359 = vadd.f32 %v1270, %v1358
      %v1360 = vpop.f32.mrb[0].mxu0
      %v1361 = vpop.f32.mrb[0].mxu0
      %v1362 = vadd.f32 %v1270, %v1361
      %v1363 = vpop.f32.mrb[0].mxu0
      %1364 = vmatprep.mubr.bf16.mxu0 0
      %1365 = vmatmul.mubr.bf16.gmra.mrb[0].mxu0 %v1294
      %v1366 = vpop.f32.mrb[0].mxu0
      %v1367 = vadd.f32 %v1270, %v1366
      %v1368 = vpop.f32.mrb[0].mxu0
      %v1369 = vpop.f32.mrb[0].mxu0
      %v1370 = vadd.f32 %v1270, %v1369
      %v1371 = vpop.f32.mrb[0].mxu0
      %1372 = vmatprep.mubr.bf16.mxu0 0
      %1373 = vmatmul.mubr.bf16.gmra.mrb[0].mxu0 %v1296
      %v1374 = vpop.f32.mrb[0].mxu0
      %v1375 = vadd.f32 %v1270, %v1374
      %v1376 = vpop.f32.mrb[0].mxu0
      %v1377 = vpop.f32.mrb[0].mxu0
      %v1378 = vadd.f32 %v1270, %v1377
      %v1379 = vpop.f32.mrb[0].mxu0
      %1380 = vmatprep.mubr.bf16.mxu0 0
      %1381 = vmatmul.mubr.bf16.gmra.mrb[0].mxu0 %v1298
      %v1382 = vpop.f32.mrb[0].mxu0
      %v1383 = vadd.f32 %v1270, %v1382
      %v1384 = vpop.f32.mrb[0].mxu0
      %v1385 = vpop.f32.mrb[0].mxu0
      %v1386 = vadd.f32 %v1270, %v1385
      %v1387 = vpop.f32.mrb[0].mxu0
      %1388 = vmatprep.mubr.bf16.mxu0 0
      %1389 = vmatmul.mubr.bf16.gmra.mrb[0].mxu0 %v1300
      %v1390 = vpop.f32.mrb[0].mxu0
      %v1391 = vadd.f32 %v1270, %v1390
      %v1392 = vpop.f32.mrb[0].mxu0
      %v1393 = vpop.f32.mrb[0].mxu0
      %v1394 = vadd.f32 %v1270, %v1393
      %v1395 = vpop.f32.mrb[0].mxu0
      %1396 = vmatprep.mubr.bf16.mxu0 0
      %1397 = vmatmul.mubr.bf16.gmra.mrb[0].mxu0 %v1302
      %v1398 = vpop.f32.mrb[0].mxu0
      %v1399 = vadd.f32 %v1270, %v1398
      %v1400 = vpop.f32.mrb[0].mxu0
      %v1401 = vpop.f32.mrb[0].mxu0
      %v1402 = vadd.f32 %v1270, %v1401
      %v1403 = vpop.f32.mrb[0].mxu0
      %1404 = vdwg.mxu0
      %vm1405 = vcmp.gt.f32.partialorder %v1343, 0.0
      %vm1406 = vcmp.gt.f32.partialorder %v1346, 0.0
      %vm1407 = vcmp.gt.f32.partialorder %v1351, 0.0
      %vm1408 = vcmp.gt.f32.partialorder %v1354, 0.0
      %vm1409 = vcmp.gt.f32.partialorder %v1359, 0.0
      %vm1410 = vcmp.gt.f32.partialorder %v1362, 0.0
      %vm1411 = vcmp.gt.f32.partialorder %v1367, 0.0
      %vm1412 = vcmp.gt.f32.partialorder %v1370, 0.0
      %vm1413 = vcmp.gt.f32.partialorder %v1375, 0.0
      %vm1414 = vcmp.gt.f32.partialorder %v1378, 0.0
      %vm1415 = vcmp.gt.f32.partialorder %v1383, 0.0
      %vm1416 = vcmp.gt.f32.partialorder %v1386, 0.0
      %vm1417 = vcmp.gt.f32.partialorder %v1391, 0.0
      %vm1418 = vcmp.gt.f32.partialorder %v1394, 0.0
      %vm1419 = vcmp.gt.f32.partialorder %v1399, 0.0
      %vm1420 = vcmp.gt.f32.partialorder %v1402, 0.0
      %v1421 = vmul.f32 %v1343, 0.2
      %v1422 = vmul.f32 %v1346, 0.2
      %v1423 = vmul.f32 %v1351, 0.2
      %v1424 = vmul.f32 %v1354, 0.2
      %v1425 = vmul.f32 %v1359, 0.2
      %v1426 = vmul.f32 %v1362, 0.2
      %v1427 = vmul.f32 %v1367, 0.2
      %v1428 = vmul.f32 %v1370, 0.2
      %v1429 = vmul.f32 %v1375, 0.2
      %v1430 = vmul.f32 %v1378, 0.2
      %v1431 = vmul.f32 %v1383, 0.2
      %v1432 = vmul.f32 %v1386, 0.2
      %v1433 = vmul.f32 %v1391, 0.2
      %v1434 = vmul.f32 %v1394, 0.2
      %v1435 = vmul.f32 %v1399, 0.2
      %v1436 = vmul.f32 %v1402, 0.2
      %v1437 = vsel %vm1405, %v1343, %v1421
      %v1438 = vsel %vm1406, %v1346, %v1422
      %v1439 = vsel %vm1407, %v1351, %v1423
      %v1440 = vsel %vm1408, %v1354, %v1424
      %v1441 = vsel %vm1409, %v1359, %v1425
      %v1442 = vsel %vm1410, %v1362, %v1426
      %v1443 = vsel %vm1411, %v1367, %v1427
      %v1444 = vsel %vm1412, %v1370, %v1428
      %v1445 = vsel %vm1413, %v1375, %v1429
      %v1446 = vsel %vm1414, %v1378, %v1430
      %v1447 = vsel %vm1415, %v1383, %v1431
      %v1448 = vsel %vm1416, %v1386, %v1432
      %v1449 = vsel %vm1417, %v1391, %v1433
      %v1450 = vsel %vm1418, %v1394, %v1434
      %v1451 = vsel %vm1419, %v1399, %v1435
      %v1452 = vsel %vm1420, %v1402, %v1436
      %v1453 = vpack.c.bf16 %v1438, %v1437
      %v1454 = vpack.c.bf16 %v1440, %v1439
      %v1455 = vpack.c.bf16 %v1442, %v1441
      %v1456 = vpack.c.bf16 %v1444, %v1443
      %v1457 = vpack.c.bf16 %v1446, %v1445
      %v1458 = vpack.c.bf16 %v1448, %v1447
      %v1459 = vpack.c.bf16 %v1450, %v1449
      %v1460 = vpack.c.bf16 %v1452, %v1451
      %v1469 = vunpack.c.l.b16 %v1453
      %v1470 = vunpack.c.h.b16 %v1453
      %v1471 = vunpack.c.l.b16 %v1454
      %v1472 = vunpack.c.h.b16 %v1454
      %v1473 = vunpack.c.l.b16 %v1455
      %v1474 = vunpack.c.h.b16 %v1455
      %v1475 = vunpack.c.l.b16 %v1456
      %v1476 = vunpack.c.h.b16 %v1456
      %v1477 = vunpack.c.l.b16 %v1457
      %v1478 = vunpack.c.h.b16 %v1457
      %v1479 = vunpack.c.l.b16 %v1458
      %v1480 = vunpack.c.h.b16 %v1458
      %v1481 = vunpack.c.l.b16 %v1459
      %v1482 = vunpack.c.h.b16 %v1459
      %v1483 = vunpack.c.l.b16 %v1460
      %v1484 = vunpack.c.h.b16 %v1460
      %v1485 = vpack.c.b16 %v1469, %v1469
      %v1486 = vpack.c.b16 %v1470, %v1470
      %v1487 = vpack.c.b16 %v1471, %v1471
      %v1488 = vpack.c.b16 %v1472, %v1472
      %v1489 = vpack.c.b16 %v1473, %v1473
      %v1490 = vpack.c.b16 %v1474, %v1474
      %v1491 = vpack.c.b16 %v1475, %v1475
      %v1492 = vpack.c.b16 %v1476, %v1476
      %v1493 = vpack.c.b16 %v1477, %v1477
      %v1494 = vpack.c.b16 %v1478, %v1478
      %v1495 = vpack.c.b16 %v1479, %v1479
      %v1496 = vpack.c.b16 %v1480, %v1480
      %v1497 = vpack.c.b16 %v1481, %v1481
      %v1498 = vpack.c.b16 %v1482, %v1482
      %v1499 = vpack.c.b16 %v1483, %v1483
      %v1500 = vpack.c.b16 %v1484, %v1484
      %vm1517 = vcmask 27648
      %1518 = vst.msk [vmem:[%s194] sm:$0xf] %vm1517, %v1485
      %1519 = vst.msk [vmem:[%s194 + $0x4] sm:$0xf] %vm1517, %v1486
      %1520 = vst.msk [vmem:[%s194 + $0x8] sm:$0xf] %vm1517, %v1487
      %1521 = vst.msk [vmem:[%s194 + $0xc] sm:$0xf] %vm1517, %v1488
      %1522 = vst.msk [vmem:[%s194 + $0x10] sm:$0xf] %vm1517, %v1489
      %1523 = vst.msk [vmem:[%s194 + $0x14] sm:$0xf] %vm1517, %v1490
      %1524 = vst.msk [vmem:[%s194 + $0x18] sm:$0xf] %vm1517, %v1491
      %1525 = vst.msk [vmem:[%s194 + $0x1c] sm:$0xf] %vm1517, %v1492
      %1526 = vst.msk [vmem:[%s194 + $0x20] sm:$0xf] %vm1517, %v1493
      %1527 = vst.msk [vmem:[%s194 + $0x24] sm:$0xf] %vm1517, %v1494
      %1528 = vst.msk [vmem:[%s194 + $0x28] sm:$0xf] %vm1517, %v1495
      %1529 = vst.msk [vmem:[%s194 + $0x2c] sm:$0xf] %vm1517, %v1496
      %1530 = vst.msk [vmem:[%s194 + $0x30] sm:$0xf] %vm1517, %v1497
      %1531 = vst.msk [vmem:[%s194 + $0x34] sm:$0xf] %vm1517, %v1498
      %1532 = vst.msk [vmem:[%s194 + $0x38] sm:$0xf] %vm1517, %v1499
      %1533 = vst.msk [vmem:[%s194 + $0x3c] sm:$0xf] %vm1517, %v1500
      %s1534 = smul.u32 8, %s19
      %p1535 = scmp.lt.s32.totalorder %s18, 1
      %s1536 = scalar_select %p1535, %s18, 1
      %p1537 = scmp.lt.s32.totalorder %s1534, 15
      %s1538 = scalar_select %p1537, %s1534, 15
      %s1539 = smul.addr %s1538, 2
      %s1540 = smul.addr %s1536, 32
      %s1541 = sadd.s32 %s1539, %s1540
      %s1542 = smul.addr %s1541, 4
      %s1543 = scalar_lea.vmem %s3, %s1542
      // Predicated region
      $region37: #{generator_forward.12} parent=31 // pred_check
        %p1544 = pneg %p114
      $region38: #{generator_forward.12} parent=31 // pred_check_branch
        %1546 = sbr.rel (%p1544) target = $region40
      $region39: #{generator_forward.12} parent=31 // pred_region
        %s1547 = smul.u32 8, %s19
      $region40: #{generator_forward.12} parent=31 // pred_fallthru
        _
    $region32: #{generator_forward.12} parent=5 // pred_fallthru
      _
    %p1548 = scmp.le.s32.totalorder 2, %s9
    // Predicated region
    $region41: #{generator_forward.12} parent=5 // pred_check
      %p1549 = pneg %p1548
    $region42: #{generator_forward.12} parent=5 // pred_check_branch
      %1551 = sbr.rel (%p1549) target = $region44
    $region43: #{generator_forward.12} parent=5 // pred_region
      %s1552 = ssub.s32 %s9, 2
      // Predicated region
      $region45: #{generator_forward.12} parent=43 // pred_check
        %p1553 = pneg %p120
      $region46: #{generator_forward.12} parent=43 // pred_check_branch
        %1555 = sbr.rel (%p1553) target = $region48
      $region47: #{generator_forward.12} parent=43 // pred_region
        %s1556 = smul.u32 8, %s21
        %p1557 = scmp.lt.s32.totalorder %s20, 1
        %s1558 = scalar_select %p1557, %s20, 1
        %p1559 = scmp.lt.s32.totalorder %s1556, 15
        %s1560 = scalar_select %p1559, %s1556, 15
        %s1561 = smul.addr %s1560, 2
        %s1562 = smul.addr %s1558, 32
        %s1563 = sadd.s32 %s1561, %s1562
        %s1564 = smul.addr %s1563, 4
        %s1565 = scalar_lea.vmem %s3, %s1564
      $region48: #{generator_forward.12} parent=43 // pred_fallthru
        _
    $region44: #{generator_forward.12} parent=5 // pred_fallthru
      _
  $region6: #{generator_forward.12} parent=0 // loop_footer
    %s13 = sadd.s32 1, %s9
  $region7: #{generator_forward.12} parent=0 // loop_footer_branch
    %8 = sbr.rel target = $region3
  $region8: #{generator_forward.12} parent=0 // loop_exit
    _

</llo_original>
